<compile_context>
chip_gen: v7x
topology: tpu7x:2x2x1
jax: 0.10.0
libtpu: 0.0.40
codegen_flags: <defaults>
</compile_context>

<pallas_src>
import functools

import jax
import jax.numpy as jnp
from jax.experimental import pallas as pl
from jax.experimental.pallas import tpu as pltpu

_BN_EPS = 1e-5
# (c_out, c_in) of the 7 tap-fused conv layers, in execution order.
_LAYER_DIMS = ((16, 1), (8, 16), (8, 8), (8, 8), (8, 8), (16, 8), (1, 16))
_MAX_COUT = 16
_MAX_K = 48  # 3 * max(c_in)


# -----------------------------------------------------------------------------
# Kernel.  All activations are (C, N) values: channels on sublanes, the
# lane axis holding TB per-sample signals of length L concatenated (N = TB*L).
# Pooled / upsampled signals stay in place on the full lane grid: valid samples
# live at lanes l with (l % L) % stride == 0.  pltpu.roll wraparound at sample
# boundaries is neutralised by the per-sample boundary masks, and garbage on
# invalid-stride lanes is never read downstream (the decoder re-zeroes it).
# -----------------------------------------------------------------------------
def _autoencoder_kernel(x_ref, w_ref, b_ref, o_ref, *, seg_len):
    L = seg_len
    x = x_ref[0]                                   # (1, N) f32
    N = x.shape[1]

    # Hoisted per-sample lane masks (JAX does not CSE broadcasted_iota, so
    # build the iota exactly once and share the masks across all layers).
    col = jax.lax.broadcasted_iota(jnp.int32, (1, N), 1)
    pos = jnp.bitwise_and(col, L - 1)              # position within each sample (L = 2**k)
    prev_ok = {d: pos >= d for d in (1, 2, 4)}     # left-boundary zero padding
    next_ok = {d: pos < L - d for d in (1, 2, 4)}  # right-boundary zero padding
    keep = {d: jnp.bitwise_and(pos, d - 1) == 0 for d in (2, 4, 8)}  # upsample grids

    relu = lambda v: jnp.maximum(v, 0.0)
    sigmoid = lambda v: 0.5 * jnp.tanh(0.5 * v) + 0.5   # single EUP transcendental

    def conv_k3(h, layer, c_out, dil, act):
        """k=3 / 'same' Conv1d (BatchNorm folded) on a stride-`dil` in-place
        signal; the 3 taps are fused into one (c_out,3*c_in)x(3*c_in,N) dot."""
        c_in = h.shape[0]
        h_prev = jnp.where(prev_ok[dil], pltpu.roll(h, shift=dil, axis=1), 0.0)
        h_next = jnp.where(next_ok[dil], pltpu.roll(h, shift=N - dil, axis=1), 0.0)
        stack = jnp.concatenate([h_prev, h, h_next], axis=0)        # (3*c_in, N)
        w = w_ref[layer, :c_out, :3 * c_in]                         # (c_out, 3*c_in)
        b = b_ref[layer, :c_out, :]                                 # (c_out, 1)
        return act(jnp.dot(w, stack, preferred_element_type=jnp.float32) + b)

    def maxpool2(h, dil):
        # MaxPool1d(2,2): result valid at stride 2*dil, kept in place.
        return jnp.maximum(h, pltpu.roll(h, shift=N - dil, axis=1))

    def upsample2x(h, dil_in):
        # Zero-insertion upsample == input dilation of
        # ConvTranspose1d(k=3, stride=2, padding=1, output_padding=1).
        return jnp.where(keep[dil_in], h, 0.0)

    # ------------------------------ encoder ------------------------------
    h = conv_k3(x, 0, 16, 1, relu)          # Conv1d(1->16)+BN+ReLU  (Dropout: eval no-op)
    h = maxpool2(h, 1)                      # valid at stride 2
    h = conv_k3(h, 1, 8, 2, relu)           # Conv1d(16->8)+BN+ReLU
    h = maxpool2(h, 2)                      # valid at stride 4
    h = conv_k3(h, 2, 8, 4, relu)           # Conv1d(8->8)+BN+ReLU
    h = maxpool2(h, 4)                      # bottleneck: valid at stride 8

    # ------------------------------ decoder ------------------------------
    h = conv_k3(upsample2x(h, 8), 3, 8, 4, relu)    # ConvT(8->8)+BN+ReLU
    h = conv_k3(upsample2x(h, 4), 4, 8, 2, relu)    # ConvT(8->8)+BN+ReLU
    h = conv_k3(upsample2x(h, 2), 5, 16, 1, relu)   # ConvT(8->16)+BN+ReLU
    y = conv_k3(h, 6, 1, 1, sigmoid)                # Conv1d(16->1)+Sigmoid

    o_ref[0] = y.astype(o_ref.dtype)


# -----------------------------------------------------------------------------
# Wrapper: one fused pallas_call over batch blocks.
# -----------------------------------------------------------------------------
def _pick_batch_block(batch, seg_len, max_lanes=8192):
    """Largest divisor of `batch` such that (a) the per-step lane width stays
    modest and (b) the grid length is even and >=2 when the batch allows it
    (v7x shards the parallel grid axis across its two TensorCores)."""
    cap = max(1, min(batch, max_lanes // seg_len))
    fallback = 1
    for tb in range(cap, 0, -1):
        if batch % tb:
            continue
        if fallback == 1:
            fallback = tb          # largest divisor under the cap
        g = batch // tb
        if g >= 2 and g % 2 == 0:
            return tb
    return fallback


def conv_autoencoder_forward(x_ncl, params, *, batch_block=None):
    """ConvAutoencoder (eval mode) forward.

    x_ncl : (B, 1, L) float32, L a power of two >= 8 (three stride-2 stages).
    params: dict from fold_params().  Returns (B, 1, L) float32.
    """
    B, C, L = x_ncl.shape
    if C != 1:
        raise ValueError(f"expected a single input channel, got {C}")
    if L < 8 or (L & (L - 1)) != 0:
        # TODO(synk): support non power-of-two L (needs lax.rem lane masks).
        raise ValueError(f"L must be a power of two >= 8, got {L}")

    w_pack, b_pack = params["w_pack"], params["b_pack"]

    tb = batch_block if batch_block is not None else _pick_batch_block(B, L)
    if B % tb:
        raise ValueError(f"batch_block={tb} must divide batch={B}")
    grid = B // tb
    n_lanes = tb * L

    # Lane-concatenate tb consecutive samples per grid step (pure metadata
    # reshape: C == 1, so memory is already contiguous in the right order).
    x_blk = x_ncl.reshape(grid, 1, n_lanes)

    cost = pl.CostEstimate(
        flops=2 * sum(co * 3 * ci for co, ci in _LAYER_DIMS) * B * L,
        transcendentals=B * L,
        bytes_accessed=2 * B * L * 4 + (w_pack.size + b_pack.size) * 4,
    )

    grid_spec = pltpu.PrefetchScalarGridSpec(
        num_scalar_prefetch=0,
        grid=(grid,),
        in_specs=[
            pl.BlockSpec((1, 1, n_lanes), lambda i: (i, 0, 0)),
            pl.BlockSpec(w_pack.shape, lambda i: (0, 0, 0)),   # constant slab
            pl.BlockSpec(b_pack.shape, lambda i: (0, 0, 0)),   # constant slab
        ],
        out_specs=pl.BlockSpec((1, 1, n_lanes), lambda i: (i, 0, 0)),
    )
    out = pl.pallas_call(
        functools.partial(_autoencoder_kernel, seg_len=L),
        out_shape=jax.ShapeDtypeStruct((grid, 1, n_lanes), jnp.float32),
        grid_spec=grid_spec,
        compiler_params=pltpu.CompilerParams(dimension_semantics=("parallel",)),
        cost_estimate=cost,
    )(x_blk, w_pack, b_pack)
    return out.reshape(B, 1, L)


# -----------------------------------------------------------------------------
# Deterministic parameter init (PyTorch layout) + eval-mode BatchNorm folding
# + tap-fusion + packing into two constant slabs.
# -----------------------------------------------------------------------------
def init_params(key):
    def nrm(k, shape, scale):
        return scale * jax.random.normal(k, shape, jnp.float32)

    def bn_stats(k, c):
        k1, k2, k3, k4 = jax.random.split(k, 4)
        gamma = 1.0 + 0.1 * jax.random.normal(k1, (c,), jnp.float32)
        beta = 0.1 * jax.random.normal(k2, (c,), jnp.float32)
        mean = 0.1 * jax.random.normal(k3, (c,), jnp.float32)
        var = 0.5 + jax.random.uniform(k4, (c,), jnp.float32)
        return (gamma, beta, mean, var)

    ks = jax.random.split(key, 20)
    return dict(
        w1=nrm(ks[0], (16, 1, 3), 0.4),   b1=nrm(ks[1], (16,), 0.1),  bn1=bn_stats(ks[2], 16),
        w2=nrm(ks[3], (8, 16, 3), 0.15),  b2=nrm(ks[4], (8,), 0.1),   bn2=bn_stats(ks[5], 8),
        w3=nrm(ks[6], (8, 8, 3), 0.2),    b3=nrm(ks[7], (8,), 0.1),   bn3=bn_stats(ks[8], 8),
        tw1=nrm(ks[9], (8, 8, 3), 0.2),   tb1=nrm(ks[10], (8,), 0.1), tbn1=bn_stats(ks[11], 8),
        tw2=nrm(ks[12], (8, 8, 3), 0.2),  tb2=nrm(ks[13], (8,), 0.1), tbn2=bn_stats(ks[14], 8),
        tw3=nrm(ks[15], (8, 16, 3), 0.2), tb3=nrm(ks[16], (16,), 0.1), tbn3=bn_stats(ks[17], 16),
        w4=nrm(ks[18], (1, 16, 3), 0.2),  b4=nrm(ks[19], (1,), 0.1),
    )


def fold_params(raw):
    """Tap-fuse each layer to (C_out, 3*C_in), fold eval-mode BatchNorm, and pack
    all 7 layers into one zero-padded weight slab + one bias slab."""
    def _bn_affine(bn):
        g, be, m, v = bn
        s = g / jnp.sqrt(v + _BN_EPS)
        return s, be - m * s

    def conv(w, b, bn):          # torch Conv1d weight: (C_out, C_in, 3)
        wf = jnp.transpose(w, (0, 2, 1)).reshape(w.shape[0], -1)   # (C_out, 3*C_in), tap-major
        if bn is not None:
            s, sh = _bn_affine(bn)
            wf, b = wf * s[:, None], b * s + sh
        return wf, b

    def convT(w, b, bn):         # torch ConvTranspose1d weight: (C_in, C_out, 3)
        # Equivalent conv on the zero-dilated input: Wc[co, ci, k] = W[ci, co, 2-k].
        wf = jnp.transpose(jnp.flip(w, axis=2), (1, 2, 0)).reshape(w.shape[1], -1)
        s, sh = _bn_affine(bn)
        return wf * s[:, None], b * s + sh

    layers = [
        conv(raw["w1"], raw["b1"], raw["bn1"]),
        conv(raw["w2"], raw["b2"], raw["bn2"]),
        conv(raw["w3"], raw["b3"], raw["bn3"]),
        convT(raw["tw1"], raw["tb1"], raw["tbn1"]),
        convT(raw["tw2"], raw["tb2"], raw["tbn2"]),
        convT(raw["tw3"], raw["tb3"], raw["tbn3"]),
        conv(raw["w4"], raw["b4"], None),
    ]
    w_pack = jnp.zeros((len(layers), _MAX_COUT, _MAX_K), jnp.float32)
    b_pack = jnp.zeros((len(layers), _MAX_COUT, 1), jnp.float32)
    for i, (wf, b) in enumerate(layers):
        co, k = wf.shape
        w_pack = w_pack.at[i, :co, :k].set(wf)
        b_pack = b_pack.at[i, :co, 0].set(b)
    return {"w_pack": w_pack, "b_pack": b_pack}


# -----------------------------------------------------------------------------
# Pure-JAX reference (PyTorch semantics, eval mode) for verification.
# -----------------------------------------------------------------------------
def ref_forward(x, p):
    P = jax.lax.Precision.HIGHEST

    def conv1d(h, w, b):
        y = jax.lax.conv_general_dilated(
            h, w, (1,), [(1, 1)],
            dimension_numbers=("NCH", "OIH", "NCH"), precision=P)
        return y + b[None, :, None]

    def convT1d(h, w, b):
        w2 = jnp.flip(jnp.transpose(w, (1, 0, 2)), axis=2)
        y = jax.lax.conv_general_dilated(
            h, w2, (1,), [(1, 2)], lhs_dilation=(2,),
            dimension_numbers=("NCH", "OIH", "NCH"), precision=P)
        return y + b[None, :, None]

    def bn(h, stats):
        g, be, m, v = stats
        s = g / jnp.sqrt(v + _BN_EPS)
        return (h - m[None, :, None]) * s[None, :, None] + be[None, :, None]

    def pool(h):
        B, C, L = h.shape
        return h.reshape(B, C, L // 2, 2).max(axis=-1)

    r = lambda v: jnp.maximum(v, 0.0)
    h = pool(r(bn(conv1d(x, p["w1"], p["b1"]), p["bn1"])))
    h = pool(r(bn(conv1d(h, p["w2"], p["b2"]), p["bn2"])))
    h = pool(r(bn(conv1d(h, p["w3"], p["b3"]), p["bn3"])))
    h = r(bn(convT1d(h, p["tw1"], p["tb1"]), p["tbn1"]))
    h = r(bn(convT1d(h, p["tw2"], p["tb2"]), p["tbn2"]))
    h = r(bn(convT1d(h, p["tw3"], p["tb3"]), p["tbn3"]))
    return jax.nn.sigmoid(conv1d(h, p["w4"], p["b4"]))


if __name__ == "__main__":
    key = jax.random.PRNGKey(0)
    k_param, k_x = jax.random.split(key)

    raw = init_params(k_param)
    params = fold_params(raw)

    B, L = 8, 256   # -> batch_block=4, grid=(2,): even for v7x, lane-dense 1024-wide blocks
    x = jax.random.normal(k_x, (B, 1, L), jnp.float32)

    fwd = jax.jit(conv_autoencoder_forward)
    out = jax.block_until_ready(fwd(x, params))
    assert out.shape == (B, 1, L), out.shape

    ref = ref_forward(x, raw)
    max_err = float(jnp.max(jnp.abs(out - ref)))
    # The MXU's default f32 path may round operands through bf16 passes, so
    # allow a slightly looser tolerance than the pure-f32 XLA reference.
    assert max_err < 2e-2, f"mismatch vs reference: {max_err}"

    print("KERNEL_OK")
</pallas_src>

<mosaic_0001>
module attributes {stable_mosaic.version = 11 : i64} {
  func.func @_autoencoder_kernel(%arg0: i32, %arg1: memref<1x1x1024xf32, #tpu.memory_space<vmem>>, %arg2: memref<7x16x48xf32, #tpu.memory_space<vmem>>, %arg3: memref<7x16x1xf32, #tpu.memory_space<vmem>>, %arg4: memref<1x1x1024xf32, #tpu.memory_space<vmem>>) attributes {dimension_semantics = [#tpu.dimension_semantics<parallel>], iteration_bounds = array<i64: 2>, scalar_prefetch = 0 : i64, scratch_operands = 0 : i64, tpu.core_type = #tpu.core_type<tc>, window_params = [{transform_indices = @transform_0, window_bounds = array<i64: 1, 1, 1024>}, {pipeline_mode = #tpu.pipeline_mode<synchronous>, transform_indices = @transform_1, window_bounds = array<i64: 7, 16, 48>}, {pipeline_mode = #tpu.pipeline_mode<synchronous>, transform_indices = @transform_2, window_bounds = array<i64: 7, 16, 1>}, {transform_indices = @transform_3, window_bounds = array<i64: 1, 1, 1024>}]} {
    %c0 = arith.constant 0 : index
    %c0_0 = arith.constant 0 : index
    %c0_1 = arith.constant 0 : index
    %0 = vector.load %arg1[%c0, %c0_0, %c0_1] : memref<1x1x1024xf32, #tpu.memory_space<vmem>>, vector<1x1x1024xf32>
    %1 = vector.shape_cast %0 : vector<1x1x1024xf32> to vector<1x1024xf32>
    %2 = tpu.iota {dimensions = array<i32: 1>} : vector<1x1024xi32>
    %c255_i32 = arith.constant 255 : i32
    %3 = vector.broadcast %c255_i32 : i32 to vector<1x1024xi32>
    %4 = arith.andi %2, %3 : vector<1x1024xi32>
    %c1_i32 = arith.constant 1 : i32
    %5 = vector.broadcast %c1_i32 : i32 to vector<1x1024xi32>
    %6 = arith.cmpi sge, %4, %5 : vector<1x1024xi32>
    %c2_i32 = arith.constant 2 : i32
    %7 = vector.broadcast %c2_i32 : i32 to vector<1x1024xi32>
    %8 = arith.cmpi sge, %4, %7 : vector<1x1024xi32>
    %c4_i32 = arith.constant 4 : i32
    %9 = vector.broadcast %c4_i32 : i32 to vector<1x1024xi32>
    %10 = arith.cmpi sge, %4, %9 : vector<1x1024xi32>
    %c255_i32_2 = arith.constant 255 : i32
    %11 = vector.broadcast %c255_i32_2 : i32 to vector<1x1024xi32>
    %12 = arith.cmpi slt, %4, %11 : vector<1x1024xi32>
    %c254_i32 = arith.constant 254 : i32
    %13 = vector.broadcast %c254_i32 : i32 to vector<1x1024xi32>
    %14 = arith.cmpi slt, %4, %13 : vector<1x1024xi32>
    %c252_i32 = arith.constant 252 : i32
    %15 = vector.broadcast %c252_i32 : i32 to vector<1x1024xi32>
    %16 = arith.cmpi slt, %4, %15 : vector<1x1024xi32>
    %c1_i32_3 = arith.constant 1 : i32
    %17 = vector.broadcast %c1_i32_3 : i32 to vector<1x1024xi32>
    %18 = arith.andi %4, %17 : vector<1x1024xi32>
    %c0_i32 = arith.constant 0 : i32
    %19 = vector.broadcast %c0_i32 : i32 to vector<1x1024xi32>
    %20 = arith.cmpi eq, %18, %19 : vector<1x1024xi32>
    %c3_i32 = arith.constant 3 : i32
    %21 = vector.broadcast %c3_i32 : i32 to vector<1x1024xi32>
    %22 = arith.andi %4, %21 : vector<1x1024xi32>
    %c0_i32_4 = arith.constant 0 : i32
    %23 = vector.broadcast %c0_i32_4 : i32 to vector<1x1024xi32>
    %24 = arith.cmpi eq, %22, %23 : vector<1x1024xi32>
    %c7_i32 = arith.constant 7 : i32
    %25 = vector.broadcast %c7_i32 : i32 to vector<1x1024xi32>
    %26 = arith.andi %4, %25 : vector<1x1024xi32>
    %c0_i32_5 = arith.constant 0 : i32
    %27 = vector.broadcast %c0_i32_5 : i32 to vector<1x1024xi32>
    %28 = arith.cmpi eq, %26, %27 : vector<1x1024xi32>
    %c1_i32_6 = arith.constant 1 : i32
    %29 = tpu.dynamic_rotate %1 by %c1_i32_6 dim 1 : vector<1x1024xf32>, i32 -> vector<1x1024xf32>
    %cst = arith.constant 0.000000e+00 : f32
    %30 = vector.broadcast %cst : f32 to vector<1x1024xf32>
    %31 = arith.select %6, %29, %30 : vector<1x1024xi1>, vector<1x1024xf32>
    %c1023_i32 = arith.constant 1023 : i32
    %32 = tpu.dynamic_rotate %1 by %c1023_i32 dim 1 : vector<1x1024xf32>, i32 -> vector<1x1024xf32>
    %cst_7 = arith.constant 0.000000e+00 : f32
    %33 = vector.broadcast %cst_7 : f32 to vector<1x1024xf32>
    %34 = arith.select %12, %32, %33 : vector<1x1024xi1>, vector<1x1024xf32>
    %35 = tpu.concatenate %31, %1, %34 in 0 : vector<1x1024xf32>, vector<1x1024xf32>, vector<1x1024xf32> -> vector<3x1024xf32>
    %c0_8 = arith.constant 0 : index
    %c0_9 = arith.constant 0 : index
    %c0_10 = arith.constant 0 : index
    %36 = vector.load %arg2[%c0_8, %c0_9, %c0_10] : memref<7x16x48xf32, #tpu.memory_space<vmem>>, vector<1x16x3xf32>
    %37 = vector.shape_cast %36 : vector<1x16x3xf32> to vector<16x3xf32>
    %c0_11 = arith.constant 0 : index
    %c0_12 = arith.constant 0 : index
    %c0_13 = arith.constant 0 : index
    %38 = vector.load %arg3[%c0_11, %c0_12, %c0_13] : memref<7x16x1xf32, #tpu.memory_space<vmem>>, vector<1x16x1xf32>
    %39 = vector.shape_cast %38 : vector<1x16x1xf32> to vector<16x1xf32>
    %cst_14 = arith.constant dense<0.000000e+00> : vector<16x1024xf32>
    %40 = tpu.matmul %37, %35, %cst_14 {dimension_numbers = #tpu.dot_dimension_numbers<[1], [0], [0], [1], [0, 0, 1, 1], [], []>} : vector<16x3xf32>, vector<3x1024xf32>, vector<16x1024xf32> -> vector<16x1024xf32>
    %41 = vector.broadcast %39 : vector<16x1xf32> to vector<16x1024xf32>
    %42 = arith.addf %40, %41 : vector<16x1024xf32>
    %cst_15 = arith.constant 0.000000e+00 : f32
    %43 = vector.broadcast %cst_15 : f32 to vector<16x1024xf32>
    %44 = arith.maximumf %42, %43 : vector<16x1024xf32>
    %c1023_i32_16 = arith.constant 1023 : i32
    %45 = tpu.dynamic_rotate %44 by %c1023_i32_16 dim 1 : vector<16x1024xf32>, i32 -> vector<16x1024xf32>
    %46 = arith.maximumf %44, %45 : vector<16x1024xf32>
    %c2_i32_17 = arith.constant 2 : i32
    %47 = tpu.dynamic_rotate %46 by %c2_i32_17 dim 1 : vector<16x1024xf32>, i32 -> vector<16x1024xf32>
    %cst_18 = arith.constant 0.000000e+00 : f32
    %48 = vector.shape_cast %8 : vector<1x1024xi1> to vector<1x1024xi1>
    %49 = vector.broadcast %48 : vector<1x1024xi1> to vector<16x1024xi1>
    %50 = vector.broadcast %cst_18 : f32 to vector<16x1024xf32>
    %51 = arith.select %49, %47, %50 : vector<16x1024xi1>, vector<16x1024xf32>
    %c1022_i32 = arith.constant 1022 : i32
    %52 = tpu.dynamic_rotate %46 by %c1022_i32 dim 1 : vector<16x1024xf32>, i32 -> vector<16x1024xf32>
    %cst_19 = arith.constant 0.000000e+00 : f32
    %53 = vector.shape_cast %14 : vector<1x1024xi1> to vector<1x1024xi1>
    %54 = vector.broadcast %53 : vector<1x1024xi1> to vector<16x1024xi1>
    %55 = vector.broadcast %cst_19 : f32 to vector<16x1024xf32>
    %56 = arith.select %54, %52, %55 : vector<16x1024xi1>, vector<16x1024xf32>
    %57 = tpu.concatenate %51, %46, %56 in 0 : vector<16x1024xf32>, vector<16x1024xf32>, vector<16x1024xf32> -> vector<48x1024xf32>
    %c1 = arith.constant 1 : index
    %c0_20 = arith.constant 0 : index
    %c0_21 = arith.constant 0 : index
    %58 = vector.load %arg2[%c1, %c0_20, %c0_21] : memref<7x16x48xf32, #tpu.memory_space<vmem>>, vector<1x8x48xf32>
    %59 = vector.shape_cast %58 : vector<1x8x48xf32> to vector<8x48xf32>
    %c1_22 = arith.constant 1 : index
    %c0_23 = arith.constant 0 : index
    %c0_24 = arith.constant 0 : index
    %60 = vector.load %arg3[%c1_22, %c0_23, %c0_24] : memref<7x16x1xf32, #tpu.memory_space<vmem>>, vector<1x8x1xf32>
    %61 = vector.shape_cast %60 : vector<1x8x1xf32> to vector<8x1xf32>
    %cst_25 = arith.constant dense<0.000000e+00> : vector<8x1024xf32>
    %62 = tpu.matmul %59, %57, %cst_25 {dimension_numbers = #tpu.dot_dimension_numbers<[1], [0], [0], [1], [0, 0, 1, 1], [], []>} : vector<8x48xf32>, vector<48x1024xf32>, vector<8x1024xf32> -> vector<8x1024xf32>
    %63 = vector.broadcast %61 : vector<8x1xf32> to vector<8x1024xf32>
    %64 = arith.addf %62, %63 : vector<8x1024xf32>
    %cst_26 = arith.constant 0.000000e+00 : f32
    %65 = vector.broadcast %cst_26 : f32 to vector<8x1024xf32>
    %66 = arith.maximumf %64, %65 : vector<8x1024xf32>
    %c1022_i32_27 = arith.constant 1022 : i32
    %67 = tpu.dynamic_rotate %66 by %c1022_i32_27 dim 1 : vector<8x1024xf32>, i32 -> vector<8x1024xf32>
    %68 = arith.maximumf %66, %67 : vector<8x1024xf32>
    %c4_i32_28 = arith.constant 4 : i32
    %69 = tpu.dynamic_rotate %68 by %c4_i32_28 dim 1 : vector<8x1024xf32>, i32 -> vector<8x1024xf32>
    %cst_29 = arith.constant 0.000000e+00 : f32
    %70 = vector.shape_cast %10 : vector<1x1024xi1> to vector<1x1024xi1>
    %71 = vector.broadcast %70 : vector<1x1024xi1> to vector<8x1024xi1>
    %72 = vector.broadcast %cst_29 : f32 to vector<8x1024xf32>
    %73 = arith.select %71, %69, %72 : vector<8x1024xi1>, vector<8x1024xf32>
    %c1020_i32 = arith.constant 1020 : i32
    %74 = tpu.dynamic_rotate %68 by %c1020_i32 dim 1 : vector<8x1024xf32>, i32 -> vector<8x1024xf32>
    %cst_30 = arith.constant 0.000000e+00 : f32
    %75 = vector.shape_cast %16 : vector<1x1024xi1> to vector<1x1024xi1>
    %76 = vector.broadcast %75 : vector<1x1024xi1> to vector<8x1024xi1>
    %77 = vector.broadcast %cst_30 : f32 to vector<8x1024xf32>
    %78 = arith.select %76, %74, %77 : vector<8x1024xi1>, vector<8x1024xf32>
    %79 = tpu.concatenate %73, %68, %78 in 0 : vector<8x1024xf32>, vector<8x1024xf32>, vector<8x1024xf32> -> vector<24x1024xf32>
    %c2 = arith.constant 2 : index
    %c0_31 = arith.constant 0 : index
    %c0_32 = arith.constant 0 : index
    %80 = vector.load %arg2[%c2, %c0_31, %c0_32] : memref<7x16x48xf32, #tpu.memory_space<vmem>>, vector<1x8x24xf32>
    %81 = vector.shape_cast %80 : vector<1x8x24xf32> to vector<8x24xf32>
    %c2_33 = arith.constant 2 : index
    %c0_34 = arith.constant 0 : index
    %c0_35 = arith.constant 0 : index
    %82 = vector.load %arg3[%c2_33, %c0_34, %c0_35] : memref<7x16x1xf32, #tpu.memory_space<vmem>>, vector<1x8x1xf32>
    %83 = vector.shape_cast %82 : vector<1x8x1xf32> to vector<8x1xf32>
    %cst_36 = arith.constant dense<0.000000e+00> : vector<8x1024xf32>
    %84 = tpu.matmul %81, %79, %cst_36 {dimension_numbers = #tpu.dot_dimension_numbers<[1], [0], [0], [1], [0, 0, 1, 1], [], []>} : vector<8x24xf32>, vector<24x1024xf32>, vector<8x1024xf32> -> vector<8x1024xf32>
    %85 = vector.broadcast %83 : vector<8x1xf32> to vector<8x1024xf32>
    %86 = arith.addf %84, %85 : vector<8x1024xf32>
    %cst_37 = arith.constant 0.000000e+00 : f32
    %87 = vector.broadcast %cst_37 : f32 to vector<8x1024xf32>
    %88 = arith.maximumf %86, %87 : vector<8x1024xf32>
    %c1020_i32_38 = arith.constant 1020 : i32
    %89 = tpu.dynamic_rotate %88 by %c1020_i32_38 dim 1 : vector<8x1024xf32>, i32 -> vector<8x1024xf32>
    %90 = arith.maximumf %88, %89 : vector<8x1024xf32>
    %cst_39 = arith.constant 0.000000e+00 : f32
    %91 = vector.shape_cast %28 : vector<1x1024xi1> to vector<1x1024xi1>
    %92 = vector.broadcast %91 : vector<1x1024xi1> to vector<8x1024xi1>
    %93 = vector.broadcast %cst_39 : f32 to vector<8x1024xf32>
    %94 = arith.select %92, %90, %93 : vector<8x1024xi1>, vector<8x1024xf32>
    %c4_i32_40 = arith.constant 4 : i32
    %95 = tpu.dynamic_rotate %94 by %c4_i32_40 dim 1 : vector<8x1024xf32>, i32 -> vector<8x1024xf32>
    %cst_41 = arith.constant 0.000000e+00 : f32
    %96 = vector.shape_cast %10 : vector<1x1024xi1> to vector<1x1024xi1>
    %97 = vector.broadcast %96 : vector<1x1024xi1> to vector<8x1024xi1>
    %98 = vector.broadcast %cst_41 : f32 to vector<8x1024xf32>
    %99 = arith.select %97, %95, %98 : vector<8x1024xi1>, vector<8x1024xf32>
    %c1020_i32_42 = arith.constant 1020 : i32
    %100 = tpu.dynamic_rotate %94 by %c1020_i32_42 dim 1 : vector<8x1024xf32>, i32 -> vector<8x1024xf32>
    %cst_43 = arith.constant 0.000000e+00 : f32
    %101 = vector.shape_cast %16 : vector<1x1024xi1> to vector<1x1024xi1>
    %102 = vector.broadcast %101 : vector<1x1024xi1> to vector<8x1024xi1>
    %103 = vector.broadcast %cst_43 : f32 to vector<8x1024xf32>
    %104 = arith.select %102, %100, %103 : vector<8x1024xi1>, vector<8x1024xf32>
    %105 = tpu.concatenate %99, %94, %104 in 0 : vector<8x1024xf32>, vector<8x1024xf32>, vector<8x1024xf32> -> vector<24x1024xf32>
    %c3 = arith.constant 3 : index
    %c0_44 = arith.constant 0 : index
    %c0_45 = arith.constant 0 : index
    %106 = vector.load %arg2[%c3, %c0_44, %c0_45] : memref<7x16x48xf32, #tpu.memory_space<vmem>>, vector<1x8x24xf32>
    %107 = vector.shape_cast %106 : vector<1x8x24xf32> to vector<8x24xf32>
    %c3_46 = arith.constant 3 : index
    %c0_47 = arith.constant 0 : index
    %c0_48 = arith.constant 0 : index
    %108 = vector.load %arg3[%c3_46, %c0_47, %c0_48] : memref<7x16x1xf32, #tpu.memory_space<vmem>>, vector<1x8x1xf32>
    %109 = vector.shape_cast %108 : vector<1x8x1xf32> to vector<8x1xf32>
    %cst_49 = arith.constant dense<0.000000e+00> : vector<8x1024xf32>
    %110 = tpu.matmul %107, %105, %cst_49 {dimension_numbers = #tpu.dot_dimension_numbers<[1], [0], [0], [1], [0, 0, 1, 1], [], []>} : vector<8x24xf32>, vector<24x1024xf32>, vector<8x1024xf32> -> vector<8x1024xf32>
    %111 = vector.broadcast %109 : vector<8x1xf32> to vector<8x1024xf32>
    %112 = arith.addf %110, %111 : vector<8x1024xf32>
    %cst_50 = arith.constant 0.000000e+00 : f32
    %113 = vector.broadcast %cst_50 : f32 to vector<8x1024xf32>
    %114 = arith.maximumf %112, %113 : vector<8x1024xf32>
    %cst_51 = arith.constant 0.000000e+00 : f32
    %115 = vector.shape_cast %24 : vector<1x1024xi1> to vector<1x1024xi1>
    %116 = vector.broadcast %115 : vector<1x1024xi1> to vector<8x1024xi1>
    %117 = vector.broadcast %cst_51 : f32 to vector<8x1024xf32>
    %118 = arith.select %116, %114, %117 : vector<8x1024xi1>, vector<8x1024xf32>
    %c2_i32_52 = arith.constant 2 : i32
    %119 = tpu.dynamic_rotate %118 by %c2_i32_52 dim 1 : vector<8x1024xf32>, i32 -> vector<8x1024xf32>
    %cst_53 = arith.constant 0.000000e+00 : f32
    %120 = vector.shape_cast %8 : vector<1x1024xi1> to vector<1x1024xi1>
    %121 = vector.broadcast %120 : vector<1x1024xi1> to vector<8x1024xi1>
    %122 = vector.broadcast %cst_53 : f32 to vector<8x1024xf32>
    %123 = arith.select %121, %119, %122 : vector<8x1024xi1>, vector<8x1024xf32>
    %c1022_i32_54 = arith.constant 1022 : i32
    %124 = tpu.dynamic_rotate %118 by %c1022_i32_54 dim 1 : vector<8x1024xf32>, i32 -> vector<8x1024xf32>
    %cst_55 = arith.constant 0.000000e+00 : f32
    %125 = vector.shape_cast %14 : vector<1x1024xi1> to vector<1x1024xi1>
    %126 = vector.broadcast %125 : vector<1x1024xi1> to vector<8x1024xi1>
    %127 = vector.broadcast %cst_55 : f32 to vector<8x1024xf32>
    %128 = arith.select %126, %124, %127 : vector<8x1024xi1>, vector<8x1024xf32>
    %129 = tpu.concatenate %123, %118, %128 in 0 : vector<8x1024xf32>, vector<8x1024xf32>, vector<8x1024xf32> -> vector<24x1024xf32>
    %c4 = arith.constant 4 : index
    %c0_56 = arith.constant 0 : index
    %c0_57 = arith.constant 0 : index
    %130 = vector.load %arg2[%c4, %c0_56, %c0_57] : memref<7x16x48xf32, #tpu.memory_space<vmem>>, vector<1x8x24xf32>
    %131 = vector.shape_cast %130 : vector<1x8x24xf32> to vector<8x24xf32>
    %c4_58 = arith.constant 4 : index
    %c0_59 = arith.constant 0 : index
    %c0_60 = arith.constant 0 : index
    %132 = vector.load %arg3[%c4_58, %c0_59, %c0_60] : memref<7x16x1xf32, #tpu.memory_space<vmem>>, vector<1x8x1xf32>
    %133 = vector.shape_cast %132 : vector<1x8x1xf32> to vector<8x1xf32>
    %cst_61 = arith.constant dense<0.000000e+00> : vector<8x1024xf32>
    %134 = tpu.matmul %131, %129, %cst_61 {dimension_numbers = #tpu.dot_dimension_numbers<[1], [0], [0], [1], [0, 0, 1, 1], [], []>} : vector<8x24xf32>, vector<24x1024xf32>, vector<8x1024xf32> -> vector<8x1024xf32>
    %135 = vector.broadcast %133 : vector<8x1xf32> to vector<8x1024xf32>
    %136 = arith.addf %134, %135 : vector<8x1024xf32>
    %cst_62 = arith.constant 0.000000e+00 : f32
    %137 = vector.broadcast %cst_62 : f32 to vector<8x1024xf32>
    %138 = arith.maximumf %136, %137 : vector<8x1024xf32>
    %cst_63 = arith.constant 0.000000e+00 : f32
    %139 = vector.shape_cast %20 : vector<1x1024xi1> to vector<1x1024xi1>
    %140 = vector.broadcast %139 : vector<1x1024xi1> to vector<8x1024xi1>
    %141 = vector.broadcast %cst_63 : f32 to vector<8x1024xf32>
    %142 = arith.select %140, %138, %141 : vector<8x1024xi1>, vector<8x1024xf32>
    %c1_i32_64 = arith.constant 1 : i32
    %143 = tpu.dynamic_rotate %142 by %c1_i32_64 dim 1 : vector<8x1024xf32>, i32 -> vector<8x1024xf32>
    %cst_65 = arith.constant 0.000000e+00 : f32
    %144 = vector.shape_cast %6 : vector<1x1024xi1> to vector<1x1024xi1>
    %145 = vector.broadcast %144 : vector<1x1024xi1> to vector<8x1024xi1>
    %146 = vector.broadcast %cst_65 : f32 to vector<8x1024xf32>
    %147 = arith.select %145, %143, %146 : vector<8x1024xi1>, vector<8x1024xf32>
    %c1023_i32_66 = arith.constant 1023 : i32
    %148 = tpu.dynamic_rotate %142 by %c1023_i32_66 dim 1 : vector<8x1024xf32>, i32 -> vector<8x1024xf32>
    %cst_67 = arith.constant 0.000000e+00 : f32
    %149 = vector.shape_cast %12 : vector<1x1024xi1> to vector<1x1024xi1>
    %150 = vector.broadcast %149 : vector<1x1024xi1> to vector<8x1024xi1>
    %151 = vector.broadcast %cst_67 : f32 to vector<8x1024xf32>
    %152 = arith.select %150, %148, %151 : vector<8x1024xi1>, vector<8x1024xf32>
    %153 = tpu.concatenate %147, %142, %152 in 0 : vector<8x1024xf32>, vector<8x1024xf32>, vector<8x1024xf32> -> vector<24x1024xf32>
    %c5 = arith.constant 5 : index
    %c0_68 = arith.constant 0 : index
    %c0_69 = arith.constant 0 : index
    %154 = vector.load %arg2[%c5, %c0_68, %c0_69] : memref<7x16x48xf32, #tpu.memory_space<vmem>>, vector<1x16x24xf32>
    %155 = vector.shape_cast %154 : vector<1x16x24xf32> to vector<16x24xf32>
    %c5_70 = arith.constant 5 : index
    %c0_71 = arith.constant 0 : index
    %c0_72 = arith.constant 0 : index
    %156 = vector.load %arg3[%c5_70, %c0_71, %c0_72] : memref<7x16x1xf32, #tpu.memory_space<vmem>>, vector<1x16x1xf32>
    %157 = vector.shape_cast %156 : vector<1x16x1xf32> to vector<16x1xf32>
    %cst_73 = arith.constant dense<0.000000e+00> : vector<16x1024xf32>
    %158 = tpu.matmul %155, %153, %cst_73 {dimension_numbers = #tpu.dot_dimension_numbers<[1], [0], [0], [1], [0, 0, 1, 1], [], []>} : vector<16x24xf32>, vector<24x1024xf32>, vector<16x1024xf32> -> vector<16x1024xf32>
    %159 = vector.broadcast %157 : vector<16x1xf32> to vector<16x1024xf32>
    %160 = arith.addf %158, %159 : vector<16x1024xf32>
    %cst_74 = arith.constant 0.000000e+00 : f32
    %161 = vector.broadcast %cst_74 : f32 to vector<16x1024xf32>
    %162 = arith.maximumf %160, %161 : vector<16x1024xf32>
    %c1_i32_75 = arith.constant 1 : i32
    %163 = tpu.dynamic_rotate %162 by %c1_i32_75 dim 1 : vector<16x1024xf32>, i32 -> vector<16x1024xf32>
    %cst_76 = arith.constant 0.000000e+00 : f32
    %164 = vector.shape_cast %6 : vector<1x1024xi1> to vector<1x1024xi1>
    %165 = vector.broadcast %164 : vector<1x1024xi1> to vector<16x1024xi1>
    %166 = vector.broadcast %cst_76 : f32 to vector<16x1024xf32>
    %167 = arith.select %165, %163, %166 : vector<16x1024xi1>, vector<16x1024xf32>
    %c1023_i32_77 = arith.constant 1023 : i32
    %168 = tpu.dynamic_rotate %162 by %c1023_i32_77 dim 1 : vector<16x1024xf32>, i32 -> vector<16x1024xf32>
    %cst_78 = arith.constant 0.000000e+00 : f32
    %169 = vector.shape_cast %12 : vector<1x1024xi1> to vector<1x1024xi1>
    %170 = vector.broadcast %169 : vector<1x1024xi1> to vector<16x1024xi1>
    %171 = vector.broadcast %cst_78 : f32 to vector<16x1024xf32>
    %172 = arith.select %170, %168, %171 : vector<16x1024xi1>, vector<16x1024xf32>
    %173 = tpu.concatenate %167, %162, %172 in 0 : vector<16x1024xf32>, vector<16x1024xf32>, vector<16x1024xf32> -> vector<48x1024xf32>
    %c6 = arith.constant 6 : index
    %c0_79 = arith.constant 0 : index
    %c0_80 = arith.constant 0 : index
    %174 = vector.load %arg2[%c6, %c0_79, %c0_80] : memref<7x16x48xf32, #tpu.memory_space<vmem>>, vector<1x1x48xf32>
    %175 = vector.shape_cast %174 : vector<1x1x48xf32> to vector<1x48xf32>
    %c6_81 = arith.constant 6 : index
    %c0_82 = arith.constant 0 : index
    %c0_83 = arith.constant 0 : index
    %176 = vector.load %arg3[%c6_81, %c0_82, %c0_83] : memref<7x16x1xf32, #tpu.memory_space<vmem>>, vector<1x1x1xf32>
    %177 = vector.shape_cast %176 : vector<1x1x1xf32> to vector<1x1xf32>
    %cst_84 = arith.constant dense<0.000000e+00> : vector<1x1024xf32>
    %178 = tpu.matmul %175, %173, %cst_84 {dimension_numbers = #tpu.dot_dimension_numbers<[1], [0], [0], [1], [0, 0, 1, 1], [], []>} : vector<1x48xf32>, vector<48x1024xf32>, vector<1x1024xf32> -> vector<1x1024xf32>
    %179 = vector.broadcast %177 : vector<1x1xf32> to vector<1x1024xf32>
    %180 = arith.addf %178, %179 : vector<1x1024xf32>
    %cst_85 = arith.constant 5.000000e-01 : f32
    %181 = vector.broadcast %cst_85 : f32 to vector<1x1024xf32>
    %182 = arith.mulf %181, %180 : vector<1x1024xf32>
    %183 = math.tanh %182 : vector<1x1024xf32>
    %cst_86 = arith.constant 5.000000e-01 : f32
    %184 = vector.broadcast %cst_86 : f32 to vector<1x1024xf32>
    %185 = arith.mulf %184, %183 : vector<1x1024xf32>
    %cst_87 = arith.constant 5.000000e-01 : f32
    %186 = vector.broadcast %cst_87 : f32 to vector<1x1024xf32>
    %187 = arith.addf %185, %186 : vector<1x1024xf32>
    %c0_88 = arith.constant 0 : index
    %c0_89 = arith.constant 0 : index
    %c0_90 = arith.constant 0 : index
    %188 = vector.load %arg4[%c0_88, %c0_89, %c0_90] : memref<1x1x1024xf32, #tpu.memory_space<vmem>>, vector<1x1x1024xf32>
    %189 = vector.shape_cast %188 : vector<1x1x1024xf32> to vector<1x1024xf32>
    %190 = vector.shape_cast %187 : vector<1x1024xf32> to vector<1x1x1024xf32>
    tpu.vector_store %arg4[%c0_88, %c0_89, %c0_90], %190 {strides = array<i32>} : memref<1x1x1024xf32, #tpu.memory_space<vmem>>, vector<1x1x1024xf32>,
    return
  }
  func.func @transform_0(%arg0: i32) -> (i32, i32, i32) {
    %c0_i32 = arith.constant 0 : i32
    %c0_i32_0 = arith.constant 0 : i32
    %c0_i32_1 = arith.constant 0 : i32
    return %arg0, %c0_i32, %c0_i32_0 : i32, i32, i32
  }
  func.func @transform_1(%arg0: i32) -> (i32, i32, i32) {
    %c0_i32 = arith.constant 0 : i32
    %c0_i32_0 = arith.constant 0 : i32
    %c0_i32_1 = arith.constant 0 : i32
    %c0_i32_2 = arith.constant 0 : i32
    return %c0_i32, %c0_i32_0, %c0_i32_1 : i32, i32, i32
  }
  func.func @transform_2(%arg0: i32) -> (i32, i32, i32) {
    %c0_i32 = arith.constant 0 : i32
    %c0_i32_0 = arith.constant 0 : i32
    %c0_i32_1 = arith.constant 0 : i32
    %c0_i32_2 = arith.constant 0 : i32
    return %c0_i32, %c0_i32_0, %c0_i32_1 : i32, i32, i32
  }
  func.func @transform_3(%arg0: i32) -> (i32, i32, i32) {
    %c0_i32 = arith.constant 0 : i32
    %c0_i32_0 = arith.constant 0 : i32
    %c0_i32_1 = arith.constant 0 : i32
    return %arg0, %c0_i32, %c0_i32_0 : i32, i32, i32
  }
}

</mosaic_0001>

<llo_original>
// kernel: conv_autoencoder_forward.1
$region0: #{conv_autoencoder_forward.1}
  #allocation0 [shape = 'u32[]', space=smem, size = 0x4, offset = 0x4, fixed_abs, tag = 'smem constant byte address 0x4 - core index']
  #allocation1 [shape = 'u32[144,128]{1,0:T(1,128)}', space=vmem, size = 0x12000, scoped, tag = 'internal scratch']
  %s0 = inlined_call_operand.vmem [shape: f32[2,1,1024], index: 0, kind: input, shape index: {}]
  %s1 = inlined_call_operand.vmem [shape: f32[7,16,48], index: 1, kind: input, shape index: {}]
  %s2 = inlined_call_operand.vmem [shape: f32[7,16,1], index: 2, kind: input, shape index: {}]
  %s3 = inlined_call_operand.hbm [shape: f32[2,1,1024], index: 3, kind: output, shape index: {}]
  %s4 = sld [smem:[#allocation0]]
  $region45: #{conv_autoencoder_forward.1} parent=0
    _
  %s6 = ssub.s32 1, %s4
  %s7 = scalar_select 0, %s6, %s4
  $region1: #{conv_autoencoder_forward.1} parent=0
    #allocation2 [shape = 'u8[8192]{0}', space=vmem, size = 0x2000, scoped, tag = 'output window, operand 0']
    #allocation3 [shape = 's32[2]{0}', space=sflag, size = 0x8, scoped, tag = 'scoped memory for conv_autoencoder_forward.1']
    %8 = vsyncpa [#allocation3], 0
    %s9 = scalar_lea.sflag [#allocation3], 1
    %10 = vsyncpa %s9, 0
    loop: start=0, step=1, limit=4
    $region2: #{conv_autoencoder_forward.1} parent=1 // loop_pre_header
      _
    $region3: #{conv_autoencoder_forward.1} parent=1 // loop_header
      %s12 = sphi 0, %s16
      %p13 = scmp.ge.s32.totalorder %s12, 4
      %s22 = sphi 0, %s24
      %s25 = sphi 0, %s22
      %s26 = sphi 0, %s25
      %s42 = sphi 0, %s26
      %s46 = sphi 0, %s46
      %s48 = sphi 0, %s46
      %s49 = sphi 0, %s48
      %s63 = sphi 0, %s49
      %s67 = sphi 0, %s67
      %s69 = sphi 0, %s67
      %s70 = sphi 0, %s69
      %s84 = sphi 0, %s70
      %s90 = sphi 0, %s92
      %s93 = sphi 0, %s90
      %s94 = sphi 0, %s93
      %s110 = sphi 0, %s94
    $region4: #{conv_autoencoder_forward.1} parent=1 // loop_header_branch
      %15 = sbr.rel (%p13) target = $region8
    $region5: #{conv_autoencoder_forward.1} parent=1 // loop_body
      %s17 = ssub.s32 %s12, 1
      %s18 = ssub.s32 %s12, 2
      %s19 = sadd.s32 %s12, 1
      %s20 = ssub.s32 %s12, %s19
      %p21 = scmp.eq.s32.totalorder %s20, 0
      %s23 = sadd.s32 %s22, 1
      %s24 = scalar_select %p21, %s22, %s23
      %p27 = pneg %p21
      %p28 = scmp.eq.s32.totalorder %s12, 1
      %p29 = por %p27, %p28
      %p30 = scmp.ne.s32.totalorder %s22, %s25
      %p31 = scmp.eq.s32.totalorder %s12, 0
      %p32 = por %p30, %p31
      %p33 = scmp.ne.s32.totalorder %s22, %s25
      %p34 = scmp.eq.s32.totalorder %s17, 1
      %p35 = por %p33, %p34
      %p36 = scmp.ne.s32.totalorder %s25, %s26
      %p37 = scmp.eq.s32.totalorder %s17, 0
      %p38 = por %p36, %p37
      %p39 = scmp.ne.s32.totalorder %s25, %s26
      %p40 = scmp.eq.s32.totalorder %s18, 1
      %p41 = por %p39, %p40
      %p43 = scmp.ne.s32.totalorder %s26, %s42
      %p44 = scmp.eq.s32.totalorder %s18, 0
      %p45 = por %p43, %p44
      %s47 = sadd.s32 %s46, 1
      %p50 = scmp.eq.s32.totalorder %s12, 1
      %p51 = scmp.ne.s32.totalorder %s46, %s48
      %p52 = scmp.eq.s32.totalorder %s12, 0
      %p53 = por %p51, %p52
      %p54 = scmp.ne.s32.totalorder %s46, %s48
      %p55 = scmp.eq.s32.totalorder %s17, 1
      %p56 = por %p54, %p55
      %p57 = scmp.ne.s32.totalorder %s48, %s49
      %p58 = scmp.eq.s32.totalorder %s17, 0
      %p59 = por %p57, %p58
      %p60 = scmp.ne.s32.totalorder %s48, %s49
      %p61 = scmp.eq.s32.totalorder %s18, 1
      %p62 = por %p60, %p61
      %p64 = scmp.ne.s32.totalorder %s49, %s63
      %p65 = scmp.eq.s32.totalorder %s18, 0
      %p66 = por %p64, %p65
      %s68 = sadd.s32 %s67, 1
      %p71 = scmp.eq.s32.totalorder %s12, 1
      %p72 = scmp.ne.s32.totalorder %s67, %s69
      %p73 = scmp.eq.s32.totalorder %s12, 0
      %p74 = por %p72, %p73
      %p75 = scmp.ne.s32.totalorder %s67, %s69
      %p76 = scmp.eq.s32.totalorder %s17, 1
      %p77 = por %p75, %p76
      %p78 = scmp.ne.s32.totalorder %s69, %s70
      %p79 = scmp.eq.s32.totalorder %s17, 0
      %p80 = por %p78, %p79
      %p81 = scmp.ne.s32.totalorder %s69, %s70
      %p82 = scmp.eq.s32.totalorder %s18, 1
      %p83 = por %p81, %p82
      %p85 = scmp.ne.s32.totalorder %s70, %s84
      %p86 = scmp.eq.s32.totalorder %s18, 0
      %p87 = por %p85, %p86
      %s88 = ssub.s32 %s12, %s19
      %p89 = scmp.eq.s32.totalorder %s88, 0
      %s91 = sadd.s32 %s90, 1
      %s92 = scalar_select %p89, %s90, %s91
      %p95 = pneg %p89
      %p96 = scmp.eq.s32.totalorder %s12, 1
      %p97 = por %p95, %p96
      %p98 = scmp.ne.s32.totalorder %s90, %s93
      %p99 = scmp.eq.s32.totalorder %s12, 0
      %p100 = por %p98, %p99
      %p101 = scmp.ne.s32.totalorder %s90, %s93
      %p102 = scmp.eq.s32.totalorder %s17, 1
      %p103 = por %p101, %p102
      %p104 = scmp.ne.s32.totalorder %s93, %s94
      %p105 = scmp.eq.s32.totalorder %s17, 0
      %p106 = por %p104, %p105
      %p107 = scmp.ne.s32.totalorder %s93, %s94
      %p108 = scmp.eq.s32.totalorder %s18, 1
      %p109 = por %p107, %p108
      %p111 = scmp.ne.s32.totalorder %s94, %s110
      %p112 = scmp.eq.s32.totalorder %s18, 0
      %p113 = por %p111, %p112
      %p114 = scmp.le.s32.totalorder 1, %s12
      %p115 = scmp.lt.s32.totalorder %s12, 3
      %p116 = pnand %p114, %p115
      %p117 = pneg %p116
      // Predicated region
      $region9: #{conv_autoencoder_forward.1} parent=5 // pred_check
        _
      $region10: #{conv_autoencoder_forward.1} parent=5 // pred_check_branch
        %119 = sbr.rel (%p116) target = $region12
      $region11: #{conv_autoencoder_forward.1} parent=5 // pred_region
        %s120 = ssub.s32 %s12, 1
        // Predicated region
        $region13: #{conv_autoencoder_forward.1} parent=11 // pred_check
          %p121 = pneg %p59
        $region14: #{conv_autoencoder_forward.1} parent=11 // pred_check_branch
          %123 = sbr.rel (%p121) target = $region16
        $region15: #{conv_autoencoder_forward.1} parent=11 // pred_region
          _
        $region16: #{conv_autoencoder_forward.1} parent=11 // pred_fallthru
          _
        // Predicated region
        $region17: #{conv_autoencoder_forward.1} parent=11 // pred_check
          %p124 = pneg %p80
        $region18: #{conv_autoencoder_forward.1} parent=11 // pred_check_branch
          %126 = sbr.rel (%p124) target = $region20
        $region19: #{conv_autoencoder_forward.1} parent=11 // pred_region
          _
        $region20: #{conv_autoencoder_forward.1} parent=11 // pred_fallthru
          _
      $region12: #{conv_autoencoder_forward.1} parent=5 // pred_fallthru
        _
      %p127 = scmp.lt.s32.totalorder %s12, 2
      // Predicated region
      $region21: #{conv_autoencoder_forward.1} parent=5 // pred_check
        %p128 = pneg %p127
      $region22: #{conv_autoencoder_forward.1} parent=5 // pred_check_branch
        %130 = sbr.rel (%p128) target = $region24
      $region23: #{conv_autoencoder_forward.1} parent=5 // pred_region
        // Predicated region
        $region25: #{conv_autoencoder_forward.1} parent=23 // pred_check
          %p131 = pneg %p32
        $region26: #{conv_autoencoder_forward.1} parent=23 // pred_check_branch
          %133 = sbr.rel (%p131) target = $region28
        $region27: #{conv_autoencoder_forward.1} parent=23 // pred_region
          %p134 = scmp.lt.s32.totalorder %s12, 1
          %s135 = scalar_select %p134, %s12, 1
          %s136 = smul.addr %s135, 8
          %s137 = scalar_lea.vmem %s0, %s136
        $region28: #{conv_autoencoder_forward.1} parent=23 // pred_fallthru
          _
      $region24: #{conv_autoencoder_forward.1} parent=5 // pred_fallthru
        _
      %p138 = scmp.le.s32.totalorder 1, %s12
      %p139 = scmp.lt.s32.totalorder %s12, 3
      %p140 = pnand %p138, %p139
      %p141 = pneg %p140
      // Predicated region
      $region29: #{conv_autoencoder_forward.1} parent=5 // pred_check
        _
      $region30: #{conv_autoencoder_forward.1} parent=5 // pred_check_branch
        %143 = sbr.rel (%p140) target = $region32
      $region31: #{conv_autoencoder_forward.1} parent=5 // pred_region
        %s144 = ssub.s32 %s12, 1
        %p145 = scmp.lt.s32.totalorder %s17, 1
        %s146 = scalar_select %p145, %s17, 1
        %s147 = smul.addr %s146, 8
        %s148 = scalar_lea.vmem %s0, %s147
        %p149 = pneg %p38
        %p150 = pneg %p35
        %p151 = pneg %p59
        %p152 = pneg %p56
        %p153 = pneg %p80
        %p154 = pneg %p77
        %p155 = pneg %p106
        %p156 = pneg %p103
        %s157 = sand.u32 %s93, 1
        %s158 = scalar_lea.sflag [#allocation3], %s157
        %s159 = sand.u32 %s93, 1
        %s160 = smul.addr %s159, 8
        %s161 = scalar_lea.vmem [#allocation2], %s160
        %p162 = scmp.lt.s32.totalorder %s17, 1
        %s163 = scalar_select %p162, %s17, 1
        %s164 = smul.addr %s163, 8
        %s165 = scalar_lea.vmem %s0, %s164
        %v166 = vld [vmem:[%s165] sm:$0xff]
        %v167 = vlaneseq
        %v168 = vand.u32 %v167, 127
        %v169 = vadd.s32 %v168, 128
        %v170 = vadd.s32 %v168, 256
        %v171 = vadd.s32 %v168, 384
        %v172 = vadd.s32 %v168, 512
        %v173 = vadd.s32 %v168, 640
        %v174 = vadd.s32 %v168, 768
        %v175 = vadd.s32 %v168, 896
        %v176 = vand.u32 %v168, 255
        %v177 = vand.u32 %v169, 255
        %v178 = vand.u32 %v170, 255
        %v179 = vand.u32 %v171, 255
        %v180 = vand.u32 %v172, 255
        %v181 = vand.u32 %v173, 255
        %v182 = vand.u32 %v174, 255
        %v183 = vand.u32 %v175, 255
        %vm184 = vcmp.ge.s32.totalorder %v176, 1
        %vm185 = vcmp.ge.s32.totalorder %v177, 1
        %vm186 = vcmp.ge.s32.totalorder %v178, 1
        %vm187 = vcmp.ge.s32.totalorder %v179, 1
        %vm188 = vcmp.ge.s32.totalorder %v180, 1
        %vm189 = vcmp.ge.s32.totalorder %v181, 1
        %vm190 = vcmp.ge.s32.totalorder %v182, 1
        %vm191 = vcmp.ge.s32.totalorder %v183, 1
        %vm192 = vcmp.ge.s32.totalorder %v176, 2
        %vm193 = vcmp.ge.s32.totalorder %v177, 2
        %vm194 = vcmp.ge.s32.totalorder %v178, 2
        %vm195 = vcmp.ge.s32.totalorder %v179, 2
        %vm196 = vcmp.ge.s32.totalorder %v180, 2
        %vm197 = vcmp.ge.s32.totalorder %v181, 2
        %vm198 = vcmp.ge.s32.totalorder %v182, 2
        %vm199 = vcmp.ge.s32.totalorder %v183, 2
        %vm200 = vcmp.ge.s32.totalorder %v176, 4
        %vm201 = vcmp.ge.s32.totalorder %v177, 4
        %vm202 = vcmp.ge.s32.totalorder %v178, 4
        %vm203 = vcmp.ge.s32.totalorder %v179, 4
        %vm204 = vcmp.ge.s32.totalorder %v180, 4
        %vm205 = vcmp.ge.s32.totalorder %v181, 4
        %vm206 = vcmp.ge.s32.totalorder %v182, 4
        %vm207 = vcmp.ge.s32.totalorder %v183, 4
        %vm208 = vcmp.lt.s32.totalorder %v176, 255
        %vm209 = vcmp.lt.s32.totalorder %v177, 255
        %vm210 = vcmp.lt.s32.totalorder %v178, 255
        %vm211 = vcmp.lt.s32.totalorder %v179, 255
        %vm212 = vcmp.lt.s32.totalorder %v180, 255
        %vm213 = vcmp.lt.s32.totalorder %v181, 255
        %vm214 = vcmp.lt.s32.totalorder %v182, 255
        %vm215 = vcmp.lt.s32.totalorder %v183, 255
        %vm216 = vcmp.lt.s32.totalorder %v176, 254
        %vm217 = vcmp.lt.s32.totalorder %v177, 254
        %vm218 = vcmp.lt.s32.totalorder %v178, 254
        %vm219 = vcmp.lt.s32.totalorder %v179, 254
        %vm220 = vcmp.lt.s32.totalorder %v180, 254
        %vm221 = vcmp.lt.s32.totalorder %v181, 254
        %vm222 = vcmp.lt.s32.totalorder %v182, 254
        %vm223 = vcmp.lt.s32.totalorder %v183, 254
        %vm224 = vcmp.lt.s32.totalorder %v176, 252
        %vm225 = vcmp.lt.s32.totalorder %v177, 252
        %vm226 = vcmp.lt.s32.totalorder %v178, 252
        %vm227 = vcmp.lt.s32.totalorder %v179, 252
        %vm228 = vcmp.lt.s32.totalorder %v180, 252
        %vm229 = vcmp.lt.s32.totalorder %v181, 252
        %vm230 = vcmp.lt.s32.totalorder %v182, 252
        %vm231 = vcmp.lt.s32.totalorder %v183, 252
        %v232 = vand.u32 %v176, 1
        %v233 = vand.u32 %v177, 1
        %v234 = vand.u32 %v178, 1
        %v235 = vand.u32 %v179, 1
        %v236 = vand.u32 %v180, 1
        %v237 = vand.u32 %v181, 1
        %v238 = vand.u32 %v182, 1
        %v239 = vand.u32 %v183, 1
        %vm240 = vcmp.eq.s32.totalorder %v232, 0
        %vm241 = vcmp.eq.s32.totalorder %v233, 0
        %vm242 = vcmp.eq.s32.totalorder %v234, 0
        %vm243 = vcmp.eq.s32.totalorder %v235, 0
        %vm244 = vcmp.eq.s32.totalorder %v236, 0
        %vm245 = vcmp.eq.s32.totalorder %v237, 0
        %vm246 = vcmp.eq.s32.totalorder %v238, 0
        %vm247 = vcmp.eq.s32.totalorder %v239, 0
        %v248 = vand.u32 %v176, 3
        %v249 = vand.u32 %v177, 3
        %v250 = vand.u32 %v178, 3
        %v251 = vand.u32 %v179, 3
        %v252 = vand.u32 %v180, 3
        %v253 = vand.u32 %v181, 3
        %v254 = vand.u32 %v182, 3
        %v255 = vand.u32 %v183, 3
        %vm256 = vcmp.eq.s32.totalorder %v248, 0
        %vm257 = vcmp.eq.s32.totalorder %v249, 0
        %vm258 = vcmp.eq.s32.totalorder %v250, 0
        %vm259 = vcmp.eq.s32.totalorder %v251, 0
        %vm260 = vcmp.eq.s32.totalorder %v252, 0
        %vm261 = vcmp.eq.s32.totalorder %v253, 0
        %vm262 = vcmp.eq.s32.totalorder %v254, 0
        %vm263 = vcmp.eq.s32.totalorder %v255, 0
        %v264 = vand.u32 %v176, 7
        %v265 = vand.u32 %v177, 7
        %v266 = vand.u32 %v178, 7
        %v267 = vand.u32 %v179, 7
        %v268 = vand.u32 %v180, 7
        %v269 = vand.u32 %v181, 7
        %v270 = vand.u32 %v182, 7
        %v271 = vand.u32 %v183, 7
        %vm272 = vcmp.eq.s32.totalorder %v264, 0
        %vm273 = vcmp.eq.s32.totalorder %v265, 0
        %vm274 = vcmp.eq.s32.totalorder %v266, 0
        %vm275 = vcmp.eq.s32.totalorder %v267, 0
        %vm276 = vcmp.eq.s32.totalorder %v268, 0
        %vm277 = vcmp.eq.s32.totalorder %v269, 0
        %vm278 = vcmp.eq.s32.totalorder %v270, 0
        %vm279 = vcmp.eq.s32.totalorder %v271, 0
        %v281 = vlaneseq
        %v282 = vshrl.u32 %v281, 7
        %v283 = vsub.s32 0, %v282
        %v284 = vrot.slane %v166, %v283
        %v285 = vlaneseq
        %v286 = vshrl.u32 %v285, 7
        %v287 = vsub.s32 1, %v286
        %v288 = vrot.slane %v166, %v287
        %v289 = vlaneseq
        %v290 = vshrl.u32 %v289, 7
        %v291 = vsub.s32 2, %v290
        %v292 = vrot.slane %v166, %v291
        %v293 = vlaneseq
        %v294 = vshrl.u32 %v293, 7
        %v295 = vsub.s32 3, %v294
        %v296 = vrot.slane %v166, %v295
        %v297 = vlaneseq
        %v298 = vshrl.u32 %v297, 7
        %v299 = vsub.s32 4, %v298
        %v300 = vrot.slane %v166, %v299
        %v301 = vlaneseq
        %v302 = vshrl.u32 %v301, 7
        %v303 = vsub.s32 5, %v302
        %v304 = vrot.slane %v166, %v303
        %v305 = vlaneseq
        %v306 = vshrl.u32 %v305, 7
        %v307 = vsub.s32 6, %v306
        %v308 = vrot.slane %v166, %v307
        %v309 = vlaneseq
        %v310 = vshrl.u32 %v309, 7
        %v311 = vsub.s32 7, %v310
        %v312 = vrot.slane %v166, %v311
        %321 = vrot.lane.b32.xlu0 %v284, 1
        %v322 = vpop.permute.xlu0 %321
        %323 = vrot.lane.b32.xlu0 %v288, 1
        %v324 = vpop.permute.xlu0 %323
        %325 = vrot.lane.b32.xlu0 %v292, 1
        %v326 = vpop.permute.xlu0 %325
        %327 = vrot.lane.b32.xlu0 %v296, 1
        %v328 = vpop.permute.xlu0 %327
        %329 = vrot.lane.b32.xlu0 %v300, 1
        %v330 = vpop.permute.xlu0 %329
        %331 = vrot.lane.b32.xlu0 %v304, 1
        %v332 = vpop.permute.xlu0 %331
        %333 = vrot.lane.b32.xlu0 %v308, 1
        %v334 = vpop.permute.xlu0 %333
        %335 = vrot.lane.b32.xlu0 %v312, 1
        %v336 = vpop.permute.xlu0 %335
        %vm337 = vcmp.lt.s32.totalorder %v168, 1
        %v338 = vsel %vm337, %v334, %v336
        %v339 = vsel %vm337, %v332, %v334
        %v340 = vsel %vm337, %v330, %v332
        %v341 = vsel %vm337, %v328, %v330
        %v342 = vsel %vm337, %v326, %v328
        %v343 = vsel %vm337, %v324, %v326
        %v344 = vsel %vm337, %v322, %v324
        %v345 = vsel %vm337, %v336, %v322
        %v346 = vsel %vm184, %v345, 0.0
        %v347 = vsel %vm185, %v344, 0.0
        %v348 = vsel %vm186, %v343, 0.0
        %v349 = vsel %vm187, %v342, 0.0
        %v350 = vsel %vm188, %v341, 0.0
        %v351 = vsel %vm189, %v340, 0.0
        %v352 = vsel %vm190, %v339, 0.0
        %v353 = vsel %vm191, %v338, 0.0
        %354 = vrot.lane.b32.xlu0 %v284, 127
        %v355 = vpop.permute.xlu0 %354
        %356 = vrot.lane.b32.xlu0 %v288, 127
        %v357 = vpop.permute.xlu0 %356
        %358 = vrot.lane.b32.xlu0 %v292, 127
        %v359 = vpop.permute.xlu0 %358
        %360 = vrot.lane.b32.xlu0 %v296, 127
        %v361 = vpop.permute.xlu0 %360
        %362 = vrot.lane.b32.xlu0 %v300, 127
        %v363 = vpop.permute.xlu0 %362
        %364 = vrot.lane.b32.xlu0 %v304, 127
        %v365 = vpop.permute.xlu0 %364
        %366 = vrot.lane.b32.xlu0 %v308, 127
        %v367 = vpop.permute.xlu0 %366
        %368 = vrot.lane.b32.xlu0 %v312, 127
        %v369 = vpop.permute.xlu0 %368
        %vm370 = vcmp.lt.s32.totalorder %v168, 127
        %v371 = vsel %vm370, %v367, %v369
        %v372 = vsel %vm370, %v365, %v367
        %v373 = vsel %vm370, %v363, %v365
        %v374 = vsel %vm370, %v361, %v363
        %v375 = vsel %vm370, %v359, %v361
        %v376 = vsel %vm370, %v357, %v359
        %v377 = vsel %vm370, %v355, %v357
        %v378 = vsel %vm370, %v369, %v355
        %v379 = vsel %vm208, %v377, 0.0
        %v380 = vsel %vm209, %v376, 0.0
        %v381 = vsel %vm210, %v375, 0.0
        %v382 = vsel %vm211, %v374, 0.0
        %v383 = vsel %vm212, %v373, 0.0
        %v384 = vsel %vm213, %v372, 0.0
        %v385 = vsel %vm214, %v371, 0.0
        %v386 = vsel %vm215, %v378, 0.0
        %v395 = vrot.slane %v379, 6
        %v396 = vrot.slane %v380, 6
        %v397 = vrot.slane %v381, 6
        %v398 = vrot.slane %v382, 6
        %v399 = vrot.slane %v383, 6
        %v400 = vrot.slane %v384, 6
        %v401 = vrot.slane %v385, 6
        %v402 = vrot.slane %v386, 6
        %vm411 = vcmask 1040384
        %v412 = vsel %vm411, %v346, %v284
        %v413 = vsel %vm411, %v347, %v288
        %v414 = vsel %vm411, %v348, %v292
        %v415 = vsel %vm411, %v349, %v296
        %v416 = vsel %vm411, %v350, %v300
        %v417 = vsel %vm411, %v351, %v304
        %v418 = vsel %vm411, %v352, %v308
        %v419 = vsel %vm411, %v353, %v312
        %vm420 = vcmask 1041408
        %v421 = vsel %vm420, %v412, %v395
        %v422 = vsel %vm420, %v413, %v396
        %v423 = vsel %vm420, %v414, %v397
        %v424 = vsel %vm420, %v415, %v398
        %v425 = vsel %vm420, %v416, %v399
        %v426 = vsel %vm420, %v417, %v400
        %v427 = vsel %vm420, %v418, %v401
        %v428 = vsel %vm420, %v419, %v402
        %v429 = vld [vmem:[%s1] sm:$0xff]
        %v430 = vld [vmem:[%s1 + $0x8] sm:$0xff]
        %v431 = vld [vmem:[%s2] sm:$0xff]
        %v432 = vld [vmem:[%s2 + $0x8] sm:$0xff]
        %434 = vset.pattern.permute.xlu0 0
        %435 = vperm.xlu0 %434, %v431
        %v436 = vpop.permute.xlu0 %435
        %439 = vset.pattern.permute.xlu0 0
        %440 = vperm.xlu0 %439, %v432
        %v441 = vpop.permute.xlu0 %440
        %vm443 = vcmask 23552
        %v445 = vsel %vm443, %v429, 0
        %v448 = vsel %vm443, %v430, 0
        %vm450 = vcmask 1042432
        %v452 = vsel %vm450, %v421, 0
        %v455 = vsel %vm450, %v422, 0
        %v458 = vsel %vm450, %v423, 0
        %v461 = vsel %vm450, %v424, 0
        %v464 = vsel %vm450, %v425, 0
        %v467 = vsel %vm450, %v426, 0
        %v470 = vsel %vm450, %v427, 0
        %v473 = vsel %vm450, %v428, 0
        %475 = vmatprep.subr.mxu0 %v455
        %476 = vmatpush1.msra.mxu0 %v452
        %477 = vmatprep.subr.mxu0 0.0
        %478 = vmatpush1.msra.mxu0 0.0
        %479 = vmatprep.subr.mxu0 0.0
        %480 = vmatpush1.msra.mxu0 0.0
        %481 = vmatprep.subr.mxu0 0.0
        %482 = vmatpush1.msra.mxu0 0.0
        %483 = vmatprep.subr.mxu0 0.0
        %484 = vmatpush1.msra.mxu0 0.0
        %485 = vmatprep.subr.mxu0 0.0
        %486 = vmatpush1.msra.mxu0 0.0
        %487 = vmatprep.subr.mxu0 0.0
        %488 = vmatpush1.msra.mxu0 0.0
        %489 = vmatprep.subr.mxu0 0.0
        %490 = vmatpush1.msra.mxu0 0.0
        %491 = vmatprep.subr.mxu0 0.0
        %492 = vmatpush1.msra.mxu0 0.0
        %493 = vmatprep.subr.mxu0 0.0
        %494 = vmatpush1.msra.mxu0 0.0
        %495 = vmatprep.subr.mxu0 0.0
        %496 = vmatpush1.msra.mxu0 0.0
        %497 = vmatprep.subr.mxu0 0.0
        %498 = vmatpush1.msra.mxu0 0.0
        %499 = vmatprep.subr.mxu0 0.0
        %500 = vmatpush1.msra.mxu0 0.0
        %501 = vmatprep.subr.mxu0 0.0
        %502 = vmatpush1.msra.mxu0 0.0
        %503 = vmatprep.subr.mxu0 0.0
        %504 = vmatpush1.msra.mxu0 0.0
        %505 = vmatprep.subr.mxu0 0.0
        %506 = vmatpush1.msra.mxu0 0.0
        %507 = vmatprep.subr.mxu0 0.0
        %508 = vmatpush1.msra.mxu0 0.0
        %509 = vmatprep.subr.mxu0 0.0
        %510 = vmatpush1.msra.mxu0 0.0
        %511 = vmatprep.subr.mxu0 0.0
        %512 = vmatpush1.msra.mxu0 0.0
        %513 = vmatprep.subr.mxu0 0.0
        %514 = vmatpush1.msra.mxu0 0.0
        %515 = vmatprep.subr.mxu0 0.0
        %516 = vmatpush1.msra.mxu0 0.0
        %517 = vmatprep.subr.mxu0 0.0
        %518 = vmatpush1.msra.mxu0 0.0
        %519 = vmatprep.subr.mxu0 0.0
        %520 = vmatpush1.msra.mxu0 0.0
        %521 = vmatprep.subr.mxu0 0.0
        %522 = vmatpush1.msra.mxu0 0.0
        %523 = vmatprep.subr.mxu0 0.0
        %524 = vmatpush1.msra.mxu0 0.0
        %525 = vmatprep.subr.mxu0 0.0
        %526 = vmatpush1.msra.mxu0 0.0
        %527 = vmatprep.subr.mxu0 0.0
        %528 = vmatpush1.msra.mxu0 0.0
        %529 = vmatprep.subr.mxu0 0.0
        %530 = vmatpush1.msra.mxu0 0.0
        %531 = vmatprep.subr.mxu0 0.0
        %532 = vmatpush1.msra.mxu0 0.0
        %533 = vmatprep.subr.mxu0 0.0
        %534 = vmatpush1.msra.mxu0 0.0
        %535 = vmatprep.subr.mxu0 0.0
        %536 = vmatpush1.msra.mxu0 0.0
        %537 = vmatprep.subr.mxu0 0.0
        %538 = vmatpush1.msra.mxu0 0.0
        %539 = vmatprep.mubr.f32.mxu0 0.0
        %540 = vmatmul.mubr.f32.gmra.mrb[0].mxu0 %v445
        %v541 = vpop.f32.mrb[0].mxu0
        %v542 = vadd.f32 %v436, %v541
        %v543 = vpop.f32.mrb[0].mxu0
        %v544 = vadd.f32 %v436, %v543
        %545 = vmatprep.mubr.f32.mxu0 0.0
        %546 = vmatmul.mubr.f32.gmra.mrb[0].mxu0 %v448
        %v547 = vpop.f32.mrb[0].mxu0
        %v548 = vadd.f32 %v441, %v547
        %v549 = vpop.f32.mrb[0].mxu0
        %v550 = vadd.f32 %v441, %v549
        %551 = vdwg.mxu0
        %552 = vmatprep.subr.mxu0 %v461
        %553 = vmatpush1.msra.mxu0 %v458
        %554 = vmatprep.subr.mxu0 0.0
        %555 = vmatpush1.msra.mxu0 0.0
        %556 = vmatprep.subr.mxu0 0.0
        %557 = vmatpush1.msra.mxu0 0.0
        %558 = vmatprep.subr.mxu0 0.0
        %559 = vmatpush1.msra.mxu0 0.0
        %560 = vmatprep.subr.mxu0 0.0
        %561 = vmatpush1.msra.mxu0 0.0
        %562 = vmatprep.subr.mxu0 0.0
        %563 = vmatpush1.msra.mxu0 0.0
        %564 = vmatprep.subr.mxu0 0.0
        %565 = vmatpush1.msra.mxu0 0.0
        %566 = vmatprep.subr.mxu0 0.0
        %567 = vmatpush1.msra.mxu0 0.0
        %568 = vmatprep.subr.mxu0 0.0
        %569 = vmatpush1.msra.mxu0 0.0
        %570 = vmatprep.subr.mxu0 0.0
        %571 = vmatpush1.msra.mxu0 0.0
        %572 = vmatprep.subr.mxu0 0.0
        %573 = vmatpush1.msra.mxu0 0.0
        %574 = vmatprep.subr.mxu0 0.0
        %575 = vmatpush1.msra.mxu0 0.0
        %576 = vmatprep.subr.mxu0 0.0
        %577 = vmatpush1.msra.mxu0 0.0
        %578 = vmatprep.subr.mxu0 0.0
        %579 = vmatpush1.msra.mxu0 0.0
        %580 = vmatprep.subr.mxu0 0.0
        %581 = vmatpush1.msra.mxu0 0.0
        %582 = vmatprep.subr.mxu0 0.0
        %583 = vmatpush1.msra.mxu0 0.0
        %584 = vmatprep.subr.mxu0 0.0
        %585 = vmatpush1.msra.mxu0 0.0
        %586 = vmatprep.subr.mxu0 0.0
        %587 = vmatpush1.msra.mxu0 0.0
        %588 = vmatprep.subr.mxu0 0.0
        %589 = vmatpush1.msra.mxu0 0.0
        %590 = vmatprep.subr.mxu0 0.0
        %591 = vmatpush1.msra.mxu0 0.0
        %592 = vmatprep.subr.mxu0 0.0
        %593 = vmatpush1.msra.mxu0 0.0
        %594 = vmatprep.subr.mxu0 0.0
        %595 = vmatpush1.msra.mxu0 0.0
        %596 = vmatprep.subr.mxu0 0.0
        %597 = vmatpush1.msra.mxu0 0.0
        %598 = vmatprep.subr.mxu0 0.0
        %599 = vmatpush1.msra.mxu0 0.0
        %600 = vmatprep.subr.mxu0 0.0
        %601 = vmatpush1.msra.mxu0 0.0
        %602 = vmatprep.subr.mxu0 0.0
        %603 = vmatpush1.msra.mxu0 0.0
        %604 = vmatprep.subr.mxu0 0.0
        %605 = vmatpush1.msra.mxu0 0.0
        %606 = vmatprep.subr.mxu0 0.0
        %607 = vmatpush1.msra.mxu0 0.0
        %608 = vmatprep.subr.mxu0 0.0
        %609 = vmatpush1.msra.mxu0 0.0
        %610 = vmatprep.subr.mxu0 0.0
        %611 = vmatpush1.msra.mxu0 0.0
        %612 = vmatprep.subr.mxu0 0.0
        %613 = vmatpush1.msra.mxu0 0.0
        %614 = vmatprep.subr.mxu0 0.0
        %615 = vmatpush1.msra.mxu0 0.0
        %616 = vmatprep.mubr.f32.mxu0 0.0
        %617 = vmatmul.mubr.f32.gmra.mrb[0].mxu0 %v445
        %v618 = vpop.f32.mrb[0].mxu0
        %v619 = vadd.f32 %v436, %v618
        %v620 = vpop.f32.mrb[0].mxu0
        %v621 = vadd.f32 %v436, %v620
        %622 = vmatprep.mubr.f32.mxu0 0.0
        %623 = vmatmul.mubr.f32.gmra.mrb[0].mxu0 %v448
        %v624 = vpop.f32.mrb[0].mxu0
        %v625 = vadd.f32 %v441, %v624
        %v626 = vpop.f32.mrb[0].mxu0
        %v627 = vadd.f32 %v441, %v626
        %628 = vdwg.mxu0
        %629 = vmatprep.subr.mxu0 %v467
        %630 = vmatpush1.msra.mxu0 %v464
        %631 = vmatprep.subr.mxu0 0.0
        %632 = vmatpush1.msra.mxu0 0.0
        %633 = vmatprep.subr.mxu0 0.0
        %634 = vmatpush1.msra.mxu0 0.0
        %635 = vmatprep.subr.mxu0 0.0
        %636 = vmatpush1.msra.mxu0 0.0
        %637 = vmatprep.subr.mxu0 0.0
        %638 = vmatpush1.msra.mxu0 0.0
        %639 = vmatprep.subr.mxu0 0.0
        %640 = vmatpush1.msra.mxu0 0.0
        %641 = vmatprep.subr.mxu0 0.0
        %642 = vmatpush1.msra.mxu0 0.0
        %643 = vmatprep.subr.mxu0 0.0
        %644 = vmatpush1.msra.mxu0 0.0
        %645 = vmatprep.subr.mxu0 0.0
        %646 = vmatpush1.msra.mxu0 0.0
        %647 = vmatprep.subr.mxu0 0.0
        %648 = vmatpush1.msra.mxu0 0.0
        %649 = vmatprep.subr.mxu0 0.0
        %650 = vmatpush1.msra.mxu0 0.0
        %651 = vmatprep.subr.mxu0 0.0
        %652 = vmatpush1.msra.mxu0 0.0
        %653 = vmatprep.subr.mxu0 0.0
        %654 = vmatpush1.msra.mxu0 0.0
        %655 = vmatprep.subr.mxu0 0.0
        %656 = vmatpush1.msra.mxu0 0.0
        %657 = vmatprep.subr.mxu0 0.0
        %658 = vmatpush1.msra.mxu0 0.0
        %659 = vmatprep.subr.mxu0 0.0
        %660 = vmatpush1.msra.mxu0 0.0
        %661 = vmatprep.subr.mxu0 0.0
        %662 = vmatpush1.msra.mxu0 0.0
        %663 = vmatprep.subr.mxu0 0.0
        %664 = vmatpush1.msra.mxu0 0.0
        %665 = vmatprep.subr.mxu0 0.0
        %666 = vmatpush1.msra.mxu0 0.0
        %667 = vmatprep.subr.mxu0 0.0
        %668 = vmatpush1.msra.mxu0 0.0
        %669 = vmatprep.subr.mxu0 0.0
        %670 = vmatpush1.msra.mxu0 0.0
        %671 = vmatprep.subr.mxu0 0.0
        %672 = vmatpush1.msra.mxu0 0.0
        %673 = vmatprep.subr.mxu0 0.0
        %674 = vmatpush1.msra.mxu0 0.0
        %675 = vmatprep.subr.mxu0 0.0
        %676 = vmatpush1.msra.mxu0 0.0
        %677 = vmatprep.subr.mxu0 0.0
        %678 = vmatpush1.msra.mxu0 0.0
        %679 = vmatprep.subr.mxu0 0.0
        %680 = vmatpush1.msra.mxu0 0.0
        %681 = vmatprep.subr.mxu0 0.0
        %682 = vmatpush1.msra.mxu0 0.0
        %683 = vmatprep.subr.mxu0 0.0
        %684 = vmatpush1.msra.mxu0 0.0
        %685 = vmatprep.subr.mxu0 0.0
        %686 = vmatpush1.msra.mxu0 0.0
        %687 = vmatprep.subr.mxu0 0.0
        %688 = vmatpush1.msra.mxu0 0.0
        %689 = vmatprep.subr.mxu0 0.0
        %690 = vmatpush1.msra.mxu0 0.0
        %691 = vmatprep.subr.mxu0 0.0
        %692 = vmatpush1.msra.mxu0 0.0
        %693 = vmatprep.mubr.f32.mxu0 0.0
        %694 = vmatmul.mubr.f32.gmra.mrb[0].mxu0 %v445
        %v695 = vpop.f32.mrb[0].mxu0
        %v696 = vadd.f32 %v436, %v695
        %v697 = vpop.f32.mrb[0].mxu0
        %v698 = vadd.f32 %v436, %v697
        %699 = vmatprep.mubr.f32.mxu0 0.0
        %700 = vmatmul.mubr.f32.gmra.mrb[0].mxu0 %v448
        %v701 = vpop.f32.mrb[0].mxu0
        %v702 = vadd.f32 %v441, %v701
        %v703 = vpop.f32.mrb[0].mxu0
        %v704 = vadd.f32 %v441, %v703
        %705 = vdwg.mxu0
        %706 = vmatprep.subr.mxu0 %v473
        %707 = vmatpush1.msra.mxu0 %v470
        %708 = vmatprep.subr.mxu0 0.0
        %709 = vmatpush1.msra.mxu0 0.0
        %710 = vmatprep.subr.mxu0 0.0
        %711 = vmatpush1.msra.mxu0 0.0
        %712 = vmatprep.subr.mxu0 0.0
        %713 = vmatpush1.msra.mxu0 0.0
        %714 = vmatprep.subr.mxu0 0.0
        %715 = vmatpush1.msra.mxu0 0.0
        %716 = vmatprep.subr.mxu0 0.0
        %717 = vmatpush1.msra.mxu0 0.0
        %718 = vmatprep.subr.mxu0 0.0
        %719 = vmatpush1.msra.mxu0 0.0
        %720 = vmatprep.subr.mxu0 0.0
        %721 = vmatpush1.msra.mxu0 0.0
        %722 = vmatprep.subr.mxu0 0.0
        %723 = vmatpush1.msra.mxu0 0.0
        %724 = vmatprep.subr.mxu0 0.0
        %725 = vmatpush1.msra.mxu0 0.0
        %726 = vmatprep.subr.mxu0 0.0
        %727 = vmatpush1.msra.mxu0 0.0
        %728 = vmatprep.subr.mxu0 0.0
        %729 = vmatpush1.msra.mxu0 0.0
        %730 = vmatprep.subr.mxu0 0.0
        %731 = vmatpush1.msra.mxu0 0.0
        %732 = vmatprep.subr.mxu0 0.0
        %733 = vmatpush1.msra.mxu0 0.0
        %734 = vmatprep.subr.mxu0 0.0
        %735 = vmatpush1.msra.mxu0 0.0
        %736 = vmatprep.subr.mxu0 0.0
        %737 = vmatpush1.msra.mxu0 0.0
        %738 = vmatprep.subr.mxu0 0.0
        %739 = vmatpush1.msra.mxu0 0.0
        %740 = vmatprep.subr.mxu0 0.0
        %741 = vmatpush1.msra.mxu0 0.0
        %742 = vmatprep.subr.mxu0 0.0
        %743 = vmatpush1.msra.mxu0 0.0
        %744 = vmatprep.subr.mxu0 0.0
        %745 = vmatpush1.msra.mxu0 0.0
        %746 = vmatprep.subr.mxu0 0.0
        %747 = vmatpush1.msra.mxu0 0.0
        %748 = vmatprep.subr.mxu0 0.0
        %749 = vmatpush1.msra.mxu0 0.0
        %750 = vmatprep.subr.mxu0 0.0
        %751 = vmatpush1.msra.mxu0 0.0
        %752 = vmatprep.subr.mxu0 0.0
        %753 = vmatpush1.msra.mxu0 0.0
        %754 = vmatprep.subr.mxu0 0.0
        %755 = vmatpush1.msra.mxu0 0.0
        %756 = vmatprep.subr.mxu0 0.0
        %757 = vmatpush1.msra.mxu0 0.0
        %758 = vmatprep.subr.mxu0 0.0
        %759 = vmatpush1.msra.mxu0 0.0
        %760 = vmatprep.subr.mxu0 0.0
        %761 = vmatpush1.msra.mxu0 0.0
        %762 = vmatprep.subr.mxu0 0.0
        %763 = vmatpush1.msra.mxu0 0.0
        %764 = vmatprep.subr.mxu0 0.0
        %765 = vmatpush1.msra.mxu0 0.0
        %766 = vmatprep.subr.mxu0 0.0
        %767 = vmatpush1.msra.mxu0 0.0
        %768 = vmatprep.subr.mxu0 0.0
        %769 = vmatpush1.msra.mxu0 0.0
        %770 = vmatprep.mubr.f32.mxu0 0.0
        %771 = vmatmul.mubr.f32.gmra.mrb[0].mxu0 %v445
        %v772 = vpop.f32.mrb[0].mxu0
        %v773 = vadd.f32 %v436, %v772
        %v774 = vpop.f32.mrb[0].mxu0
        %v775 = vadd.f32 %v436, %v774
        %776 = vmatprep.mubr.f32.mxu0 0.0
        %777 = vmatmul.mubr.f32.gmra.mrb[0].mxu0 %v448
        %v778 = vpop.f32.mrb[0].mxu0
        %v779 = vadd.f32 %v441, %v778
        %v780 = vpop.f32.mrb[0].mxu0
        %v781 = vadd.f32 %v441, %v780
        %782 = vdwg.mxu0
        %v783 = vmax.f32 %v542, 0.0
        %v784 = vmax.f32 %v544, 0.0
        %v785 = vmax.f32 %v619, 0.0
        %v786 = vmax.f32 %v621, 0.0
        %v787 = vmax.f32 %v696, 0.0
        %v788 = vmax.f32 %v698, 0.0
        %v789 = vmax.f32 %v773, 0.0
        %v790 = vmax.f32 %v775, 0.0
        %v791 = vmax.f32 %v548, 0.0
        %v792 = vmax.f32 %v550, 0.0
        %v793 = vmax.f32 %v625, 0.0
        %v794 = vmax.f32 %v627, 0.0
        %v795 = vmax.f32 %v702, 0.0
        %v796 = vmax.f32 %v704, 0.0
        %v797 = vmax.f32 %v779, 0.0
        %v798 = vmax.f32 %v781, 0.0
        %799 = vrot.lane.b32.xlu0 %v783, 127
        %v800 = vpop.permute.xlu0 %799
        %801 = vrot.lane.b32.xlu0 %v791, 127
        %v802 = vpop.permute.xlu0 %801
        %803 = vrot.lane.b32.xlu0 %v784, 127
        %v804 = vpop.permute.xlu0 %803
        %805 = vrot.lane.b32.xlu0 %v792, 127
        %v806 = vpop.permute.xlu0 %805
        %807 = vrot.lane.b32.xlu0 %v785, 127
        %v808 = vpop.permute.xlu0 %807
        %809 = vrot.lane.b32.xlu0 %v793, 127
        %v810 = vpop.permute.xlu0 %809
        %811 = vrot.lane.b32.xlu0 %v786, 127
        %v812 = vpop.permute.xlu0 %811
        %813 = vrot.lane.b32.xlu0 %v794, 127
        %v814 = vpop.permute.xlu0 %813
        %815 = vrot.lane.b32.xlu0 %v787, 127
        %v816 = vpop.permute.xlu0 %815
        %817 = vrot.lane.b32.xlu0 %v795, 127
        %v818 = vpop.permute.xlu0 %817
        %819 = vrot.lane.b32.xlu0 %v788, 127
        %v820 = vpop.permute.xlu0 %819
        %821 = vrot.lane.b32.xlu0 %v796, 127
        %v822 = vpop.permute.xlu0 %821
        %823 = vrot.lane.b32.xlu0 %v789, 127
        %v824 = vpop.permute.xlu0 %823
        %825 = vrot.lane.b32.xlu0 %v797, 127
        %v826 = vpop.permute.xlu0 %825
        %827 = vrot.lane.b32.xlu0 %v790, 127
        %v828 = vpop.permute.xlu0 %827
        %829 = vrot.lane.b32.xlu0 %v798, 127
        %v830 = vpop.permute.xlu0 %829
        %v831 = vsel %vm370, %v824, %v828
        %v832 = vsel %vm370, %v826, %v830
        %v833 = vsel %vm370, %v820, %v824
        %v834 = vsel %vm370, %v822, %v826
        %v835 = vsel %vm370, %v816, %v820
        %v836 = vsel %vm370, %v818, %v822
        %v837 = vsel %vm370, %v812, %v816
        %v838 = vsel %vm370, %v814, %v818
        %v839 = vsel %vm370, %v808, %v812
        %v840 = vsel %vm370, %v810, %v814
        %v841 = vsel %vm370, %v804, %v808
        %v842 = vsel %vm370, %v806, %v810
        %v843 = vsel %vm370, %v800, %v804
        %v844 = vsel %vm370, %v802, %v806
        %v845 = vsel %vm370, %v828, %v800
        %v846 = vsel %vm370, %v830, %v802
        %v847 = vmax.f32 %v783, %v843
        %v848 = vmax.f32 %v784, %v841
        %v849 = vmax.f32 %v785, %v839
        %v850 = vmax.f32 %v786, %v837
        %v851 = vmax.f32 %v787, %v835
        %v852 = vmax.f32 %v788, %v833
        %v853 = vmax.f32 %v789, %v831
        %v854 = vmax.f32 %v790, %v845
        %v855 = vmax.f32 %v791, %v844
        %v856 = vmax.f32 %v792, %v842
        %v857 = vmax.f32 %v793, %v840
        %v858 = vmax.f32 %v794, %v838
        %v859 = vmax.f32 %v795, %v836
        %v860 = vmax.f32 %v796, %v834
        %v861 = vmax.f32 %v797, %v832
        %v862 = vmax.f32 %v798, %v846
        %863 = vrot.lane.b32.xlu0 %v847, 2
        %v864 = vpop.permute.xlu0 %863
        %865 = vrot.lane.b32.xlu0 %v855, 2
        %v866 = vpop.permute.xlu0 %865
        %867 = vrot.lane.b32.xlu0 %v848, 2
        %v868 = vpop.permute.xlu0 %867
        %869 = vrot.lane.b32.xlu0 %v856, 2
        %v870 = vpop.permute.xlu0 %869
        %871 = vrot.lane.b32.xlu0 %v849, 2
        %v872 = vpop.permute.xlu0 %871
        %873 = vrot.lane.b32.xlu0 %v857, 2
        %v874 = vpop.permute.xlu0 %873
        %875 = vrot.lane.b32.xlu0 %v850, 2
        %v876 = vpop.permute.xlu0 %875
        %877 = vrot.lane.b32.xlu0 %v858, 2
        %v878 = vpop.permute.xlu0 %877
        %879 = vrot.lane.b32.xlu0 %v851, 2
        %v880 = vpop.permute.xlu0 %879
        %881 = vrot.lane.b32.xlu0 %v859, 2
        %v882 = vpop.permute.xlu0 %881
        %883 = vrot.lane.b32.xlu0 %v852, 2
        %v884 = vpop.permute.xlu0 %883
        %885 = vrot.lane.b32.xlu0 %v860, 2
        %v886 = vpop.permute.xlu0 %885
        %887 = vrot.lane.b32.xlu0 %v853, 2
        %v888 = vpop.permute.xlu0 %887
        %889 = vrot.lane.b32.xlu0 %v861, 2
        %v890 = vpop.permute.xlu0 %889
        %891 = vrot.lane.b32.xlu0 %v854, 2
        %v892 = vpop.permute.xlu0 %891
        %893 = vrot.lane.b32.xlu0 %v862, 2
        %v894 = vpop.permute.xlu0 %893
        %vm895 = vcmp.lt.s32.totalorder %v168, 2
        %v896 = vsel %vm895, %v888, %v892
        %v897 = vsel %vm895, %v890, %v894
        %v898 = vsel %vm895, %v884, %v888
        %v899 = vsel %vm895, %v886, %v890
        %v900 = vsel %vm895, %v880, %v884
        %v901 = vsel %vm895, %v882, %v886
        %v902 = vsel %vm895, %v876, %v880
        %v903 = vsel %vm895, %v878, %v882
        %v904 = vsel %vm895, %v872, %v876
        %v905 = vsel %vm895, %v874, %v878
        %v906 = vsel %vm895, %v868, %v872
        %v907 = vsel %vm895, %v870, %v874
        %v908 = vsel %vm895, %v864, %v868
        %v909 = vsel %vm895, %v866, %v870
        %v910 = vsel %vm895, %v892, %v864
        %v911 = vsel %vm895, %v894, %v866
        %v912 = vsel %vm192, 1, 0
        %v913 = vsel %vm193, 1, 0
        %v914 = vsel %vm194, 1, 0
        %v915 = vsel %vm195, 1, 0
        %v916 = vsel %vm196, 1, 0
        %v917 = vsel %vm197, 1, 0
        %v918 = vsel %vm198, 1, 0
        %v919 = vsel %vm199, 1, 0
        %vm920 = vcmp.eq.s32.totalorder %v912, 1
        %vm921 = vcmp.eq.s32.totalorder %v913, 1
        %vm922 = vcmp.eq.s32.totalorder %v914, 1
        %vm923 = vcmp.eq.s32.totalorder %v915, 1
        %vm924 = vcmp.eq.s32.totalorder %v916, 1
        %vm925 = vcmp.eq.s32.totalorder %v917, 1
        %vm926 = vcmp.eq.s32.totalorder %v918, 1
        %vm927 = vcmp.eq.s32.totalorder %v919, 1
        %v928 = vsel %vm920, %v910, 0.0
        %v929 = vsel %vm921, %v908, 0.0
        %v930 = vsel %vm922, %v906, 0.0
        %v931 = vsel %vm923, %v904, 0.0
        %v932 = vsel %vm924, %v902, 0.0
        %v933 = vsel %vm925, %v900, 0.0
        %v934 = vsel %vm926, %v898, 0.0
        %v935 = vsel %vm927, %v896, 0.0
        %v936 = vsel %vm920, %v911, 0.0
        %v937 = vsel %vm921, %v909, 0.0
        %v938 = vsel %vm922, %v907, 0.0
        %v939 = vsel %vm923, %v905, 0.0
        %v940 = vsel %vm924, %v903, 0.0
        %v941 = vsel %vm925, %v901, 0.0
        %v942 = vsel %vm926, %v899, 0.0
        %v943 = vsel %vm927, %v897, 0.0
        %944 = vrot.lane.b32.xlu0 %v847, 126
        %v945 = vpop.permute.xlu0 %944
        %946 = vrot.lane.b32.xlu0 %v855, 126
        %v947 = vpop.permute.xlu0 %946
        %948 = vrot.lane.b32.xlu0 %v848, 126
        %v949 = vpop.permute.xlu0 %948
        %950 = vrot.lane.b32.xlu0 %v856, 126
        %v951 = vpop.permute.xlu0 %950
        %952 = vrot.lane.b32.xlu0 %v849, 126
        %v953 = vpop.permute.xlu0 %952
        %954 = vrot.lane.b32.xlu0 %v857, 126
        %v955 = vpop.permute.xlu0 %954
        %956 = vrot.lane.b32.xlu0 %v850, 126
        %v957 = vpop.permute.xlu0 %956
        %958 = vrot.lane.b32.xlu0 %v858, 126
        %v959 = vpop.permute.xlu0 %958
        %960 = vrot.lane.b32.xlu0 %v851, 126
        %v961 = vpop.permute.xlu0 %960
        %962 = vrot.lane.b32.xlu0 %v859, 126
        %v963 = vpop.permute.xlu0 %962
        %964 = vrot.lane.b32.xlu0 %v852, 126
        %v965 = vpop.permute.xlu0 %964
        %966 = vrot.lane.b32.xlu0 %v860, 126
        %v967 = vpop.permute.xlu0 %966
        %968 = vrot.lane.b32.xlu0 %v853, 126
        %v969 = vpop.permute.xlu0 %968
        %970 = vrot.lane.b32.xlu0 %v861, 126
        %v971 = vpop.permute.xlu0 %970
        %972 = vrot.lane.b32.xlu0 %v854, 126
        %v973 = vpop.permute.xlu0 %972
        %974 = vrot.lane.b32.xlu0 %v862, 126
        %v975 = vpop.permute.xlu0 %974
        %vm976 = vcmp.lt.s32.totalorder %v168, 126
        %v977 = vsel %vm976, %v969, %v973
        %v978 = vsel %vm976, %v971, %v975
        %v979 = vsel %vm976, %v965, %v969
        %v980 = vsel %vm976, %v967, %v971
        %v981 = vsel %vm976, %v961, %v965
        %v982 = vsel %vm976, %v963, %v967
        %v983 = vsel %vm976, %v957, %v961
        %v984 = vsel %vm976, %v959, %v963
        %v985 = vsel %vm976, %v953, %v957
        %v986 = vsel %vm976, %v955, %v959
        %v987 = vsel %vm976, %v949, %v953
        %v988 = vsel %vm976, %v951, %v955
        %v989 = vsel %vm976, %v945, %v949
        %v990 = vsel %vm976, %v947, %v951
        %v991 = vsel %vm976, %v973, %v945
        %v992 = vsel %vm976, %v975, %v947
        %v993 = vsel %vm216, 1, 0
        %v994 = vsel %vm217, 1, 0
        %v995 = vsel %vm218, 1, 0
        %v996 = vsel %vm219, 1, 0
        %v997 = vsel %vm220, 1, 0
        %v998 = vsel %vm221, 1, 0
        %v999 = vsel %vm222, 1, 0
        %v1000 = vsel %vm223, 1, 0
        %vm1001 = vcmp.eq.s32.totalorder %v993, 1
        %vm1002 = vcmp.eq.s32.totalorder %v994, 1
        %vm1003 = vcmp.eq.s32.totalorder %v995, 1
        %vm1004 = vcmp.eq.s32.totalorder %v996, 1
        %vm1005 = vcmp.eq.s32.totalorder %v997, 1
        %vm1006 = vcmp.eq.s32.totalorder %v998, 1
        %vm1007 = vcmp.eq.s32.totalorder %v999, 1
        %vm1008 = vcmp.eq.s32.totalorder %v1000, 1
        %v1009 = vsel %vm1001, %v989, 0.0
        %v1010 = vsel %vm1002, %v987, 0.0
        %v1011 = vsel %vm1003, %v985, 0.0
        %v1012 = vsel %vm1004, %v983, 0.0
        %v1013 = vsel %vm1005, %v981, 0.0
        %v1014 = vsel %vm1006, %v979, 0.0
        %v1015 = vsel %vm1007, %v977, 0.0
        %v1016 = vsel %vm1008, %v991, 0.0
        %v1017 = vsel %vm1001, %v990, 0.0
        %v1018 = vsel %vm1002, %v988, 0.0
        %v1019 = vsel %vm1003, %v986, 0.0
        %v1020 = vsel %vm1004, %v984, 0.0
        %v1021 = vsel %vm1005, %v982, 0.0
        %v1022 = vsel %vm1006, %v980, 0.0
        %v1023 = vsel %vm1007, %v978, 0.0
        %v1024 = vsel %vm1008, %v992, 0.0
        %s1025 = scalar_lea.vmem %s1, 16
        %v1026 = vld [vmem:[%s1025] sm:$0xff]
        %s1027 = scalar_lea.vmem %s2, 16
        %v1028 = vld [vmem:[%s1027] sm:$0xff]
        %1030 = vset.pattern.permute.xlu0 0
        %1031 = vperm.xlu0 %1030, %v1028
        %v1032 = vpop.permute.xlu0 %1031
        %vm1034 = vcmask 392192
        %v1036 = vsel %vm1034, %v1026, 0
        %1038 = vmatprep.subr.mxu0 %v929
        %1039 = vmatpush1.msra.mxu0 %v928
        %1040 = vmatprep.subr.mxu0 %v937
        %1041 = vmatpush1.msra.mxu0 %v936
        %1042 = vmatprep.subr.mxu0 %v848
        %1043 = vmatpush1.msra.mxu0 %v847
        %1044 = vmatprep.subr.mxu0 %v856
        %1045 = vmatpush1.msra.mxu0 %v855
        %1046 = vmatprep.subr.mxu0 %v1010
        %1047 = vmatpush1.msra.mxu0 %v1009
        %1048 = vmatprep.subr.mxu0 %v1018
        %1049 = vmatpush1.msra.mxu0 %v1017
        %1050 = vmatprep.subr.mxu0 0.0
        %1051 = vmatpush1.msra.mxu0 0.0
        %1052 = vmatprep.subr.mxu0 0.0
        %1053 = vmatpush1.msra.mxu0 0.0
        %1054 = vmatprep.subr.mxu0 0.0
        %1055 = vmatpush1.msra.mxu0 0.0
        %1056 = vmatprep.subr.mxu0 0.0
        %1057 = vmatpush1.msra.mxu0 0.0
        %1058 = vmatprep.subr.mxu0 0.0
        %1059 = vmatpush1.msra.mxu0 0.0
        %1060 = vmatprep.subr.mxu0 0.0
        %1061 = vmatpush1.msra.mxu0 0.0
        %1062 = vmatprep.subr.mxu0 0.0
        %1063 = vmatpush1.msra.mxu0 0.0
        %1064 = vmatprep.subr.mxu0 0.0
        %1065 = vmatpush1.msra.mxu0 0.0
        %1066 = vmatprep.subr.mxu0 0.0
        %1067 = vmatpush1.msra.mxu0 0.0
        %1068 = vmatprep.subr.mxu0 0.0
        %1069 = vmatpush1.msra.mxu0 0.0
        %1070 = vmatprep.subr.mxu0 0.0
        %1071 = vmatpush1.msra.mxu0 0.0
        %1072 = vmatprep.subr.mxu0 0.0
        %1073 = vmatpush1.msra.mxu0 0.0
        %1074 = vmatprep.subr.mxu0 0.0
        %1075 = vmatpush1.msra.mxu0 0.0
        %1076 = vmatprep.subr.mxu0 0.0
        %1077 = vmatpush1.msra.mxu0 0.0
        %1078 = vmatprep.subr.mxu0 0.0
        %1079 = vmatpush1.msra.mxu0 0.0
        %1080 = vmatprep.subr.mxu0 0.0
        %1081 = vmatpush1.msra.mxu0 0.0
        %1082 = vmatprep.subr.mxu0 0.0
        %1083 = vmatpush1.msra.mxu0 0.0
        %1084 = vmatprep.subr.mxu0 0.0
        %1085 = vmatpush1.msra.mxu0 0.0
        %1086 = vmatprep.subr.mxu0 0.0
        %1087 = vmatpush1.msra.mxu0 0.0
        %1088 = vmatprep.subr.mxu0 0.0
        %1089 = vmatpush1.msra.mxu0 0.0
        %1090 = vmatprep.subr.mxu0 0.0
        %1091 = vmatpush1.msra.mxu0 0.0
        %1092 = vmatprep.subr.mxu0 0.0
        %1093 = vmatpush1.msra.mxu0 0.0
        %1094 = vmatprep.subr.mxu0 0.0
        %1095 = vmatpush1.msra.mxu0 0.0
        %1096 = vmatprep.subr.mxu0 0.0
        %1097 = vmatpush1.msra.mxu0 0.0
        %1098 = vmatprep.subr.mxu0 0.0
        %1099 = vmatpush1.msra.mxu0 0.0
        %1100 = vmatprep.subr.mxu0 0.0
        %1101 = vmatpush1.msra.mxu0 0.0
        %1102 = vmatprep.mubr.f32.mxu0 0.0
        %1103 = vmatmul.mubr.f32.gmra.mrb[0].mxu0 %v1036
        %v1104 = vpop.f32.mrb[0].mxu0
        %v1105 = vadd.f32 %v1032, %v1104
        %v1106 = vpop.f32.mrb[0].mxu0
        %v1107 = vadd.f32 %v1032, %v1106
        %1108 = vdwg.mxu0
        %1109 = vmatprep.subr.mxu0 %v931
        %1110 = vmatpush1.msra.mxu0 %v930
        %1111 = vmatprep.subr.mxu0 %v939
        %1112 = vmatpush1.msra.mxu0 %v938
        %1113 = vmatprep.subr.mxu0 %v850
        %1114 = vmatpush1.msra.mxu0 %v849
        %1115 = vmatprep.subr.mxu0 %v858
        %1116 = vmatpush1.msra.mxu0 %v857
        %1117 = vmatprep.subr.mxu0 %v1012
        %1118 = vmatpush1.msra.mxu0 %v1011
        %1119 = vmatprep.subr.mxu0 %v1020
        %1120 = vmatpush1.msra.mxu0 %v1019
        %1121 = vmatprep.subr.mxu0 0.0
        %1122 = vmatpush1.msra.mxu0 0.0
        %1123 = vmatprep.subr.mxu0 0.0
        %1124 = vmatpush1.msra.mxu0 0.0
        %1125 = vmatprep.subr.mxu0 0.0
        %1126 = vmatpush1.msra.mxu0 0.0
        %1127 = vmatprep.subr.mxu0 0.0
        %1128 = vmatpush1.msra.mxu0 0.0
        %1129 = vmatprep.subr.mxu0 0.0
        %1130 = vmatpush1.msra.mxu0 0.0
        %1131 = vmatprep.subr.mxu0 0.0
        %1132 = vmatpush1.msra.mxu0 0.0
        %1133 = vmatprep.subr.mxu0 0.0
        %1134 = vmatpush1.msra.mxu0 0.0
        %1135 = vmatprep.subr.mxu0 0.0
        %1136 = vmatpush1.msra.mxu0 0.0
        %1137 = vmatprep.subr.mxu0 0.0
        %1138 = vmatpush1.msra.mxu0 0.0
        %1139 = vmatprep.subr.mxu0 0.0
        %1140 = vmatpush1.msra.mxu0 0.0
        %1141 = vmatprep.subr.mxu0 0.0
        %1142 = vmatpush1.msra.mxu0 0.0
        %1143 = vmatprep.subr.mxu0 0.0
        %1144 = vmatpush1.msra.mxu0 0.0
        %1145 = vmatprep.subr.mxu0 0.0
        %1146 = vmatpush1.msra.mxu0 0.0
        %1147 = vmatprep.subr.mxu0 0.0
        %1148 = vmatpush1.msra.mxu0 0.0
        %1149 = vmatprep.subr.mxu0 0.0
        %1150 = vmatpush1.msra.mxu0 0.0
        %1151 = vmatprep.subr.mxu0 0.0
        %1152 = vmatpush1.msra.mxu0 0.0
        %1153 = vmatprep.subr.mxu0 0.0
        %1154 = vmatpush1.msra.mxu0 0.0
        %1155 = vmatprep.subr.mxu0 0.0
        %1156 = vmatpush1.msra.mxu0 0.0
        %1157 = vmatprep.subr.mxu0 0.0
        %1158 = vmatpush1.msra.mxu0 0.0
        %1159 = vmatprep.subr.mxu0 0.0
        %1160 = vmatpush1.msra.mxu0 0.0
        %1161 = vmatprep.subr.mxu0 0.0
        %1162 = vmatpush1.msra.mxu0 0.0
        %1163 = vmatprep.subr.mxu0 0.0
        %1164 = vmatpush1.msra.mxu0 0.0
        %1165 = vmatprep.subr.mxu0 0.0
        %1166 = vmatpush1.msra.mxu0 0.0
        %1167 = vmatprep.subr.mxu0 0.0
        %1168 = vmatpush1.msra.mxu0 0.0
        %1169 = vmatprep.subr.mxu0 0.0
        %1170 = vmatpush1.msra.mxu0 0.0
        %1171 = vmatprep.subr.mxu0 0.0
        %1172 = vmatpush1.msra.mxu0 0.0
        %1173 = vmatprep.mubr.f32.mxu0 0.0
        %1174 = vmatmul.mubr.f32.gmra.mrb[0].mxu0 %v1036
        %v1175 = vpop.f32.mrb[0].mxu0
        %v1176 = vadd.f32 %v1032, %v1175
        %v1177 = vpop.f32.mrb[0].mxu0
        %v1178 = vadd.f32 %v1032, %v1177
        %1179 = vdwg.mxu0
        %1180 = vmatprep.subr.mxu0 %v933
        %1181 = vmatpush1.msra.mxu0 %v932
        %1182 = vmatprep.subr.mxu0 %v941
        %1183 = vmatpush1.msra.mxu0 %v940
        %1184 = vmatprep.subr.mxu0 %v852
        %1185 = vmatpush1.msra.mxu0 %v851
        %1186 = vmatprep.subr.mxu0 %v860
        %1187 = vmatpush1.msra.mxu0 %v859
        %1188 = vmatprep.subr.mxu0 %v1014
        %1189 = vmatpush1.msra.mxu0 %v1013
        %1190 = vmatprep.subr.mxu0 %v1022
        %1191 = vmatpush1.msra.mxu0 %v1021
        %1192 = vmatprep.subr.mxu0 0.0
        %1193 = vmatpush1.msra.mxu0 0.0
        %1194 = vmatprep.subr.mxu0 0.0
        %1195 = vmatpush1.msra.mxu0 0.0
        %1196 = vmatprep.subr.mxu0 0.0
        %1197 = vmatpush1.msra.mxu0 0.0
        %1198 = vmatprep.subr.mxu0 0.0
        %1199 = vmatpush1.msra.mxu0 0.0
        %1200 = vmatprep.subr.mxu0 0.0
        %1201 = vmatpush1.msra.mxu0 0.0
        %1202 = vmatprep.subr.mxu0 0.0
        %1203 = vmatpush1.msra.mxu0 0.0
        %1204 = vmatprep.subr.mxu0 0.0
        %1205 = vmatpush1.msra.mxu0 0.0
        %1206 = vmatprep.subr.mxu0 0.0
        %1207 = vmatpush1.msra.mxu0 0.0
        %1208 = vmatprep.subr.mxu0 0.0
        %1209 = vmatpush1.msra.mxu0 0.0
        %1210 = vmatprep.subr.mxu0 0.0
        %1211 = vmatpush1.msra.mxu0 0.0
        %1212 = vmatprep.subr.mxu0 0.0
        %1213 = vmatpush1.msra.mxu0 0.0
        %1214 = vmatprep.subr.mxu0 0.0
        %1215 = vmatpush1.msra.mxu0 0.0
        %1216 = vmatprep.subr.mxu0 0.0
        %1217 = vmatpush1.msra.mxu0 0.0
        %1218 = vmatprep.subr.mxu0 0.0
        %1219 = vmatpush1.msra.mxu0 0.0
        %1220 = vmatprep.subr.mxu0 0.0
        %1221 = vmatpush1.msra.mxu0 0.0
        %1222 = vmatprep.subr.mxu0 0.0
        %1223 = vmatpush1.msra.mxu0 0.0
        %1224 = vmatprep.subr.mxu0 0.0
        %1225 = vmatpush1.msra.mxu0 0.0
        %1226 = vmatprep.subr.mxu0 0.0
        %1227 = vmatpush1.msra.mxu0 0.0
        %1228 = vmatprep.subr.mxu0 0.0
        %1229 = vmatpush1.msra.mxu0 0.0
        %1230 = vmatprep.subr.mxu0 0.0
        %1231 = vmatpush1.msra.mxu0 0.0
        %1232 = vmatprep.subr.mxu0 0.0
        %1233 = vmatpush1.msra.mxu0 0.0
        %1234 = vmatprep.subr.mxu0 0.0
        %1235 = vmatpush1.msra.mxu0 0.0
        %1236 = vmatprep.subr.mxu0 0.0
        %1237 = vmatpush1.msra.mxu0 0.0
        %1238 = vmatprep.subr.mxu0 0.0
        %1239 = vmatpush1.msra.mxu0 0.0
        %1240 = vmatprep.subr.mxu0 0.0
        %1241 = vmatpush1.msra.mxu0 0.0
        %1242 = vmatprep.subr.mxu0 0.0
        %1243 = vmatpush1.msra.mxu0 0.0
        %1244 = vmatprep.mubr.f32.mxu0 0.0
        %1245 = vmatmul.mubr.f32.gmra.mrb[0].mxu0 %v1036
        %v1246 = vpop.f32.mrb[0].mxu0
        %v1247 = vadd.f32 %v1032, %v1246
        %v1248 = vpop.f32.mrb[0].mxu0
        %v1249 = vadd.f32 %v1032, %v1248
        %1250 = vdwg.mxu0
        %1251 = vmatprep.subr.mxu0 %v935
        %1252 = vmatpush1.msra.mxu0 %v934
        %1253 = vmatprep.subr.mxu0 %v943
        %1254 = vmatpush1.msra.mxu0 %v942
        %1255 = vmatprep.subr.mxu0 %v854
        %1256 = vmatpush1.msra.mxu0 %v853
        %1257 = vmatprep.subr.mxu0 %v862
        %1258 = vmatpush1.msra.mxu0 %v861
        %1259 = vmatprep.subr.mxu0 %v1016
        %1260 = vmatpush1.msra.mxu0 %v1015
        %1261 = vmatprep.subr.mxu0 %v1024
        %1262 = vmatpush1.msra.mxu0 %v1023
        %1263 = vmatprep.subr.mxu0 0.0
        %1264 = vmatpush1.msra.mxu0 0.0
        %1265 = vmatprep.subr.mxu0 0.0
        %1266 = vmatpush1.msra.mxu0 0.0
        %1267 = vmatprep.subr.mxu0 0.0
        %1268 = vmatpush1.msra.mxu0 0.0
        %1269 = vmatprep.subr.mxu0 0.0
        %1270 = vmatpush1.msra.mxu0 0.0
        %1271 = vmatprep.subr.mxu0 0.0
        %1272 = vmatpush1.msra.mxu0 0.0
        %1273 = vmatprep.subr.mxu0 0.0
        %1274 = vmatpush1.msra.mxu0 0.0
        %1275 = vmatprep.subr.mxu0 0.0
        %1276 = vmatpush1.msra.mxu0 0.0
        %1277 = vmatprep.subr.mxu0 0.0
        %1278 = vmatpush1.msra.mxu0 0.0
        %1279 = vmatprep.subr.mxu0 0.0
        %1280 = vmatpush1.msra.mxu0 0.0
        %1281 = vmatprep.subr.mxu0 0.0
        %1282 = vmatpush1.msra.mxu0 0.0
        %1283 = vmatprep.subr.mxu0 0.0
        %1284 = vmatpush1.msra.mxu0 0.0
        %1285 = vmatprep.subr.mxu0 0.0
        %1286 = vmatpush1.msra.mxu0 0.0
        %1287 = vmatprep.subr.mxu0 0.0
        %1288 = vmatpush1.msra.mxu0 0.0
        %1289 = vmatprep.subr.mxu0 0.0
        %1290 = vmatpush1.msra.mxu0 0.0
        %1291 = vmatprep.subr.mxu0 0.0
        %1292 = vmatpush1.msra.mxu0 0.0
        %1293 = vmatprep.subr.mxu0 0.0
        %1294 = vmatpush1.msra.mxu0 0.0
        %1295 = vmatprep.subr.mxu0 0.0
        %1296 = vmatpush1.msra.mxu0 0.0
        %1297 = vmatprep.subr.mxu0 0.0
        %1298 = vmatpush1.msra.mxu0 0.0
        %1299 = vmatprep.subr.mxu0 0.0
        %1300 = vmatpush1.msra.mxu0 0.0
        %1301 = vmatprep.subr.mxu0 0.0
        %1302 = vmatpush1.msra.mxu0 0.0
        %1303 = vmatprep.subr.mxu0 0.0
        %1304 = vmatpush1.msra.mxu0 0.0
        %1305 = vmatprep.subr.mxu0 0.0
        %1306 = vmatpush1.msra.mxu0 0.0
        %1307 = vmatprep.subr.mxu0 0.0
        %1308 = vmatpush1.msra.mxu0 0.0
        %1309 = vmatprep.subr.mxu0 0.0
        %1310 = vmatpush1.msra.mxu0 0.0
        %1311 = vmatprep.subr.mxu0 0.0
        %1312 = vmatpush1.msra.mxu0 0.0
        %1313 = vmatprep.subr.mxu0 0.0
        %1314 = vmatpush1.msra.mxu0 0.0
        %1315 = vmatprep.mubr.f32.mxu0 0.0
        %1316 = vmatmul.mubr.f32.gmra.mrb[0].mxu0 %v1036
        %v1317 = vpop.f32.mrb[0].mxu0
        %v1318 = vadd.f32 %v1032, %v1317
        %v1319 = vpop.f32.mrb[0].mxu0
        %v1320 = vadd.f32 %v1032, %v1319
        %1321 = vdwg.mxu0
        %v1322 = vmax.f32 %v1105, 0.0
        %v1323 = vmax.f32 %v1107, 0.0
        %v1324 = vmax.f32 %v1176, 0.0
        %v1325 = vmax.f32 %v1178, 0.0
        %v1326 = vmax.f32 %v1247, 0.0
        %v1327 = vmax.f32 %v1249, 0.0
        %v1328 = vmax.f32 %v1318, 0.0
        %v1329 = vmax.f32 %v1320, 0.0
        %1330 = vrot.lane.b32.xlu0 %v1322, 126
        %v1331 = vpop.permute.xlu0 %1330
        %1332 = vrot.lane.b32.xlu0 %v1323, 126
        %v1333 = vpop.permute.xlu0 %1332
        %1334 = vrot.lane.b32.xlu0 %v1324, 126
        %v1335 = vpop.permute.xlu0 %1334
        %1336 = vrot.lane.b32.xlu0 %v1325, 126
        %v1337 = vpop.permute.xlu0 %1336
        %1338 = vrot.lane.b32.xlu0 %v1326, 126
        %v1339 = vpop.permute.xlu0 %1338
        %1340 = vrot.lane.b32.xlu0 %v1327, 126
        %v1341 = vpop.permute.xlu0 %1340
        %1342 = vrot.lane.b32.xlu0 %v1328, 126
        %v1343 = vpop.permute.xlu0 %1342
        %1344 = vrot.lane.b32.xlu0 %v1329, 126
        %v1345 = vpop.permute.xlu0 %1344
        %v1346 = vsel %vm976, %v1343, %v1345
        %v1347 = vsel %vm976, %v1341, %v1343
        %v1348 = vsel %vm976, %v1339, %v1341
        %v1349 = vsel %vm976, %v1337, %v1339
        %v1350 = vsel %vm976, %v1335, %v1337
        %v1351 = vsel %vm976, %v1333, %v1335
        %v1352 = vsel %vm976, %v1331, %v1333
        %v1353 = vsel %vm976, %v1345, %v1331
        %v1354 = vmax.f32 %v1322, %v1352
        %v1355 = vmax.f32 %v1323, %v1351
        %v1356 = vmax.f32 %v1324, %v1350
        %v1357 = vmax.f32 %v1325, %v1349
        %v1358 = vmax.f32 %v1326, %v1348
        %v1359 = vmax.f32 %v1327, %v1347
        %v1360 = vmax.f32 %v1328, %v1346
        %v1361 = vmax.f32 %v1329, %v1353
        %1362 = vrot.lane.b32.xlu0 %v1354, 4
        %v1363 = vpop.permute.xlu0 %1362
        %1364 = vrot.lane.b32.xlu0 %v1355, 4
        %v1365 = vpop.permute.xlu0 %1364
        %1366 = vrot.lane.b32.xlu0 %v1356, 4
        %v1367 = vpop.permute.xlu0 %1366
        %1368 = vrot.lane.b32.xlu0 %v1357, 4
        %v1369 = vpop.permute.xlu0 %1368
        %1370 = vrot.lane.b32.xlu0 %v1358, 4
        %v1371 = vpop.permute.xlu0 %1370
        %1372 = vrot.lane.b32.xlu0 %v1359, 4
        %v1373 = vpop.permute.xlu0 %1372
        %1374 = vrot.lane.b32.xlu0 %v1360, 4
        %v1375 = vpop.permute.xlu0 %1374
        %1376 = vrot.lane.b32.xlu0 %v1361, 4
        %v1377 = vpop.permute.xlu0 %1376
        %vm1378 = vcmp.lt.s32.totalorder %v168, 4
        %v1379 = vsel %vm1378, %v1375, %v1377
        %v1380 = vsel %vm1378, %v1373, %v1375
        %v1381 = vsel %vm1378, %v1371, %v1373
        %v1382 = vsel %vm1378, %v1369, %v1371
        %v1383 = vsel %vm1378, %v1367, %v1369
        %v1384 = vsel %vm1378, %v1365, %v1367
        %v1385 = vsel %vm1378, %v1363, %v1365
        %v1386 = vsel %vm1378, %v1377, %v1363
        %v1387 = vsel %vm200, 1, 0
        %v1388 = vsel %vm201, 1, 0
        %v1389 = vsel %vm202, 1, 0
        %v1390 = vsel %vm203, 1, 0
        %v1391 = vsel %vm204, 1, 0
        %v1392 = vsel %vm205, 1, 0
        %v1393 = vsel %vm206, 1, 0
        %v1394 = vsel %vm207, 1, 0
        %vm1395 = vcmp.eq.s32.totalorder %v1387, 1
        %vm1396 = vcmp.eq.s32.totalorder %v1388, 1
        %vm1397 = vcmp.eq.s32.totalorder %v1389, 1
        %vm1398 = vcmp.eq.s32.totalorder %v1390, 1
        %vm1399 = vcmp.eq.s32.totalorder %v1391, 1
        %vm1400 = vcmp.eq.s32.totalorder %v1392, 1
        %vm1401 = vcmp.eq.s32.totalorder %v1393, 1
        %vm1402 = vcmp.eq.s32.totalorder %v1394, 1
        %v1403 = vsel %vm1395, %v1386, 0.0
        %v1404 = vsel %vm1396, %v1385, 0.0
        %v1405 = vsel %vm1397, %v1384, 0.0
        %v1406 = vsel %vm1398, %v1383, 0.0
        %v1407 = vsel %vm1399, %v1382, 0.0
        %v1408 = vsel %vm1400, %v1381, 0.0
        %v1409 = vsel %vm1401, %v1380, 0.0
        %v1410 = vsel %vm1402, %v1379, 0.0
        %1411 = vrot.lane.b32.xlu0 %v1354, 124
        %v1412 = vpop.permute.xlu0 %1411
        %1413 = vrot.lane.b32.xlu0 %v1355, 124
        %v1414 = vpop.permute.xlu0 %1413
        %1415 = vrot.lane.b32.xlu0 %v1356, 124
        %v1416 = vpop.permute.xlu0 %1415
        %1417 = vrot.lane.b32.xlu0 %v1357, 124
        %v1418 = vpop.permute.xlu0 %1417
        %1419 = vrot.lane.b32.xlu0 %v1358, 124
        %v1420 = vpop.permute.xlu0 %1419
        %1421 = vrot.lane.b32.xlu0 %v1359, 124
        %v1422 = vpop.permute.xlu0 %1421
        %1423 = vrot.lane.b32.xlu0 %v1360, 124
        %v1424 = vpop.permute.xlu0 %1423
        %1425 = vrot.lane.b32.xlu0 %v1361, 124
        %v1426 = vpop.permute.xlu0 %1425
        %vm1427 = vcmp.lt.s32.totalorder %v168, 124
        %v1428 = vsel %vm1427, %v1424, %v1426
        %v1429 = vsel %vm1427, %v1422, %v1424
        %v1430 = vsel %vm1427, %v1420, %v1422
        %v1431 = vsel %vm1427, %v1418, %v1420
        %v1432 = vsel %vm1427, %v1416, %v1418
        %v1433 = vsel %vm1427, %v1414, %v1416
        %v1434 = vsel %vm1427, %v1412, %v1414
        %v1435 = vsel %vm1427, %v1426, %v1412
        %v1436 = vsel %vm224, 1, 0
        %v1437 = vsel %vm225, 1, 0
        %v1438 = vsel %vm226, 1, 0
        %v1439 = vsel %vm227, 1, 0
        %v1440 = vsel %vm228, 1, 0
        %v1441 = vsel %vm229, 1, 0
        %v1442 = vsel %vm230, 1, 0
        %v1443 = vsel %vm231, 1, 0
        %vm1444 = vcmp.eq.s32.totalorder %v1436, 1
        %vm1445 = vcmp.eq.s32.totalorder %v1437, 1
        %vm1446 = vcmp.eq.s32.totalorder %v1438, 1
        %vm1447 = vcmp.eq.s32.totalorder %v1439, 1
        %vm1448 = vcmp.eq.s32.totalorder %v1440, 1
        %vm1449 = vcmp.eq.s32.totalorder %v1441, 1
        %vm1450 = vcmp.eq.s32.totalorder %v1442, 1
        %vm1451 = vcmp.eq.s32.totalorder %v1443, 1
        %v1452 = vsel %vm1444, %v1434, 0.0
        %v1453 = vsel %vm1445, %v1433, 0.0
        %v1454 = vsel %vm1446, %v1432, 0.0
        %v1455 = vsel %vm1447, %v1431, 0.0
        %v1456 = vsel %vm1448, %v1430, 0.0
        %v1457 = vsel %vm1449, %v1429, 0.0
        %v1458 = vsel %vm1450, %v1428, 0.0
        %v1459 = vsel %vm1451, %v1435, 0.0
        %s1460 = scalar_lea.vmem %s1, 32
        %v1461 = vld [vmem:[%s1460] sm:$0xff]
        %s1462 = scalar_lea.vmem %s2, 32
        %v1463 = vld [vmem:[%s1462] sm:$0xff]
        %1465 = vset.pattern.permute.xlu0 0
        %1466 = vperm.xlu0 %1465, %v1463
        %v1467 = vpop.permute.xlu0 %1466
        %vm1469 = vcmask 195584
        %v1471 = vsel %vm1469, %v1461, 0
        %1473 = vmatprep.subr.mxu0 %v1404
        %1474 = vmatpush1.msra.mxu0 %v1403
        %1475 = vmatprep.subr.mxu0 %v1355
        %1476 = vmatpush1.msra.mxu0 %v1354
        %1477 = vmatprep.subr.mxu0 %v1453
        %1478 = vmatpush1.msra.mxu0 %v1452
        %1479 = vmatprep.subr.mxu0 0.0
        %1480 = vmatpush1.msra.mxu0 0.0
        %1481 = vmatprep.subr.mxu0 0.0
        %1482 = vmatpush1.msra.mxu0 0.0
        %1483 = vmatprep.subr.mxu0 0.0
        %1484 = vmatpush1.msra.mxu0 0.0
        %1485 = vmatprep.subr.mxu0 0.0
        %1486 = vmatpush1.msra.mxu0 0.0
        %1487 = vmatprep.subr.mxu0 0.0
        %1488 = vmatpush1.msra.mxu0 0.0
        %1489 = vmatprep.subr.mxu0 0.0
        %1490 = vmatpush1.msra.mxu0 0.0
        %1491 = vmatprep.subr.mxu0 0.0
        %1492 = vmatpush1.msra.mxu0 0.0
        %1493 = vmatprep.subr.mxu0 0.0
        %1494 = vmatpush1.msra.mxu0 0.0
        %1495 = vmatprep.subr.mxu0 0.0
        %1496 = vmatpush1.msra.mxu0 0.0
        %1497 = vmatprep.subr.mxu0 0.0
        %1498 = vmatpush1.msra.mxu0 0.0
        %1499 = vmatprep.subr.mxu0 0.0
        %1500 = vmatpush1.msra.mxu0 0.0
        %1501 = vmatprep.subr.mxu0 0.0
        %1502 = vmatpush1.msra.mxu0 0.0
        %1503 = vmatprep.subr.mxu0 0.0
        %1504 = vmatpush1.msra.mxu0 0.0
        %1505 = vmatprep.subr.mxu0 0.0
        %1506 = vmatpush1.msra.mxu0 0.0
        %1507 = vmatprep.subr.mxu0 0.0
        %1508 = vmatpush1.msra.mxu0 0.0
        %1509 = vmatprep.subr.mxu0 0.0
        %1510 = vmatpush1.msra.mxu0 0.0
        %1511 = vmatprep.subr.mxu0 0.0
        %1512 = vmatpush1.msra.mxu0 0.0
        %1513 = vmatprep.subr.mxu0 0.0
        %1514 = vmatpush1.msra.mxu0 0.0
        %1515 = vmatprep.subr.mxu0 0.0
        %1516 = vmatpush1.msra.mxu0 0.0
        %1517 = vmatprep.subr.mxu0 0.0
        %1518 = vmatpush1.msra.mxu0 0.0
        %1519 = vmatprep.subr.mxu0 0.0
        %1520 = vmatpush1.msra.mxu0 0.0
        %1521 = vmatprep.subr.mxu0 0.0
        %1522 = vmatpush1.msra.mxu0 0.0
        %1523 = vmatprep.subr.mxu0 0.0
        %1524 = vmatpush1.msra.mxu0 0.0
        %1525 = vmatprep.subr.mxu0 0.0
        %1526 = vmatpush1.msra.mxu0 0.0
        %1527 = vmatprep.subr.mxu0 0.0
        %1528 = vmatpush1.msra.mxu0 0.0
        %1529 = vmatprep.subr.mxu0 0.0
        %1530 = vmatpush1.msra.mxu0 0.0
        %1531 = vmatprep.subr.mxu0 0.0
        %1532 = vmatpush1.msra.mxu0 0.0
        %1533 = vmatprep.subr.mxu0 0.0
        %1534 = vmatpush1.msra.mxu0 0.0
        %1535 = vmatprep.subr.mxu0 0.0
        %1536 = vmatpush1.msra.mxu0 0.0
        %1537 = vmatprep.mubr.f32.mxu0 0.0
        %1538 = vmatmul.mubr.f32.gmra.mrb[0].mxu0 %v1471
        %v1539 = vpop.f32.mrb[0].mxu0
        %v1540 = vadd.f32 %v1467, %v1539
        %v1541 = vpop.f32.mrb[0].mxu0
        %v1542 = vadd.f32 %v1467, %v1541
        %1543 = vdwg.mxu0
        %1544 = vmatprep.subr.mxu0 %v1406
        %1545 = vmatpush1.msra.mxu0 %v1405
        %1546 = vmatprep.subr.mxu0 %v1357
        %1547 = vmatpush1.msra.mxu0 %v1356
        %1548 = vmatprep.subr.mxu0 %v1455
        %1549 = vmatpush1.msra.mxu0 %v1454
        %1550 = vmatprep.subr.mxu0 0.0
        %1551 = vmatpush1.msra.mxu0 0.0
        %1552 = vmatprep.subr.mxu0 0.0
        %1553 = vmatpush1.msra.mxu0 0.0
        %1554 = vmatprep.subr.mxu0 0.0
        %1555 = vmatpush1.msra.mxu0 0.0
        %1556 = vmatprep.subr.mxu0 0.0
        %1557 = vmatpush1.msra.mxu0 0.0
        %1558 = vmatprep.subr.mxu0 0.0
        %1559 = vmatpush1.msra.mxu0 0.0
        %1560 = vmatprep.subr.mxu0 0.0
        %1561 = vmatpush1.msra.mxu0 0.0
        %1562 = vmatprep.subr.mxu0 0.0
        %1563 = vmatpush1.msra.mxu0 0.0
        %1564 = vmatprep.subr.mxu0 0.0
        %1565 = vmatpush1.msra.mxu0 0.0
        %1566 = vmatprep.subr.mxu0 0.0
        %1567 = vmatpush1.msra.mxu0 0.0
        %1568 = vmatprep.subr.mxu0 0.0
        %1569 = vmatpush1.msra.mxu0 0.0
        %1570 = vmatprep.subr.mxu0 0.0
        %1571 = vmatpush1.msra.mxu0 0.0
        %1572 = vmatprep.subr.mxu0 0.0
        %1573 = vmatpush1.msra.mxu0 0.0
        %1574 = vmatprep.subr.mxu0 0.0
        %1575 = vmatpush1.msra.mxu0 0.0
        %1576 = vmatprep.subr.mxu0 0.0
        %1577 = vmatpush1.msra.mxu0 0.0
        %1578 = vmatprep.subr.mxu0 0.0
        %1579 = vmatpush1.msra.mxu0 0.0
        %1580 = vmatprep.subr.mxu0 0.0
        %1581 = vmatpush1.msra.mxu0 0.0
        %1582 = vmatprep.subr.mxu0 0.0
        %1583 = vmatpush1.msra.mxu0 0.0
        %1584 = vmatprep.subr.mxu0 0.0
        %1585 = vmatpush1.msra.mxu0 0.0
        %1586 = vmatprep.subr.mxu0 0.0
        %1587 = vmatpush1.msra.mxu0 0.0
        %1588 = vmatprep.subr.mxu0 0.0
        %1589 = vmatpush1.msra.mxu0 0.0
        %1590 = vmatprep.subr.mxu0 0.0
        %1591 = vmatpush1.msra.mxu0 0.0
        %1592 = vmatprep.subr.mxu0 0.0
        %1593 = vmatpush1.msra.mxu0 0.0
        %1594 = vmatprep.subr.mxu0 0.0
        %1595 = vmatpush1.msra.mxu0 0.0
        %1596 = vmatprep.subr.mxu0 0.0
        %1597 = vmatpush1.msra.mxu0 0.0
        %1598 = vmatprep.subr.mxu0 0.0
        %1599 = vmatpush1.msra.mxu0 0.0
        %1600 = vmatprep.subr.mxu0 0.0
        %1601 = vmatpush1.msra.mxu0 0.0
        %1602 = vmatprep.subr.mxu0 0.0
        %1603 = vmatpush1.msra.mxu0 0.0
        %1604 = vmatprep.subr.mxu0 0.0
        %1605 = vmatpush1.msra.mxu0 0.0
        %1606 = vmatprep.subr.mxu0 0.0
        %1607 = vmatpush1.msra.mxu0 0.0
        %1608 = vmatprep.mubr.f32.mxu0 0.0
        %1609 = vmatmul.mubr.f32.gmra.mrb[0].mxu0 %v1471
        %v1610 = vpop.f32.mrb[0].mxu0
        %v1611 = vadd.f32 %v1467, %v1610
        %v1612 = vpop.f32.mrb[0].mxu0
        %v1613 = vadd.f32 %v1467, %v1612
        %1614 = vdwg.mxu0
        %1615 = vmatprep.subr.mxu0 %v1408
        %1616 = vmatpush1.msra.mxu0 %v1407
        %1617 = vmatprep.subr.mxu0 %v1359
        %1618 = vmatpush1.msra.mxu0 %v1358
        %1619 = vmatprep.subr.mxu0 %v1457
        %1620 = vmatpush1.msra.mxu0 %v1456
        %1621 = vmatprep.subr.mxu0 0.0
        %1622 = vmatpush1.msra.mxu0 0.0
        %1623 = vmatprep.subr.mxu0 0.0
        %1624 = vmatpush1.msra.mxu0 0.0
        %1625 = vmatprep.subr.mxu0 0.0
        %1626 = vmatpush1.msra.mxu0 0.0
        %1627 = vmatprep.subr.mxu0 0.0
        %1628 = vmatpush1.msra.mxu0 0.0
        %1629 = vmatprep.subr.mxu0 0.0
        %1630 = vmatpush1.msra.mxu0 0.0
        %1631 = vmatprep.subr.mxu0 0.0
        %1632 = vmatpush1.msra.mxu0 0.0
        %1633 = vmatprep.subr.mxu0 0.0
        %1634 = vmatpush1.msra.mxu0 0.0
        %1635 = vmatprep.subr.mxu0 0.0
        %1636 = vmatpush1.msra.mxu0 0.0
        %1637 = vmatprep.subr.mxu0 0.0
        %1638 = vmatpush1.msra.mxu0 0.0
        %1639 = vmatprep.subr.mxu0 0.0
        %1640 = vmatpush1.msra.mxu0 0.0
        %1641 = vmatprep.subr.mxu0 0.0
        %1642 = vmatpush1.msra.mxu0 0.0
        %1643 = vmatprep.subr.mxu0 0.0
        %1644 = vmatpush1.msra.mxu0 0.0
        %1645 = vmatprep.subr.mxu0 0.0
        %1646 = vmatpush1.msra.mxu0 0.0
        %1647 = vmatprep.subr.mxu0 0.0
        %1648 = vmatpush1.msra.mxu0 0.0
        %1649 = vmatprep.subr.mxu0 0.0
        %1650 = vmatpush1.msra.mxu0 0.0
        %1651 = vmatprep.subr.mxu0 0.0
        %1652 = vmatpush1.msra.mxu0 0.0
        %1653 = vmatprep.subr.mxu0 0.0
        %1654 = vmatpush1.msra.mxu0 0.0
        %1655 = vmatprep.subr.mxu0 0.0
        %1656 = vmatpush1.msra.mxu0 0.0
        %1657 = vmatprep.subr.mxu0 0.0
        %1658 = vmatpush1.msra.mxu0 0.0
        %1659 = vmatprep.subr.mxu0 0.0
        %1660 = vmatpush1.msra.mxu0 0.0
        %1661 = vmatprep.subr.mxu0 0.0
        %1662 = vmatpush1.msra.mxu0 0.0
        %1663 = vmatprep.subr.mxu0 0.0
        %1664 = vmatpush1.msra.mxu0 0.0
        %1665 = vmatprep.subr.mxu0 0.0
        %1666 = vmatpush1.msra.mxu0 0.0
        %1667 = vmatprep.subr.mxu0 0.0
        %1668 = vmatpush1.msra.mxu0 0.0
        %1669 = vmatprep.subr.mxu0 0.0
        %1670 = vmatpush1.msra.mxu0 0.0
        %1671 = vmatprep.subr.mxu0 0.0
        %1672 = vmatpush1.msra.mxu0 0.0
        %1673 = vmatprep.subr.mxu0 0.0
        %1674 = vmatpush1.msra.mxu0 0.0
        %1675 = vmatprep.subr.mxu0 0.0
        %1676 = vmatpush1.msra.mxu0 0.0
        %1677 = vmatprep.subr.mxu0 0.0
        %1678 = vmatpush1.msra.mxu0 0.0
        %1679 = vmatprep.mubr.f32.mxu0 0.0
        %1680 = vmatmul.mubr.f32.gmra.mrb[0].mxu0 %v1471
        %v1681 = vpop.f32.mrb[0].mxu0
        %v1682 = vadd.f32 %v1467, %v1681
        %v1683 = vpop.f32.mrb[0].mxu0
        %v1684 = vadd.f32 %v1467, %v1683
        %1685 = vdwg.mxu0
        %1686 = vmatprep.subr.mxu0 %v1410
        %1687 = vmatpush1.msra.mxu0 %v1409
        %1688 = vmatprep.subr.mxu0 %v1361
        %1689 = vmatpush1.msra.mxu0 %v1360
        %1690 = vmatprep.subr.mxu0 %v1459
        %1691 = vmatpush1.msra.mxu0 %v1458
        %1692 = vmatprep.subr.mxu0 0.0
        %1693 = vmatpush1.msra.mxu0 0.0
        %1694 = vmatprep.subr.mxu0 0.0
        %1695 = vmatpush1.msra.mxu0 0.0
        %1696 = vmatprep.subr.mxu0 0.0
        %1697 = vmatpush1.msra.mxu0 0.0
        %1698 = vmatprep.subr.mxu0 0.0
        %1699 = vmatpush1.msra.mxu0 0.0
        %1700 = vmatprep.subr.mxu0 0.0
        %1701 = vmatpush1.msra.mxu0 0.0
        %1702 = vmatprep.subr.mxu0 0.0
        %1703 = vmatpush1.msra.mxu0 0.0
        %1704 = vmatprep.subr.mxu0 0.0
        %1705 = vmatpush1.msra.mxu0 0.0
        %1706 = vmatprep.subr.mxu0 0.0
        %1707 = vmatpush1.msra.mxu0 0.0
        %1708 = vmatprep.subr.mxu0 0.0
        %1709 = vmatpush1.msra.mxu0 0.0
        %1710 = vmatprep.subr.mxu0 0.0
        %1711 = vmatpush1.msra.mxu0 0.0
        %1712 = vmatprep.subr.mxu0 0.0
        %1713 = vmatpush1.msra.mxu0 0.0
        %1714 = vmatprep.subr.mxu0 0.0
        %1715 = vmatpush1.msra.mxu0 0.0
        %1716 = vmatprep.subr.mxu0 0.0
        %1717 = vmatpush1.msra.mxu0 0.0
        %1718 = vmatprep.subr.mxu0 0.0
        %1719 = vmatpush1.msra.mxu0 0.0
        %1720 = vmatprep.subr.mxu0 0.0
        %1721 = vmatpush1.msra.mxu0 0.0
        %1722 = vmatprep.subr.mxu0 0.0
        %1723 = vmatpush1.msra.mxu0 0.0
        %1724 = vmatprep.subr.mxu0 0.0
        %1725 = vmatpush1.msra.mxu0 0.0
        %1726 = vmatprep.subr.mxu0 0.0
        %1727 = vmatpush1.msra.mxu0 0.0
        %1728 = vmatprep.subr.mxu0 0.0
        %1729 = vmatpush1.msra.mxu0 0.0
        %1730 = vmatprep.subr.mxu0 0.0
        %1731 = vmatpush1.msra.mxu0 0.0
        %1732 = vmatprep.subr.mxu0 0.0
        %1733 = vmatpush1.msra.mxu0 0.0
        %1734 = vmatprep.subr.mxu0 0.0
        %1735 = vmatpush1.msra.mxu0 0.0
        %1736 = vmatprep.subr.mxu0 0.0
        %1737 = vmatpush1.msra.mxu0 0.0
        %1738 = vmatprep.subr.mxu0 0.0
        %1739 = vmatpush1.msra.mxu0 0.0
        %1740 = vmatprep.subr.mxu0 0.0
        %1741 = vmatpush1.msra.mxu0 0.0
        %1742 = vmatprep.subr.mxu0 0.0
        %1743 = vmatpush1.msra.mxu0 0.0
        %1744 = vmatprep.subr.mxu0 0.0
        %1745 = vmatpush1.msra.mxu0 0.0
        %1746 = vmatprep.subr.mxu0 0.0
        %1747 = vmatpush1.msra.mxu0 0.0
        %1748 = vmatprep.subr.mxu0 0.0
        %1749 = vmatpush1.msra.mxu0 0.0
        %1750 = vmatprep.mubr.f32.mxu0 0.0
        %1751 = vmatmul.mubr.f32.gmra.mrb[0].mxu0 %v1471
        %v1752 = vpop.f32.mrb[0].mxu0
        %v1753 = vadd.f32 %v1467, %v1752
        %v1754 = vpop.f32.mrb[0].mxu0
        %v1755 = vadd.f32 %v1467, %v1754
        %1756 = vdwg.mxu0
        %v1757 = vmax.f32 %v1540, 0.0
        %v1758 = vmax.f32 %v1542, 0.0
        %v1759 = vmax.f32 %v1611, 0.0
        %v1760 = vmax.f32 %v1613, 0.0
        %v1761 = vmax.f32 %v1682, 0.0
        %v1762 = vmax.f32 %v1684, 0.0
        %v1763 = vmax.f32 %v1753, 0.0
        %v1764 = vmax.f32 %v1755, 0.0
        %1765 = vrot.lane.b32.xlu0 %v1757, 124
        %v1766 = vpop.permute.xlu0 %1765
        %1767 = vrot.lane.b32.xlu0 %v1758, 124
        %v1768 = vpop.permute.xlu0 %1767
        %1769 = vrot.lane.b32.xlu0 %v1759, 124
        %v1770 = vpop.permute.xlu0 %1769
        %1771 = vrot.lane.b32.xlu0 %v1760, 124
        %v1772 = vpop.permute.xlu0 %1771
        %1773 = vrot.lane.b32.xlu0 %v1761, 124
        %v1774 = vpop.permute.xlu0 %1773
        %1775 = vrot.lane.b32.xlu0 %v1762, 124
        %v1776 = vpop.permute.xlu0 %1775
        %1777 = vrot.lane.b32.xlu0 %v1763, 124
        %v1778 = vpop.permute.xlu0 %1777
        %1779 = vrot.lane.b32.xlu0 %v1764, 124
        %v1780 = vpop.permute.xlu0 %1779
        %v1781 = vsel %vm1427, %v1778, %v1780
        %v1782 = vsel %vm1427, %v1776, %v1778
        %v1783 = vsel %vm1427, %v1774, %v1776
        %v1784 = vsel %vm1427, %v1772, %v1774
        %v1785 = vsel %vm1427, %v1770, %v1772
        %v1786 = vsel %vm1427, %v1768, %v1770
        %v1787 = vsel %vm1427, %v1766, %v1768
        %v1788 = vsel %vm1427, %v1780, %v1766
        %v1789 = vmax.f32 %v1757, %v1787
        %v1790 = vmax.f32 %v1758, %v1786
        %v1791 = vmax.f32 %v1759, %v1785
        %v1792 = vmax.f32 %v1760, %v1784
        %v1793 = vmax.f32 %v1761, %v1783
        %v1794 = vmax.f32 %v1762, %v1782
        %v1795 = vmax.f32 %v1763, %v1781
        %v1796 = vmax.f32 %v1764, %v1788
        %v1797 = vsel %vm272, 1, 0
        %v1798 = vsel %vm273, 1, 0
        %v1799 = vsel %vm274, 1, 0
        %v1800 = vsel %vm275, 1, 0
        %v1801 = vsel %vm276, 1, 0
        %v1802 = vsel %vm277, 1, 0
        %v1803 = vsel %vm278, 1, 0
        %v1804 = vsel %vm279, 1, 0
        %vm1805 = vcmp.eq.s32.totalorder %v1797, 1
        %vm1806 = vcmp.eq.s32.totalorder %v1798, 1
        %vm1807 = vcmp.eq.s32.totalorder %v1799, 1
        %vm1808 = vcmp.eq.s32.totalorder %v1800, 1
        %vm1809 = vcmp.eq.s32.totalorder %v1801, 1
        %vm1810 = vcmp.eq.s32.totalorder %v1802, 1
        %vm1811 = vcmp.eq.s32.totalorder %v1803, 1
        %vm1812 = vcmp.eq.s32.totalorder %v1804, 1
        %v1813 = vsel %vm1805, %v1789, 0.0
        %v1814 = vsel %vm1806, %v1790, 0.0
        %v1815 = vsel %vm1807, %v1791, 0.0
        %v1816 = vsel %vm1808, %v1792, 0.0
        %v1817 = vsel %vm1809, %v1793, 0.0
        %v1818 = vsel %vm1810, %v1794, 0.0
        %v1819 = vsel %vm1811, %v1795, 0.0
        %v1820 = vsel %vm1812, %v1796, 0.0
        %1821 = vrot.lane.b32.xlu0 %v1813, 4
        %v1822 = vpop.permute.xlu0 %1821
        %1823 = vrot.lane.b32.xlu0 %v1814, 4
        %v1824 = vpop.permute.xlu0 %1823
        %1825 = vrot.lane.b32.xlu0 %v1815, 4
        %v1826 = vpop.permute.xlu0 %1825
        %1827 = vrot.lane.b32.xlu0 %v1816, 4
        %v1828 = vpop.permute.xlu0 %1827
        %1829 = vrot.lane.b32.xlu0 %v1817, 4
        %v1830 = vpop.permute.xlu0 %1829
        %1831 = vrot.lane.b32.xlu0 %v1818, 4
        %v1832 = vpop.permute.xlu0 %1831
        %1833 = vrot.lane.b32.xlu0 %v1819, 4
        %v1834 = vpop.permute.xlu0 %1833
        %1835 = vrot.lane.b32.xlu0 %v1820, 4
        %v1836 = vpop.permute.xlu0 %1835
        %v1837 = vsel %vm1378, %v1834, %v1836
        %v1838 = vsel %vm1378, %v1832, %v1834
        %v1839 = vsel %vm1378, %v1830, %v1832
        %v1840 = vsel %vm1378, %v1828, %v1830
        %v1841 = vsel %vm1378, %v1826, %v1828
        %v1842 = vsel %vm1378, %v1824, %v1826
        %v1843 = vsel %vm1378, %v1822, %v1824
        %v1844 = vsel %vm1378, %v1836, %v1822
        %v1845 = vsel %vm1395, %v1844, 0.0
        %v1846 = vsel %vm1396, %v1843, 0.0
        %v1847 = vsel %vm1397, %v1842, 0.0
        %v1848 = vsel %vm1398, %v1841, 0.0
        %v1849 = vsel %vm1399, %v1840, 0.0
        %v1850 = vsel %vm1400, %v1839, 0.0
        %v1851 = vsel %vm1401, %v1838, 0.0
        %v1852 = vsel %vm1402, %v1837, 0.0
        %1853 = vrot.lane.b32.xlu0 %v1813, 124
        %v1854 = vpop.permute.xlu0 %1853
        %1855 = vrot.lane.b32.xlu0 %v1814, 124
        %v1856 = vpop.permute.xlu0 %1855
        %1857 = vrot.lane.b32.xlu0 %v1815, 124
        %v1858 = vpop.permute.xlu0 %1857
        %1859 = vrot.lane.b32.xlu0 %v1816, 124
        %v1860 = vpop.permute.xlu0 %1859
        %1861 = vrot.lane.b32.xlu0 %v1817, 124
        %v1862 = vpop.permute.xlu0 %1861
        %1863 = vrot.lane.b32.xlu0 %v1818, 124
        %v1864 = vpop.permute.xlu0 %1863
        %1865 = vrot.lane.b32.xlu0 %v1819, 124
        %v1866 = vpop.permute.xlu0 %1865
        %1867 = vrot.lane.b32.xlu0 %v1820, 124
        %v1868 = vpop.permute.xlu0 %1867
        %v1869 = vsel %vm1427, %v1866, %v1868
        %v1870 = vsel %vm1427, %v1864, %v1866
        %v1871 = vsel %vm1427, %v1862, %v1864
        %v1872 = vsel %vm1427, %v1860, %v1862
        %v1873 = vsel %vm1427, %v1858, %v1860
        %v1874 = vsel %vm1427, %v1856, %v1858
        %v1875 = vsel %vm1427, %v1854, %v1856
        %v1876 = vsel %vm1427, %v1868, %v1854
        %v1877 = vsel %vm1444, %v1875, 0.0
        %v1878 = vsel %vm1445, %v1874, 0.0
        %v1879 = vsel %vm1446, %v1873, 0.0
        %v1880 = vsel %vm1447, %v1872, 0.0
        %v1881 = vsel %vm1448, %v1871, 0.0
        %v1882 = vsel %vm1449, %v1870, 0.0
        %v1883 = vsel %vm1450, %v1869, 0.0
        %v1884 = vsel %vm1451, %v1876, 0.0
        %s1885 = scalar_lea.vmem %s1, 48
        %v1886 = vld [vmem:[%s1885] sm:$0xff]
        %s1887 = scalar_lea.vmem %s2, 48
        %v1888 = vld [vmem:[%s1887] sm:$0xff]
        %1890 = vset.pattern.permute.xlu0 0
        %1891 = vperm.xlu0 %1890, %v1888
        %v1892 = vpop.permute.xlu0 %1891
        %v1895 = vsel %vm1469, %v1886, 0
        %1897 = vmatprep.subr.mxu0 %v1846
        %1898 = vmatpush1.msra.mxu0 %v1845
        %1899 = vmatprep.subr.mxu0 %v1814
        %1900 = vmatpush1.msra.mxu0 %v1813
        %1901 = vmatprep.subr.mxu0 %v1878
        %1902 = vmatpush1.msra.mxu0 %v1877
        %1903 = vmatprep.subr.mxu0 0.0
        %1904 = vmatpush1.msra.mxu0 0.0
        %1905 = vmatprep.subr.mxu0 0.0
        %1906 = vmatpush1.msra.mxu0 0.0
        %1907 = vmatprep.subr.mxu0 0.0
        %1908 = vmatpush1.msra.mxu0 0.0
        %1909 = vmatprep.subr.mxu0 0.0
        %1910 = vmatpush1.msra.mxu0 0.0
        %1911 = vmatprep.subr.mxu0 0.0
        %1912 = vmatpush1.msra.mxu0 0.0
        %1913 = vmatprep.subr.mxu0 0.0
        %1914 = vmatpush1.msra.mxu0 0.0
        %1915 = vmatprep.subr.mxu0 0.0
        %1916 = vmatpush1.msra.mxu0 0.0
        %1917 = vmatprep.subr.mxu0 0.0
        %1918 = vmatpush1.msra.mxu0 0.0
        %1919 = vmatprep.subr.mxu0 0.0
        %1920 = vmatpush1.msra.mxu0 0.0
        %1921 = vmatprep.subr.mxu0 0.0
        %1922 = vmatpush1.msra.mxu0 0.0
        %1923 = vmatprep.subr.mxu0 0.0
        %1924 = vmatpush1.msra.mxu0 0.0
        %1925 = vmatprep.subr.mxu0 0.0
        %1926 = vmatpush1.msra.mxu0 0.0
        %1927 = vmatprep.subr.mxu0 0.0
        %1928 = vmatpush1.msra.mxu0 0.0
        %1929 = vmatprep.subr.mxu0 0.0
        %1930 = vmatpush1.msra.mxu0 0.0
        %1931 = vmatprep.subr.mxu0 0.0
        %1932 = vmatpush1.msra.mxu0 0.0
        %1933 = vmatprep.subr.mxu0 0.0
        %1934 = vmatpush1.msra.mxu0 0.0
        %1935 = vmatprep.subr.mxu0 0.0
        %1936 = vmatpush1.msra.mxu0 0.0
        %1937 = vmatprep.subr.mxu0 0.0
        %1938 = vmatpush1.msra.mxu0 0.0
        %1939 = vmatprep.subr.mxu0 0.0
        %1940 = vmatpush1.msra.mxu0 0.0
        %1941 = vmatprep.subr.mxu0 0.0
        %1942 = vmatpush1.msra.mxu0 0.0
        %1943 = vmatprep.subr.mxu0 0.0
        %1944 = vmatpush1.msra.mxu0 0.0
        %1945 = vmatprep.subr.mxu0 0.0
        %1946 = vmatpush1.msra.mxu0 0.0
        %1947 = vmatprep.subr.mxu0 0.0
        %1948 = vmatpush1.msra.mxu0 0.0
        %1949 = vmatprep.subr.mxu0 0.0
        %1950 = vmatpush1.msra.mxu0 0.0
        %1951 = vmatprep.subr.mxu0 0.0
        %1952 = vmatpush1.msra.mxu0 0.0
        %1953 = vmatprep.subr.mxu0 0.0
        %1954 = vmatpush1.msra.mxu0 0.0
        %1955 = vmatprep.subr.mxu0 0.0
        %1956 = vmatpush1.msra.mxu0 0.0
        %1957 = vmatprep.subr.mxu0 0.0
        %1958 = vmatpush1.msra.mxu0 0.0
        %1959 = vmatprep.subr.mxu0 0.0
        %1960 = vmatpush1.msra.mxu0 0.0
        %1961 = vmatprep.mubr.f32.mxu0 0.0
        %1962 = vmatmul.mubr.f32.gmra.mrb[0].mxu0 %v1895
        %v1963 = vpop.f32.mrb[0].mxu0
        %v1964 = vadd.f32 %v1892, %v1963
        %v1965 = vpop.f32.mrb[0].mxu0
        %v1966 = vadd.f32 %v1892, %v1965
        %1967 = vdwg.mxu0
        %1968 = vmatprep.subr.mxu0 %v1848
        %1969 = vmatpush1.msra.mxu0 %v1847
        %1970 = vmatprep.subr.mxu0 %v1816
        %1971 = vmatpush1.msra.mxu0 %v1815
        %1972 = vmatprep.subr.mxu0 %v1880
        %1973 = vmatpush1.msra.mxu0 %v1879
        %1974 = vmatprep.subr.mxu0 0.0
        %1975 = vmatpush1.msra.mxu0 0.0
        %1976 = vmatprep.subr.mxu0 0.0
        %1977 = vmatpush1.msra.mxu0 0.0
        %1978 = vmatprep.subr.mxu0 0.0
        %1979 = vmatpush1.msra.mxu0 0.0
        %1980 = vmatprep.subr.mxu0 0.0
        %1981 = vmatpush1.msra.mxu0 0.0
        %1982 = vmatprep.subr.mxu0 0.0
        %1983 = vmatpush1.msra.mxu0 0.0
        %1984 = vmatprep.subr.mxu0 0.0
        %1985 = vmatpush1.msra.mxu0 0.0
        %1986 = vmatprep.subr.mxu0 0.0
        %1987 = vmatpush1.msra.mxu0 0.0
        %1988 = vmatprep.subr.mxu0 0.0
        %1989 = vmatpush1.msra.mxu0 0.0
        %1990 = vmatprep.subr.mxu0 0.0
        %1991 = vmatpush1.msra.mxu0 0.0
        %1992 = vmatprep.subr.mxu0 0.0
        %1993 = vmatpush1.msra.mxu0 0.0
        %1994 = vmatprep.subr.mxu0 0.0
        %1995 = vmatpush1.msra.mxu0 0.0
        %1996 = vmatprep.subr.mxu0 0.0
        %1997 = vmatpush1.msra.mxu0 0.0
        %1998 = vmatprep.subr.mxu0 0.0
        %1999 = vmatpush1.msra.mxu0 0.0
        %2000 = vmatprep.subr.mxu0 0.0
        %2001 = vmatpush1.msra.mxu0 0.0
        %2002 = vmatprep.subr.mxu0 0.0
        %2003 = vmatpush1.msra.mxu0 0.0
        %2004 = vmatprep.subr.mxu0 0.0
        %2005 = vmatpush1.msra.mxu0 0.0
        %2006 = vmatprep.subr.mxu0 0.0
        %2007 = vmatpush1.msra.mxu0 0.0
        %2008 = vmatprep.subr.mxu0 0.0
        %2009 = vmatpush1.msra.mxu0 0.0
        %2010 = vmatprep.subr.mxu0 0.0
        %2011 = vmatpush1.msra.mxu0 0.0
        %2012 = vmatprep.subr.mxu0 0.0
        %2013 = vmatpush1.msra.mxu0 0.0
        %2014 = vmatprep.subr.mxu0 0.0
        %2015 = vmatpush1.msra.mxu0 0.0
        %2016 = vmatprep.subr.mxu0 0.0
        %2017 = vmatpush1.msra.mxu0 0.0
        %2018 = vmatprep.subr.mxu0 0.0
        %2019 = vmatpush1.msra.mxu0 0.0
        %2020 = vmatprep.subr.mxu0 0.0
        %2021 = vmatpush1.msra.mxu0 0.0
        %2022 = vmatprep.subr.mxu0 0.0
        %2023 = vmatpush1.msra.mxu0 0.0
        %2024 = vmatprep.subr.mxu0 0.0
        %2025 = vmatpush1.msra.mxu0 0.0
        %2026 = vmatprep.subr.mxu0 0.0
        %2027 = vmatpush1.msra.mxu0 0.0
        %2028 = vmatprep.subr.mxu0 0.0
        %2029 = vmatpush1.msra.mxu0 0.0
        %2030 = vmatprep.subr.mxu0 0.0
        %2031 = vmatpush1.msra.mxu0 0.0
        %2032 = vmatprep.mubr.f32.mxu0 0.0
        %2033 = vmatmul.mubr.f32.gmra.mrb[0].mxu0 %v1895
        %v2034 = vpop.f32.mrb[0].mxu0
        %v2035 = vadd.f32 %v1892, %v2034
        %v2036 = vpop.f32.mrb[0].mxu0
        %v2037 = vadd.f32 %v1892, %v2036
        %2038 = vdwg.mxu0
        %2039 = vmatprep.subr.mxu0 %v1850
        %2040 = vmatpush1.msra.mxu0 %v1849
        %2041 = vmatprep.subr.mxu0 %v1818
        %2042 = vmatpush1.msra.mxu0 %v1817
        %2043 = vmatprep.subr.mxu0 %v1882
        %2044 = vmatpush1.msra.mxu0 %v1881
        %2045 = vmatprep.subr.mxu0 0.0
        %2046 = vmatpush1.msra.mxu0 0.0
        %2047 = vmatprep.subr.mxu0 0.0
        %2048 = vmatpush1.msra.mxu0 0.0
        %2049 = vmatprep.subr.mxu0 0.0
        %2050 = vmatpush1.msra.mxu0 0.0
        %2051 = vmatprep.subr.mxu0 0.0
        %2052 = vmatpush1.msra.mxu0 0.0
        %2053 = vmatprep.subr.mxu0 0.0
        %2054 = vmatpush1.msra.mxu0 0.0
        %2055 = vmatprep.subr.mxu0 0.0
        %2056 = vmatpush1.msra.mxu0 0.0
        %2057 = vmatprep.subr.mxu0 0.0
        %2058 = vmatpush1.msra.mxu0 0.0
        %2059 = vmatprep.subr.mxu0 0.0
        %2060 = vmatpush1.msra.mxu0 0.0
        %2061 = vmatprep.subr.mxu0 0.0
        %2062 = vmatpush1.msra.mxu0 0.0
        %2063 = vmatprep.subr.mxu0 0.0
        %2064 = vmatpush1.msra.mxu0 0.0
        %2065 = vmatprep.subr.mxu0 0.0
        %2066 = vmatpush1.msra.mxu0 0.0
        %2067 = vmatprep.subr.mxu0 0.0
        %2068 = vmatpush1.msra.mxu0 0.0
        %2069 = vmatprep.subr.mxu0 0.0
        %2070 = vmatpush1.msra.mxu0 0.0
        %2071 = vmatprep.subr.mxu0 0.0
        %2072 = vmatpush1.msra.mxu0 0.0
        %2073 = vmatprep.subr.mxu0 0.0
        %2074 = vmatpush1.msra.mxu0 0.0
        %2075 = vmatprep.subr.mxu0 0.0
        %2076 = vmatpush1.msra.mxu0 0.0
        %2077 = vmatprep.subr.mxu0 0.0
        %2078 = vmatpush1.msra.mxu0 0.0
        %2079 = vmatprep.subr.mxu0 0.0
        %2080 = vmatpush1.msra.mxu0 0.0
        %2081 = vmatprep.subr.mxu0 0.0
        %2082 = vmatpush1.msra.mxu0 0.0
        %2083 = vmatprep.subr.mxu0 0.0
        %2084 = vmatpush1.msra.mxu0 0.0
        %2085 = vmatprep.subr.mxu0 0.0
        %2086 = vmatpush1.msra.mxu0 0.0
        %2087 = vmatprep.subr.mxu0 0.0
        %2088 = vmatpush1.msra.mxu0 0.0
        %2089 = vmatprep.subr.mxu0 0.0
        %2090 = vmatpush1.msra.mxu0 0.0
        %2091 = vmatprep.subr.mxu0 0.0
        %2092 = vmatpush1.msra.mxu0 0.0
        %2093 = vmatprep.subr.mxu0 0.0
        %2094 = vmatpush1.msra.mxu0 0.0
        %2095 = vmatprep.subr.mxu0 0.0
        %2096 = vmatpush1.msra.mxu0 0.0
        %2097 = vmatprep.subr.mxu0 0.0
        %2098 = vmatpush1.msra.mxu0 0.0
        %2099 = vmatprep.subr.mxu0 0.0
        %2100 = vmatpush1.msra.mxu0 0.0
        %2101 = vmatprep.subr.mxu0 0.0
        %2102 = vmatpush1.msra.mxu0 0.0
        %2103 = vmatprep.mubr.f32.mxu0 0.0
        %2104 = vmatmul.mubr.f32.gmra.mrb[0].mxu0 %v1895
        %v2105 = vpop.f32.mrb[0].mxu0
        %v2106 = vadd.f32 %v1892, %v2105
        %v2107 = vpop.f32.mrb[0].mxu0
        %v2108 = vadd.f32 %v1892, %v2107
        %2109 = vdwg.mxu0
        %2110 = vmatprep.subr.mxu0 %v1852
        %2111 = vmatpush1.msra.mxu0 %v1851
        %2112 = vmatprep.subr.mxu0 %v1820
        %2113 = vmatpush1.msra.mxu0 %v1819
        %2114 = vmatprep.subr.mxu0 %v1884
        %2115 = vmatpush1.msra.mxu0 %v1883
        %2116 = vmatprep.subr.mxu0 0.0
        %2117 = vmatpush1.msra.mxu0 0.0
        %2118 = vmatprep.subr.mxu0 0.0
        %2119 = vmatpush1.msra.mxu0 0.0
        %2120 = vmatprep.subr.mxu0 0.0
        %2121 = vmatpush1.msra.mxu0 0.0
        %2122 = vmatprep.subr.mxu0 0.0
        %2123 = vmatpush1.msra.mxu0 0.0
        %2124 = vmatprep.subr.mxu0 0.0
        %2125 = vmatpush1.msra.mxu0 0.0
        %2126 = vmatprep.subr.mxu0 0.0
        %2127 = vmatpush1.msra.mxu0 0.0
        %2128 = vmatprep.subr.mxu0 0.0
        %2129 = vmatpush1.msra.mxu0 0.0
        %2130 = vmatprep.subr.mxu0 0.0
        %2131 = vmatpush1.msra.mxu0 0.0
        %2132 = vmatprep.subr.mxu0 0.0
        %2133 = vmatpush1.msra.mxu0 0.0
        %2134 = vmatprep.subr.mxu0 0.0
        %2135 = vmatpush1.msra.mxu0 0.0
        %2136 = vmatprep.subr.mxu0 0.0
        %2137 = vmatpush1.msra.mxu0 0.0
        %2138 = vmatprep.subr.mxu0 0.0
        %2139 = vmatpush1.msra.mxu0 0.0
        %2140 = vmatprep.subr.mxu0 0.0
        %2141 = vmatpush1.msra.mxu0 0.0
        %2142 = vmatprep.subr.mxu0 0.0
        %2143 = vmatpush1.msra.mxu0 0.0
        %2144 = vmatprep.subr.mxu0 0.0
        %2145 = vmatpush1.msra.mxu0 0.0
        %2146 = vmatprep.subr.mxu0 0.0
        %2147 = vmatpush1.msra.mxu0 0.0
        %2148 = vmatprep.subr.mxu0 0.0
        %2149 = vmatpush1.msra.mxu0 0.0
        %2150 = vmatprep.subr.mxu0 0.0
        %2151 = vmatpush1.msra.mxu0 0.0
        %2152 = vmatprep.subr.mxu0 0.0
        %2153 = vmatpush1.msra.mxu0 0.0
        %2154 = vmatprep.subr.mxu0 0.0
        %2155 = vmatpush1.msra.mxu0 0.0
        %2156 = vmatprep.subr.mxu0 0.0
        %2157 = vmatpush1.msra.mxu0 0.0
        %2158 = vmatprep.subr.mxu0 0.0
        %2159 = vmatpush1.msra.mxu0 0.0
        %2160 = vmatprep.subr.mxu0 0.0
        %2161 = vmatpush1.msra.mxu0 0.0
        %2162 = vmatprep.subr.mxu0 0.0
        %2163 = vmatpush1.msra.mxu0 0.0
        %2164 = vmatprep.subr.mxu0 0.0
        %2165 = vmatpush1.msra.mxu0 0.0
        %2166 = vmatprep.subr.mxu0 0.0
        %2167 = vmatpush1.msra.mxu0 0.0
        %2168 = vmatprep.subr.mxu0 0.0
        %2169 = vmatpush1.msra.mxu0 0.0
        %2170 = vmatprep.subr.mxu0 0.0
        %2171 = vmatpush1.msra.mxu0 0.0
        %2172 = vmatprep.subr.mxu0 0.0
        %2173 = vmatpush1.msra.mxu0 0.0
        %2174 = vmatprep.mubr.f32.mxu0 0.0
        %2175 = vmatmul.mubr.f32.gmra.mrb[0].mxu0 %v1895
        %v2176 = vpop.f32.mrb[0].mxu0
        %v2177 = vadd.f32 %v1892, %v2176
        %v2178 = vpop.f32.mrb[0].mxu0
        %v2179 = vadd.f32 %v1892, %v2178
        %2180 = vdwg.mxu0
        %v2181 = vmax.f32 %v1964, 0.0
        %v2182 = vmax.f32 %v1966, 0.0
        %v2183 = vmax.f32 %v2035, 0.0
        %v2184 = vmax.f32 %v2037, 0.0
        %v2185 = vmax.f32 %v2106, 0.0
        %v2186 = vmax.f32 %v2108, 0.0
        %v2187 = vmax.f32 %v2177, 0.0
        %v2188 = vmax.f32 %v2179, 0.0
        %v2189 = vsel %vm256, 1, 0
        %v2190 = vsel %vm257, 1, 0
        %v2191 = vsel %vm258, 1, 0
        %v2192 = vsel %vm259, 1, 0
        %v2193 = vsel %vm260, 1, 0
        %v2194 = vsel %vm261, 1, 0
        %v2195 = vsel %vm262, 1, 0
        %v2196 = vsel %vm263, 1, 0
        %vm2197 = vcmp.eq.s32.totalorder %v2189, 1
        %vm2198 = vcmp.eq.s32.totalorder %v2190, 1
        %vm2199 = vcmp.eq.s32.totalorder %v2191, 1
        %vm2200 = vcmp.eq.s32.totalorder %v2192, 1
        %vm2201 = vcmp.eq.s32.totalorder %v2193, 1
        %vm2202 = vcmp.eq.s32.totalorder %v2194, 1
        %vm2203 = vcmp.eq.s32.totalorder %v2195, 1
        %vm2204 = vcmp.eq.s32.totalorder %v2196, 1
        %v2205 = vsel %vm2197, %v2181, 0.0
        %v2206 = vsel %vm2198, %v2182, 0.0
        %v2207 = vsel %vm2199, %v2183, 0.0
        %v2208 = vsel %vm2200, %v2184, 0.0
        %v2209 = vsel %vm2201, %v2185, 0.0
        %v2210 = vsel %vm2202, %v2186, 0.0
        %v2211 = vsel %vm2203, %v2187, 0.0
        %v2212 = vsel %vm2204, %v2188, 0.0
        %2213 = vrot.lane.b32.xlu0 %v2205, 2
        %v2214 = vpop.permute.xlu0 %2213
        %2215 = vrot.lane.b32.xlu0 %v2206, 2
        %v2216 = vpop.permute.xlu0 %2215
        %2217 = vrot.lane.b32.xlu0 %v2207, 2
        %v2218 = vpop.permute.xlu0 %2217
        %2219 = vrot.lane.b32.xlu0 %v2208, 2
        %v2220 = vpop.permute.xlu0 %2219
        %2221 = vrot.lane.b32.xlu0 %v2209, 2
        %v2222 = vpop.permute.xlu0 %2221
        %2223 = vrot.lane.b32.xlu0 %v2210, 2
        %v2224 = vpop.permute.xlu0 %2223
        %2225 = vrot.lane.b32.xlu0 %v2211, 2
        %v2226 = vpop.permute.xlu0 %2225
        %2227 = vrot.lane.b32.xlu0 %v2212, 2
        %v2228 = vpop.permute.xlu0 %2227
        %v2229 = vsel %vm895, %v2226, %v2228
        %v2230 = vsel %vm895, %v2224, %v2226
        %v2231 = vsel %vm895, %v2222, %v2224
        %v2232 = vsel %vm895, %v2220, %v2222
        %v2233 = vsel %vm895, %v2218, %v2220
        %v2234 = vsel %vm895, %v2216, %v2218
        %v2235 = vsel %vm895, %v2214, %v2216
        %v2236 = vsel %vm895, %v2228, %v2214
        %v2237 = vsel %vm920, %v2236, 0.0
        %v2238 = vsel %vm921, %v2235, 0.0
        %v2239 = vsel %vm922, %v2234, 0.0
        %v2240 = vsel %vm923, %v2233, 0.0
        %v2241 = vsel %vm924, %v2232, 0.0
        %v2242 = vsel %vm925, %v2231, 0.0
        %v2243 = vsel %vm926, %v2230, 0.0
        %v2244 = vsel %vm927, %v2229, 0.0
        %2245 = vrot.lane.b32.xlu0 %v2205, 126
        %v2246 = vpop.permute.xlu0 %2245
        %2247 = vrot.lane.b32.xlu0 %v2206, 126
        %v2248 = vpop.permute.xlu0 %2247
        %2249 = vrot.lane.b32.xlu0 %v2207, 126
        %v2250 = vpop.permute.xlu0 %2249
        %2251 = vrot.lane.b32.xlu0 %v2208, 126
        %v2252 = vpop.permute.xlu0 %2251
        %2253 = vrot.lane.b32.xlu0 %v2209, 126
        %v2254 = vpop.permute.xlu0 %2253
        %2255 = vrot.lane.b32.xlu0 %v2210, 126
        %v2256 = vpop.permute.xlu0 %2255
        %2257 = vrot.lane.b32.xlu0 %v2211, 126
        %v2258 = vpop.permute.xlu0 %2257
        %2259 = vrot.lane.b32.xlu0 %v2212, 126
        %v2260 = vpop.permute.xlu0 %2259
        %v2261 = vsel %vm976, %v2258, %v2260
        %v2262 = vsel %vm976, %v2256, %v2258
        %v2263 = vsel %vm976, %v2254, %v2256
        %v2264 = vsel %vm976, %v2252, %v2254
        %v2265 = vsel %vm976, %v2250, %v2252
        %v2266 = vsel %vm976, %v2248, %v2250
        %v2267 = vsel %vm976, %v2246, %v2248
        %v2268 = vsel %vm976, %v2260, %v2246
        %v2269 = vsel %vm1001, %v2267, 0.0
        %v2270 = vsel %vm1002, %v2266, 0.0
        %v2271 = vsel %vm1003, %v2265, 0.0
        %v2272 = vsel %vm1004, %v2264, 0.0
        %v2273 = vsel %vm1005, %v2263, 0.0
        %v2274 = vsel %vm1006, %v2262, 0.0
        %v2275 = vsel %vm1007, %v2261, 0.0
        %v2276 = vsel %vm1008, %v2268, 0.0
        %s2277 = scalar_lea.vmem %s1, 64
        %v2278 = vld [vmem:[%s2277] sm:$0xff]
        %s2279 = scalar_lea.vmem %s2, 64
        %v2280 = vld [vmem:[%s2279] sm:$0xff]
        %2282 = vset.pattern.permute.xlu0 0
        %2283 = vperm.xlu0 %2282, %v2280
        %v2284 = vpop.permute.xlu0 %2283
        %v2287 = vsel %vm1469, %v2278, 0
        %2289 = vmatprep.subr.mxu0 %v2238
        %2290 = vmatpush1.msra.mxu0 %v2237
        %2291 = vmatprep.subr.mxu0 %v2206
        %2292 = vmatpush1.msra.mxu0 %v2205
        %2293 = vmatprep.subr.mxu0 %v2270
        %2294 = vmatpush1.msra.mxu0 %v2269
        %2295 = vmatprep.subr.mxu0 0.0
        %2296 = vmatpush1.msra.mxu0 0.0
        %2297 = vmatprep.subr.mxu0 0.0
        %2298 = vmatpush1.msra.mxu0 0.0
        %2299 = vmatprep.subr.mxu0 0.0
        %2300 = vmatpush1.msra.mxu0 0.0
        %2301 = vmatprep.subr.mxu0 0.0
        %2302 = vmatpush1.msra.mxu0 0.0
        %2303 = vmatprep.subr.mxu0 0.0
        %2304 = vmatpush1.msra.mxu0 0.0
        %2305 = vmatprep.subr.mxu0 0.0
        %2306 = vmatpush1.msra.mxu0 0.0
        %2307 = vmatprep.subr.mxu0 0.0
        %2308 = vmatpush1.msra.mxu0 0.0
        %2309 = vmatprep.subr.mxu0 0.0
        %2310 = vmatpush1.msra.mxu0 0.0
        %2311 = vmatprep.subr.mxu0 0.0
        %2312 = vmatpush1.msra.mxu0 0.0
        %2313 = vmatprep.subr.mxu0 0.0
        %2314 = vmatpush1.msra.mxu0 0.0
        %2315 = vmatprep.subr.mxu0 0.0
        %2316 = vmatpush1.msra.mxu0 0.0
        %2317 = vmatprep.subr.mxu0 0.0
        %2318 = vmatpush1.msra.mxu0 0.0
        %2319 = vmatprep.subr.mxu0 0.0
        %2320 = vmatpush1.msra.mxu0 0.0
        %2321 = vmatprep.subr.mxu0 0.0
        %2322 = vmatpush1.msra.mxu0 0.0
        %2323 = vmatprep.subr.mxu0 0.0
        %2324 = vmatpush1.msra.mxu0 0.0
        %2325 = vmatprep.subr.mxu0 0.0
        %2326 = vmatpush1.msra.mxu0 0.0
        %2327 = vmatprep.subr.mxu0 0.0
        %2328 = vmatpush1.msra.mxu0 0.0
        %2329 = vmatprep.subr.mxu0 0.0
        %2330 = vmatpush1.msra.mxu0 0.0
        %2331 = vmatprep.subr.mxu0 0.0
        %2332 = vmatpush1.msra.mxu0 0.0
        %2333 = vmatprep.subr.mxu0 0.0
        %2334 = vmatpush1.msra.mxu0 0.0
        %2335 = vmatprep.subr.mxu0 0.0
        %2336 = vmatpush1.msra.mxu0 0.0
        %2337 = vmatprep.subr.mxu0 0.0
        %2338 = vmatpush1.msra.mxu0 0.0
        %2339 = vmatprep.subr.mxu0 0.0
        %2340 = vmatpush1.msra.mxu0 0.0
        %2341 = vmatprep.subr.mxu0 0.0
        %2342 = vmatpush1.msra.mxu0 0.0
        %2343 = vmatprep.subr.mxu0 0.0
        %2344 = vmatpush1.msra.mxu0 0.0
        %2345 = vmatprep.subr.mxu0 0.0
        %2346 = vmatpush1.msra.mxu0 0.0
        %2347 = vmatprep.subr.mxu0 0.0
        %2348 = vmatpush1.msra.mxu0 0.0
        %2349 = vmatprep.subr.mxu0 0.0
        %2350 = vmatpush1.msra.mxu0 0.0
        %2351 = vmatprep.subr.mxu0 0.0
        %2352 = vmatpush1.msra.mxu0 0.0
        %2353 = vmatprep.mubr.f32.mxu0 0.0
        %2354 = vmatmul.mubr.f32.gmra.mrb[0].mxu0 %v2287
        %v2355 = vpop.f32.mrb[0].mxu0
        %v2356 = vadd.f32 %v2284, %v2355
        %v2357 = vpop.f32.mrb[0].mxu0
        %v2358 = vadd.f32 %v2284, %v2357
        %2359 = vdwg.mxu0
        %2360 = vmatprep.subr.mxu0 %v2240
        %2361 = vmatpush1.msra.mxu0 %v2239
        %2362 = vmatprep.subr.mxu0 %v2208
        %2363 = vmatpush1.msra.mxu0 %v2207
        %2364 = vmatprep.subr.mxu0 %v2272
        %2365 = vmatpush1.msra.mxu0 %v2271
        %2366 = vmatprep.subr.mxu0 0.0
        %2367 = vmatpush1.msra.mxu0 0.0
        %2368 = vmatprep.subr.mxu0 0.0
        %2369 = vmatpush1.msra.mxu0 0.0
        %2370 = vmatprep.subr.mxu0 0.0
        %2371 = vmatpush1.msra.mxu0 0.0
        %2372 = vmatprep.subr.mxu0 0.0
        %2373 = vmatpush1.msra.mxu0 0.0
        %2374 = vmatprep.subr.mxu0 0.0
        %2375 = vmatpush1.msra.mxu0 0.0
        %2376 = vmatprep.subr.mxu0 0.0
        %2377 = vmatpush1.msra.mxu0 0.0
        %2378 = vmatprep.subr.mxu0 0.0
        %2379 = vmatpush1.msra.mxu0 0.0
        %2380 = vmatprep.subr.mxu0 0.0
        %2381 = vmatpush1.msra.mxu0 0.0
        %2382 = vmatprep.subr.mxu0 0.0
        %2383 = vmatpush1.msra.mxu0 0.0
        %2384 = vmatprep.subr.mxu0 0.0
        %2385 = vmatpush1.msra.mxu0 0.0
        %2386 = vmatprep.subr.mxu0 0.0
        %2387 = vmatpush1.msra.mxu0 0.0
        %2388 = vmatprep.subr.mxu0 0.0
        %2389 = vmatpush1.msra.mxu0 0.0
        %2390 = vmatprep.subr.mxu0 0.0
        %2391 = vmatpush1.msra.mxu0 0.0
        %2392 = vmatprep.subr.mxu0 0.0
        %2393 = vmatpush1.msra.mxu0 0.0
        %2394 = vmatprep.subr.mxu0 0.0
        %2395 = vmatpush1.msra.mxu0 0.0
        %2396 = vmatprep.subr.mxu0 0.0
        %2397 = vmatpush1.msra.mxu0 0.0
        %2398 = vmatprep.subr.mxu0 0.0
        %2399 = vmatpush1.msra.mxu0 0.0
        %2400 = vmatprep.subr.mxu0 0.0
        %2401 = vmatpush1.msra.mxu0 0.0
        %2402 = vmatprep.subr.mxu0 0.0
        %2403 = vmatpush1.msra.mxu0 0.0
        %2404 = vmatprep.subr.mxu0 0.0
        %2405 = vmatpush1.msra.mxu0 0.0
        %2406 = vmatprep.subr.mxu0 0.0
        %2407 = vmatpush1.msra.mxu0 0.0
        %2408 = vmatprep.subr.mxu0 0.0
        %2409 = vmatpush1.msra.mxu0 0.0
        %2410 = vmatprep.subr.mxu0 0.0
        %2411 = vmatpush1.msra.mxu0 0.0
        %2412 = vmatprep.subr.mxu0 0.0
        %2413 = vmatpush1.msra.mxu0 0.0
        %2414 = vmatprep.subr.mxu0 0.0
        %2415 = vmatpush1.msra.mxu0 0.0
        %2416 = vmatprep.subr.mxu0 0.0
        %2417 = vmatpush1.msra.mxu0 0.0
        %2418 = vmatprep.subr.mxu0 0.0
        %2419 = vmatpush1.msra.mxu0 0.0
        %2420 = vmatprep.subr.mxu0 0.0
        %2421 = vmatpush1.msra.mxu0 0.0
        %2422 = vmatprep.subr.mxu0 0.0
        %2423 = vmatpush1.msra.mxu0 0.0
        %2424 = vmatprep.mubr.f32.mxu0 0.0
        %2425 = vmatmul.mubr.f32.gmra.mrb[0].mxu0 %v2287
        %v2426 = vpop.f32.mrb[0].mxu0
        %v2427 = vadd.f32 %v2284, %v2426
        %v2428 = vpop.f32.mrb[0].mxu0
        %v2429 = vadd.f32 %v2284, %v2428
        %2430 = vdwg.mxu0
        %2431 = vmatprep.subr.mxu0 %v2242
        %2432 = vmatpush1.msra.mxu0 %v2241
        %2433 = vmatprep.subr.mxu0 %v2210
        %2434 = vmatpush1.msra.mxu0 %v2209
        %2435 = vmatprep.subr.mxu0 %v2274
        %2436 = vmatpush1.msra.mxu0 %v2273
        %2437 = vmatprep.subr.mxu0 0.0
        %2438 = vmatpush1.msra.mxu0 0.0
        %2439 = vmatprep.subr.mxu0 0.0
        %2440 = vmatpush1.msra.mxu0 0.0
        %2441 = vmatprep.subr.mxu0 0.0
        %2442 = vmatpush1.msra.mxu0 0.0
        %2443 = vmatprep.subr.mxu0 0.0
        %2444 = vmatpush1.msra.mxu0 0.0
        %2445 = vmatprep.subr.mxu0 0.0
        %2446 = vmatpush1.msra.mxu0 0.0
        %2447 = vmatprep.subr.mxu0 0.0
        %2448 = vmatpush1.msra.mxu0 0.0
        %2449 = vmatprep.subr.mxu0 0.0
        %2450 = vmatpush1.msra.mxu0 0.0
        %2451 = vmatprep.subr.mxu0 0.0
        %2452 = vmatpush1.msra.mxu0 0.0
        %2453 = vmatprep.subr.mxu0 0.0
        %2454 = vmatpush1.msra.mxu0 0.0
        %2455 = vmatprep.subr.mxu0 0.0
        %2456 = vmatpush1.msra.mxu0 0.0
        %2457 = vmatprep.subr.mxu0 0.0
        %2458 = vmatpush1.msra.mxu0 0.0
        %2459 = vmatprep.subr.mxu0 0.0
        %2460 = vmatpush1.msra.mxu0 0.0
        %2461 = vmatprep.subr.mxu0 0.0
        %2462 = vmatpush1.msra.mxu0 0.0
        %2463 = vmatprep.subr.mxu0 0.0
        %2464 = vmatpush1.msra.mxu0 0.0
        %2465 = vmatprep.subr.mxu0 0.0
        %2466 = vmatpush1.msra.mxu0 0.0
        %2467 = vmatprep.subr.mxu0 0.0
        %2468 = vmatpush1.msra.mxu0 0.0
        %2469 = vmatprep.subr.mxu0 0.0
        %2470 = vmatpush1.msra.mxu0 0.0
        %2471 = vmatprep.subr.mxu0 0.0
        %2472 = vmatpush1.msra.mxu0 0.0
        %2473 = vmatprep.subr.mxu0 0.0
        %2474 = vmatpush1.msra.mxu0 0.0
        %2475 = vmatprep.subr.mxu0 0.0
        %2476 = vmatpush1.msra.mxu0 0.0
        %2477 = vmatprep.subr.mxu0 0.0
        %2478 = vmatpush1.msra.mxu0 0.0
        %2479 = vmatprep.subr.mxu0 0.0
        %2480 = vmatpush1.msra.mxu0 0.0
        %2481 = vmatprep.subr.mxu0 0.0
        %2482 = vmatpush1.msra.mxu0 0.0
        %2483 = vmatprep.subr.mxu0 0.0
        %2484 = vmatpush1.msra.mxu0 0.0
        %2485 = vmatprep.subr.mxu0 0.0
        %2486 = vmatpush1.msra.mxu0 0.0
        %2487 = vmatprep.subr.mxu0 0.0
        %2488 = vmatpush1.msra.mxu0 0.0
        %2489 = vmatprep.subr.mxu0 0.0
        %2490 = vmatpush1.msra.mxu0 0.0
        %2491 = vmatprep.subr.mxu0 0.0
        %2492 = vmatpush1.msra.mxu0 0.0
        %2493 = vmatprep.subr.mxu0 0.0
        %2494 = vmatpush1.msra.mxu0 0.0
        %2495 = vmatprep.mubr.f32.mxu0 0.0
        %2496 = vmatmul.mubr.f32.gmra.mrb[0].mxu0 %v2287
        %v2497 = vpop.f32.mrb[0].mxu0
        %v2498 = vadd.f32 %v2284, %v2497
        %v2499 = vpop.f32.mrb[0].mxu0
        %v2500 = vadd.f32 %v2284, %v2499
        %2501 = vdwg.mxu0
        %2502 = vmatprep.subr.mxu0 %v2244
        %2503 = vmatpush1.msra.mxu0 %v2243
        %2504 = vmatprep.subr.mxu0 %v2212
        %2505 = vmatpush1.msra.mxu0 %v2211
        %2506 = vmatprep.subr.mxu0 %v2276
        %2507 = vmatpush1.msra.mxu0 %v2275
        %2508 = vmatprep.subr.mxu0 0.0
        %2509 = vmatpush1.msra.mxu0 0.0
        %2510 = vmatprep.subr.mxu0 0.0
        %2511 = vmatpush1.msra.mxu0 0.0
        %2512 = vmatprep.subr.mxu0 0.0
        %2513 = vmatpush1.msra.mxu0 0.0
        %2514 = vmatprep.subr.mxu0 0.0
        %2515 = vmatpush1.msra.mxu0 0.0
        %2516 = vmatprep.subr.mxu0 0.0
        %2517 = vmatpush1.msra.mxu0 0.0
        %2518 = vmatprep.subr.mxu0 0.0
        %2519 = vmatpush1.msra.mxu0 0.0
        %2520 = vmatprep.subr.mxu0 0.0
        %2521 = vmatpush1.msra.mxu0 0.0
        %2522 = vmatprep.subr.mxu0 0.0
        %2523 = vmatpush1.msra.mxu0 0.0
        %2524 = vmatprep.subr.mxu0 0.0
        %2525 = vmatpush1.msra.mxu0 0.0
        %2526 = vmatprep.subr.mxu0 0.0
        %2527 = vmatpush1.msra.mxu0 0.0
        %2528 = vmatprep.subr.mxu0 0.0
        %2529 = vmatpush1.msra.mxu0 0.0
        %2530 = vmatprep.subr.mxu0 0.0
        %2531 = vmatpush1.msra.mxu0 0.0
        %2532 = vmatprep.subr.mxu0 0.0
        %2533 = vmatpush1.msra.mxu0 0.0
        %2534 = vmatprep.subr.mxu0 0.0
        %2535 = vmatpush1.msra.mxu0 0.0
        %2536 = vmatprep.subr.mxu0 0.0
        %2537 = vmatpush1.msra.mxu0 0.0
        %2538 = vmatprep.subr.mxu0 0.0
        %2539 = vmatpush1.msra.mxu0 0.0
        %2540 = vmatprep.subr.mxu0 0.0
        %2541 = vmatpush1.msra.mxu0 0.0
        %2542 = vmatprep.subr.mxu0 0.0
        %2543 = vmatpush1.msra.mxu0 0.0
        %2544 = vmatprep.subr.mxu0 0.0
        %2545 = vmatpush1.msra.mxu0 0.0
        %2546 = vmatprep.subr.mxu0 0.0
        %2547 = vmatpush1.msra.mxu0 0.0
        %2548 = vmatprep.subr.mxu0 0.0
        %2549 = vmatpush1.msra.mxu0 0.0
        %2550 = vmatprep.subr.mxu0 0.0
        %2551 = vmatpush1.msra.mxu0 0.0
        %2552 = vmatprep.subr.mxu0 0.0
        %2553 = vmatpush1.msra.mxu0 0.0
        %2554 = vmatprep.subr.mxu0 0.0
        %2555 = vmatpush1.msra.mxu0 0.0
        %2556 = vmatprep.subr.mxu0 0.0
        %2557 = vmatpush1.msra.mxu0 0.0
        %2558 = vmatprep.subr.mxu0 0.0
        %2559 = vmatpush1.msra.mxu0 0.0
        %2560 = vmatprep.subr.mxu0 0.0
        %2561 = vmatpush1.msra.mxu0 0.0
        %2562 = vmatprep.subr.mxu0 0.0
        %2563 = vmatpush1.msra.mxu0 0.0
        %2564 = vmatprep.subr.mxu0 0.0
        %2565 = vmatpush1.msra.mxu0 0.0
        %2566 = vmatprep.mubr.f32.mxu0 0.0
        %2567 = vmatmul.mubr.f32.gmra.mrb[0].mxu0 %v2287
        %v2568 = vpop.f32.mrb[0].mxu0
        %v2569 = vadd.f32 %v2284, %v2568
        %v2570 = vpop.f32.mrb[0].mxu0
        %v2571 = vadd.f32 %v2284, %v2570
        %2572 = vdwg.mxu0
        %v2573 = vmax.f32 %v2356, 0.0
        %v2574 = vmax.f32 %v2358, 0.0
        %v2575 = vmax.f32 %v2427, 0.0
        %v2576 = vmax.f32 %v2429, 0.0
        %v2577 = vmax.f32 %v2498, 0.0
        %v2578 = vmax.f32 %v2500, 0.0
        %v2579 = vmax.f32 %v2569, 0.0
        %v2580 = vmax.f32 %v2571, 0.0
        %v2581 = vsel %vm240, 1, 0
        %v2582 = vsel %vm241, 1, 0
        %v2583 = vsel %vm242, 1, 0
        %v2584 = vsel %vm243, 1, 0
        %v2585 = vsel %vm244, 1, 0
        %v2586 = vsel %vm245, 1, 0
        %v2587 = vsel %vm246, 1, 0
        %v2588 = vsel %vm247, 1, 0
        %vm2589 = vcmp.eq.s32.totalorder %v2581, 1
        %vm2590 = vcmp.eq.s32.totalorder %v2582, 1
        %vm2591 = vcmp.eq.s32.totalorder %v2583, 1
        %vm2592 = vcmp.eq.s32.totalorder %v2584, 1
        %vm2593 = vcmp.eq.s32.totalorder %v2585, 1
        %vm2594 = vcmp.eq.s32.totalorder %v2586, 1
        %vm2595 = vcmp.eq.s32.totalorder %v2587, 1
        %vm2596 = vcmp.eq.s32.totalorder %v2588, 1
        %v2597 = vsel %vm2589, %v2573, 0.0
        %v2598 = vsel %vm2590, %v2574, 0.0
        %v2599 = vsel %vm2591, %v2575, 0.0
        %v2600 = vsel %vm2592, %v2576, 0.0
        %v2601 = vsel %vm2593, %v2577, 0.0
        %v2602 = vsel %vm2594, %v2578, 0.0
        %v2603 = vsel %vm2595, %v2579, 0.0
        %v2604 = vsel %vm2596, %v2580, 0.0
        %2605 = vrot.lane.b32.xlu0 %v2597, 1
        %v2606 = vpop.permute.xlu0 %2605
        %2607 = vrot.lane.b32.xlu0 %v2598, 1
        %v2608 = vpop.permute.xlu0 %2607
        %2609 = vrot.lane.b32.xlu0 %v2599, 1
        %v2610 = vpop.permute.xlu0 %2609
        %2611 = vrot.lane.b32.xlu0 %v2600, 1
        %v2612 = vpop.permute.xlu0 %2611
        %2613 = vrot.lane.b32.xlu0 %v2601, 1
        %v2614 = vpop.permute.xlu0 %2613
        %2615 = vrot.lane.b32.xlu0 %v2602, 1
        %v2616 = vpop.permute.xlu0 %2615
        %2617 = vrot.lane.b32.xlu0 %v2603, 1
        %v2618 = vpop.permute.xlu0 %2617
        %2619 = vrot.lane.b32.xlu0 %v2604, 1
        %v2620 = vpop.permute.xlu0 %2619
        %v2621 = vsel %vm337, %v2618, %v2620
        %v2622 = vsel %vm337, %v2616, %v2618
        %v2623 = vsel %vm337, %v2614, %v2616
        %v2624 = vsel %vm337, %v2612, %v2614
        %v2625 = vsel %vm337, %v2610, %v2612
        %v2626 = vsel %vm337, %v2608, %v2610
        %v2627 = vsel %vm337, %v2606, %v2608
        %v2628 = vsel %vm337, %v2620, %v2606
        %v2629 = vsel %vm184, 1, 0
        %v2630 = vsel %vm185, 1, 0
        %v2631 = vsel %vm186, 1, 0
        %v2632 = vsel %vm187, 1, 0
        %v2633 = vsel %vm188, 1, 0
        %v2634 = vsel %vm189, 1, 0
        %v2635 = vsel %vm190, 1, 0
        %v2636 = vsel %vm191, 1, 0
        %vm2637 = vcmp.eq.s32.totalorder %v2629, 1
        %vm2638 = vcmp.eq.s32.totalorder %v2630, 1
        %vm2639 = vcmp.eq.s32.totalorder %v2631, 1
        %vm2640 = vcmp.eq.s32.totalorder %v2632, 1
        %vm2641 = vcmp.eq.s32.totalorder %v2633, 1
        %vm2642 = vcmp.eq.s32.totalorder %v2634, 1
        %vm2643 = vcmp.eq.s32.totalorder %v2635, 1
        %vm2644 = vcmp.eq.s32.totalorder %v2636, 1
        %v2645 = vsel %vm2637, %v2628, 0.0
        %v2646 = vsel %vm2638, %v2627, 0.0
        %v2647 = vsel %vm2639, %v2626, 0.0
        %v2648 = vsel %vm2640, %v2625, 0.0
        %v2649 = vsel %vm2641, %v2624, 0.0
        %v2650 = vsel %vm2642, %v2623, 0.0
        %v2651 = vsel %vm2643, %v2622, 0.0
        %v2652 = vsel %vm2644, %v2621, 0.0
        %2653 = vrot.lane.b32.xlu0 %v2597, 127
        %v2654 = vpop.permute.xlu0 %2653
        %2655 = vrot.lane.b32.xlu0 %v2598, 127
        %v2656 = vpop.permute.xlu0 %2655
        %2657 = vrot.lane.b32.xlu0 %v2599, 127
        %v2658 = vpop.permute.xlu0 %2657
        %2659 = vrot.lane.b32.xlu0 %v2600, 127
        %v2660 = vpop.permute.xlu0 %2659
        %2661 = vrot.lane.b32.xlu0 %v2601, 127
        %v2662 = vpop.permute.xlu0 %2661
        %2663 = vrot.lane.b32.xlu0 %v2602, 127
        %v2664 = vpop.permute.xlu0 %2663
        %2665 = vrot.lane.b32.xlu0 %v2603, 127
        %v2666 = vpop.permute.xlu0 %2665
        %2667 = vrot.lane.b32.xlu0 %v2604, 127
        %v2668 = vpop.permute.xlu0 %2667
        %v2669 = vsel %vm370, %v2666, %v2668
        %v2670 = vsel %vm370, %v2664, %v2666
        %v2671 = vsel %vm370, %v2662, %v2664
        %v2672 = vsel %vm370, %v2660, %v2662
        %v2673 = vsel %vm370, %v2658, %v2660
        %v2674 = vsel %vm370, %v2656, %v2658
        %v2675 = vsel %vm370, %v2654, %v2656
        %v2676 = vsel %vm370, %v2668, %v2654
        %v2677 = vsel %vm208, 1, 0
        %v2678 = vsel %vm209, 1, 0
        %v2679 = vsel %vm210, 1, 0
        %v2680 = vsel %vm211, 1, 0
        %v2681 = vsel %vm212, 1, 0
        %v2682 = vsel %vm213, 1, 0
        %v2683 = vsel %vm214, 1, 0
        %v2684 = vsel %vm215, 1, 0
        %vm2685 = vcmp.eq.s32.totalorder %v2677, 1
        %vm2686 = vcmp.eq.s32.totalorder %v2678, 1
        %vm2687 = vcmp.eq.s32.totalorder %v2679, 1
        %vm2688 = vcmp.eq.s32.totalorder %v2680, 1
        %vm2689 = vcmp.eq.s32.totalorder %v2681, 1
        %vm2690 = vcmp.eq.s32.totalorder %v2682, 1
        %vm2691 = vcmp.eq.s32.totalorder %v2683, 1
        %vm2692 = vcmp.eq.s32.totalorder %v2684, 1
        %v2693 = vsel %vm2685, %v2675, 0.0
        %v2694 = vsel %vm2686, %v2674, 0.0
        %v2695 = vsel %vm2687, %v2673, 0.0
        %v2696 = vsel %vm2688, %v2672, 0.0
        %v2697 = vsel %vm2689, %v2671, 0.0
        %v2698 = vsel %vm2690, %v2670, 0.0
        %v2699 = vsel %vm2691, %v2669, 0.0
        %v2700 = vsel %vm2692, %v2676, 0.0
        %s2701 = scalar_lea.vmem %s1, 80
        %v2702 = vld [vmem:[%s2701] sm:$0xff]
        %v2703 = vld [vmem:[%s2701 + $0x8] sm:$0xff]
        %s2704 = scalar_lea.vmem %s2, 80
        %v2705 = vld [vmem:[%s2704] sm:$0xff]
        %v2706 = vld [vmem:[%s2704 + $0x8] sm:$0xff]
        %2708 = vset.pattern.permute.xlu0 0
        %2709 = vperm.xlu0 %2708, %v2705
        %v2710 = vpop.permute.xlu0 %2709
        %2713 = vset.pattern.permute.xlu0 0
        %2714 = vperm.xlu0 %2713, %v2706
        %v2715 = vpop.permute.xlu0 %2714
        %v2718 = vsel %vm1469, %v2702, 0
        %v2721 = vsel %vm1469, %v2703, 0
        %2723 = vmatprep.subr.mxu0 %v2646
        %2724 = vmatpush1.msra.mxu0 %v2645
        %2725 = vmatprep.subr.mxu0 %v2598
        %2726 = vmatpush1.msra.mxu0 %v2597
        %2727 = vmatprep.subr.mxu0 %v2694
        %2728 = vmatpush1.msra.mxu0 %v2693
        %2729 = vmatprep.subr.mxu0 0.0
        %2730 = vmatpush1.msra.mxu0 0.0
        %2731 = vmatprep.subr.mxu0 0.0
        %2732 = vmatpush1.msra.mxu0 0.0
        %2733 = vmatprep.subr.mxu0 0.0
        %2734 = vmatpush1.msra.mxu0 0.0
        %2735 = vmatprep.subr.mxu0 0.0
        %2736 = vmatpush1.msra.mxu0 0.0
        %2737 = vmatprep.subr.mxu0 0.0
        %2738 = vmatpush1.msra.mxu0 0.0
        %2739 = vmatprep.subr.mxu0 0.0
        %2740 = vmatpush1.msra.mxu0 0.0
        %2741 = vmatprep.subr.mxu0 0.0
        %2742 = vmatpush1.msra.mxu0 0.0
        %2743 = vmatprep.subr.mxu0 0.0
        %2744 = vmatpush1.msra.mxu0 0.0
        %2745 = vmatprep.subr.mxu0 0.0
        %2746 = vmatpush1.msra.mxu0 0.0
        %2747 = vmatprep.subr.mxu0 0.0
        %2748 = vmatpush1.msra.mxu0 0.0
        %2749 = vmatprep.subr.mxu0 0.0
        %2750 = vmatpush1.msra.mxu0 0.0
        %2751 = vmatprep.subr.mxu0 0.0
        %2752 = vmatpush1.msra.mxu0 0.0
        %2753 = vmatprep.subr.mxu0 0.0
        %2754 = vmatpush1.msra.mxu0 0.0
        %2755 = vmatprep.subr.mxu0 0.0
        %2756 = vmatpush1.msra.mxu0 0.0
        %2757 = vmatprep.subr.mxu0 0.0
        %2758 = vmatpush1.msra.mxu0 0.0
        %2759 = vmatprep.subr.mxu0 0.0
        %2760 = vmatpush1.msra.mxu0 0.0
        %2761 = vmatprep.subr.mxu0 0.0
        %2762 = vmatpush1.msra.mxu0 0.0
        %2763 = vmatprep.subr.mxu0 0.0
        %2764 = vmatpush1.msra.mxu0 0.0
        %2765 = vmatprep.subr.mxu0 0.0
        %2766 = vmatpush1.msra.mxu0 0.0
        %2767 = vmatprep.subr.mxu0 0.0
        %2768 = vmatpush1.msra.mxu0 0.0
        %2769 = vmatprep.subr.mxu0 0.0
        %2770 = vmatpush1.msra.mxu0 0.0
        %2771 = vmatprep.subr.mxu0 0.0
        %2772 = vmatpush1.msra.mxu0 0.0
        %2773 = vmatprep.subr.mxu0 0.0
        %2774 = vmatpush1.msra.mxu0 0.0
        %2775 = vmatprep.subr.mxu0 0.0
        %2776 = vmatpush1.msra.mxu0 0.0
        %2777 = vmatprep.subr.mxu0 0.0
        %2778 = vmatpush1.msra.mxu0 0.0
        %2779 = vmatprep.subr.mxu0 0.0
        %2780 = vmatpush1.msra.mxu0 0.0
        %2781 = vmatprep.subr.mxu0 0.0
        %2782 = vmatpush1.msra.mxu0 0.0
        %2783 = vmatprep.subr.mxu0 0.0
        %2784 = vmatpush1.msra.mxu0 0.0
        %2785 = vmatprep.subr.mxu0 0.0
        %2786 = vmatpush1.msra.mxu0 0.0
        %2787 = vmatprep.mubr.f32.mxu0 0.0
        %2788 = vmatmul.mubr.f32.gmra.mrb[0].mxu0 %v2718
        %v2789 = vpop.f32.mrb[0].mxu0
        %v2790 = vadd.f32 %v2710, %v2789
        %v2791 = vpop.f32.mrb[0].mxu0
        %v2792 = vadd.f32 %v2710, %v2791
        %2793 = vmatprep.mubr.f32.mxu0 0.0
        %2794 = vmatmul.mubr.f32.gmra.mrb[0].mxu0 %v2721
        %v2795 = vpop.f32.mrb[0].mxu0
        %v2796 = vadd.f32 %v2715, %v2795
        %v2797 = vpop.f32.mrb[0].mxu0
        %v2798 = vadd.f32 %v2715, %v2797
        %2799 = vdwg.mxu0
        %2800 = vmatprep.subr.mxu0 %v2648
        %2801 = vmatpush1.msra.mxu0 %v2647
        %2802 = vmatprep.subr.mxu0 %v2600
        %2803 = vmatpush1.msra.mxu0 %v2599
        %2804 = vmatprep.subr.mxu0 %v2696
        %2805 = vmatpush1.msra.mxu0 %v2695
        %2806 = vmatprep.subr.mxu0 0.0
        %2807 = vmatpush1.msra.mxu0 0.0
        %2808 = vmatprep.subr.mxu0 0.0
        %2809 = vmatpush1.msra.mxu0 0.0
        %2810 = vmatprep.subr.mxu0 0.0
        %2811 = vmatpush1.msra.mxu0 0.0
        %2812 = vmatprep.subr.mxu0 0.0
        %2813 = vmatpush1.msra.mxu0 0.0
        %2814 = vmatprep.subr.mxu0 0.0
        %2815 = vmatpush1.msra.mxu0 0.0
        %2816 = vmatprep.subr.mxu0 0.0
        %2817 = vmatpush1.msra.mxu0 0.0
        %2818 = vmatprep.subr.mxu0 0.0
        %2819 = vmatpush1.msra.mxu0 0.0
        %2820 = vmatprep.subr.mxu0 0.0
        %2821 = vmatpush1.msra.mxu0 0.0
        %2822 = vmatprep.subr.mxu0 0.0
        %2823 = vmatpush1.msra.mxu0 0.0
        %2824 = vmatprep.subr.mxu0 0.0
        %2825 = vmatpush1.msra.mxu0 0.0
        %2826 = vmatprep.subr.mxu0 0.0
        %2827 = vmatpush1.msra.mxu0 0.0
        %2828 = vmatprep.subr.mxu0 0.0
        %2829 = vmatpush1.msra.mxu0 0.0
        %2830 = vmatprep.subr.mxu0 0.0
        %2831 = vmatpush1.msra.mxu0 0.0
        %2832 = vmatprep.subr.mxu0 0.0
        %2833 = vmatpush1.msra.mxu0 0.0
        %2834 = vmatprep.subr.mxu0 0.0
        %2835 = vmatpush1.msra.mxu0 0.0
        %2836 = vmatprep.subr.mxu0 0.0
        %2837 = vmatpush1.msra.mxu0 0.0
        %2838 = vmatprep.subr.mxu0 0.0
        %2839 = vmatpush1.msra.mxu0 0.0
        %2840 = vmatprep.subr.mxu0 0.0
        %2841 = vmatpush1.msra.mxu0 0.0
        %2842 = vmatprep.subr.mxu0 0.0
        %2843 = vmatpush1.msra.mxu0 0.0
        %2844 = vmatprep.subr.mxu0 0.0
        %2845 = vmatpush1.msra.mxu0 0.0
        %2846 = vmatprep.subr.mxu0 0.0
        %2847 = vmatpush1.msra.mxu0 0.0
        %2848 = vmatprep.subr.mxu0 0.0
        %2849 = vmatpush1.msra.mxu0 0.0
        %2850 = vmatprep.subr.mxu0 0.0
        %2851 = vmatpush1.msra.mxu0 0.0
        %2852 = vmatprep.subr.mxu0 0.0
        %2853 = vmatpush1.msra.mxu0 0.0
        %2854 = vmatprep.subr.mxu0 0.0
        %2855 = vmatpush1.msra.mxu0 0.0
        %2856 = vmatprep.subr.mxu0 0.0
        %2857 = vmatpush1.msra.mxu0 0.0
        %2858 = vmatprep.subr.mxu0 0.0
        %2859 = vmatpush1.msra.mxu0 0.0
        %2860 = vmatprep.subr.mxu0 0.0
        %2861 = vmatpush1.msra.mxu0 0.0
        %2862 = vmatprep.subr.mxu0 0.0
        %2863 = vmatpush1.msra.mxu0 0.0
        %2864 = vmatprep.mubr.f32.mxu0 0.0
        %2865 = vmatmul.mubr.f32.gmra.mrb[0].mxu0 %v2718
        %v2866 = vpop.f32.mrb[0].mxu0
        %v2867 = vadd.f32 %v2710, %v2866
        %v2868 = vpop.f32.mrb[0].mxu0
        %v2869 = vadd.f32 %v2710, %v2868
        %2870 = vmatprep.mubr.f32.mxu0 0.0
        %2871 = vmatmul.mubr.f32.gmra.mrb[0].mxu0 %v2721
        %v2872 = vpop.f32.mrb[0].mxu0
        %v2873 = vadd.f32 %v2715, %v2872
        %v2874 = vpop.f32.mrb[0].mxu0
        %v2875 = vadd.f32 %v2715, %v2874
        %2876 = vdwg.mxu0
        %2877 = vmatprep.subr.mxu0 %v2650
        %2878 = vmatpush1.msra.mxu0 %v2649
        %2879 = vmatprep.subr.mxu0 %v2602
        %2880 = vmatpush1.msra.mxu0 %v2601
        %2881 = vmatprep.subr.mxu0 %v2698
        %2882 = vmatpush1.msra.mxu0 %v2697
        %2883 = vmatprep.subr.mxu0 0.0
        %2884 = vmatpush1.msra.mxu0 0.0
        %2885 = vmatprep.subr.mxu0 0.0
        %2886 = vmatpush1.msra.mxu0 0.0
        %2887 = vmatprep.subr.mxu0 0.0
        %2888 = vmatpush1.msra.mxu0 0.0
        %2889 = vmatprep.subr.mxu0 0.0
        %2890 = vmatpush1.msra.mxu0 0.0
        %2891 = vmatprep.subr.mxu0 0.0
        %2892 = vmatpush1.msra.mxu0 0.0
        %2893 = vmatprep.subr.mxu0 0.0
        %2894 = vmatpush1.msra.mxu0 0.0
        %2895 = vmatprep.subr.mxu0 0.0
        %2896 = vmatpush1.msra.mxu0 0.0
        %2897 = vmatprep.subr.mxu0 0.0
        %2898 = vmatpush1.msra.mxu0 0.0
        %2899 = vmatprep.subr.mxu0 0.0
        %2900 = vmatpush1.msra.mxu0 0.0
        %2901 = vmatprep.subr.mxu0 0.0
        %2902 = vmatpush1.msra.mxu0 0.0
        %2903 = vmatprep.subr.mxu0 0.0
        %2904 = vmatpush1.msra.mxu0 0.0
        %2905 = vmatprep.subr.mxu0 0.0
        %2906 = vmatpush1.msra.mxu0 0.0
        %2907 = vmatprep.subr.mxu0 0.0
        %2908 = vmatpush1.msra.mxu0 0.0
        %2909 = vmatprep.subr.mxu0 0.0
        %2910 = vmatpush1.msra.mxu0 0.0
        %2911 = vmatprep.subr.mxu0 0.0
        %2912 = vmatpush1.msra.mxu0 0.0
        %2913 = vmatprep.subr.mxu0 0.0
        %2914 = vmatpush1.msra.mxu0 0.0
        %2915 = vmatprep.subr.mxu0 0.0
        %2916 = vmatpush1.msra.mxu0 0.0
        %2917 = vmatprep.subr.mxu0 0.0
        %2918 = vmatpush1.msra.mxu0 0.0
        %2919 = vmatprep.subr.mxu0 0.0
        %2920 = vmatpush1.msra.mxu0 0.0
        %2921 = vmatprep.subr.mxu0 0.0
        %2922 = vmatpush1.msra.mxu0 0.0
        %2923 = vmatprep.subr.mxu0 0.0
        %2924 = vmatpush1.msra.mxu0 0.0
        %2925 = vmatprep.subr.mxu0 0.0
        %2926 = vmatpush1.msra.mxu0 0.0
        %2927 = vmatprep.subr.mxu0 0.0
        %2928 = vmatpush1.msra.mxu0 0.0
        %2929 = vmatprep.subr.mxu0 0.0
        %2930 = vmatpush1.msra.mxu0 0.0
        %2931 = vmatprep.subr.mxu0 0.0
        %2932 = vmatpush1.msra.mxu0 0.0
        %2933 = vmatprep.subr.mxu0 0.0
        %2934 = vmatpush1.msra.mxu0 0.0
        %2935 = vmatprep.subr.mxu0 0.0
        %2936 = vmatpush1.msra.mxu0 0.0
        %2937 = vmatprep.subr.mxu0 0.0
        %2938 = vmatpush1.msra.mxu0 0.0
        %2939 = vmatprep.subr.mxu0 0.0
        %2940 = vmatpush1.msra.mxu0 0.0
        %2941 = vmatprep.mubr.f32.mxu0 0.0
        %2942 = vmatmul.mubr.f32.gmra.mrb[0].mxu0 %v2718
        %v2943 = vpop.f32.mrb[0].mxu0
        %v2944 = vadd.f32 %v2710, %v2943
        %v2945 = vpop.f32.mrb[0].mxu0
        %v2946 = vadd.f32 %v2710, %v2945
        %2947 = vmatprep.mubr.f32.mxu0 0.0
        %2948 = vmatmul.mubr.f32.gmra.mrb[0].mxu0 %v2721
        %v2949 = vpop.f32.mrb[0].mxu0
        %v2950 = vadd.f32 %v2715, %v2949
        %v2951 = vpop.f32.mrb[0].mxu0
        %v2952 = vadd.f32 %v2715, %v2951
        %2953 = vdwg.mxu0
        %2954 = vmatprep.subr.mxu0 %v2652
        %2955 = vmatpush1.msra.mxu0 %v2651
        %2956 = vmatprep.subr.mxu0 %v2604
        %2957 = vmatpush1.msra.mxu0 %v2603
        %2958 = vmatprep.subr.mxu0 %v2700
        %2959 = vmatpush1.msra.mxu0 %v2699
        %2960 = vmatprep.subr.mxu0 0.0
        %2961 = vmatpush1.msra.mxu0 0.0
        %2962 = vmatprep.subr.mxu0 0.0
        %2963 = vmatpush1.msra.mxu0 0.0
        %2964 = vmatprep.subr.mxu0 0.0
        %2965 = vmatpush1.msra.mxu0 0.0
        %2966 = vmatprep.subr.mxu0 0.0
        %2967 = vmatpush1.msra.mxu0 0.0
        %2968 = vmatprep.subr.mxu0 0.0
        %2969 = vmatpush1.msra.mxu0 0.0
        %2970 = vmatprep.subr.mxu0 0.0
        %2971 = vmatpush1.msra.mxu0 0.0
        %2972 = vmatprep.subr.mxu0 0.0
        %2973 = vmatpush1.msra.mxu0 0.0
        %2974 = vmatprep.subr.mxu0 0.0
        %2975 = vmatpush1.msra.mxu0 0.0
        %2976 = vmatprep.subr.mxu0 0.0
        %2977 = vmatpush1.msra.mxu0 0.0
        %2978 = vmatprep.subr.mxu0 0.0
        %2979 = vmatpush1.msra.mxu0 0.0
        %2980 = vmatprep.subr.mxu0 0.0
        %2981 = vmatpush1.msra.mxu0 0.0
        %2982 = vmatprep.subr.mxu0 0.0
        %2983 = vmatpush1.msra.mxu0 0.0
        %2984 = vmatprep.subr.mxu0 0.0
        %2985 = vmatpush1.msra.mxu0 0.0
        %2986 = vmatprep.subr.mxu0 0.0
        %2987 = vmatpush1.msra.mxu0 0.0
        %2988 = vmatprep.subr.mxu0 0.0
        %2989 = vmatpush1.msra.mxu0 0.0
        %2990 = vmatprep.subr.mxu0 0.0
        %2991 = vmatpush1.msra.mxu0 0.0
        %2992 = vmatprep.subr.mxu0 0.0
        %2993 = vmatpush1.msra.mxu0 0.0
        %2994 = vmatprep.subr.mxu0 0.0
        %2995 = vmatpush1.msra.mxu0 0.0
        %2996 = vmatprep.subr.mxu0 0.0
        %2997 = vmatpush1.msra.mxu0 0.0
        %2998 = vmatprep.subr.mxu0 0.0
        %2999 = vmatpush1.msra.mxu0 0.0
        %3000 = vmatprep.subr.mxu0 0.0
        %3001 = vmatpush1.msra.mxu0 0.0
        %3002 = vmatprep.subr.mxu0 0.0
        %3003 = vmatpush1.msra.mxu0 0.0
        %3004 = vmatprep.subr.mxu0 0.0
        %3005 = vmatpush1.msra.mxu0 0.0
        %3006 = vmatprep.subr.mxu0 0.0
        %3007 = vmatpush1.msra.mxu0 0.0
        %3008 = vmatprep.subr.mxu0 0.0
        %3009 = vmatpush1.msra.mxu0 0.0
        %3010 = vmatprep.subr.mxu0 0.0
        %3011 = vmatpush1.msra.mxu0 0.0
        %3012 = vmatprep.subr.mxu0 0.0
        %3013 = vmatpush1.msra.mxu0 0.0
        %3014 = vmatprep.subr.mxu0 0.0
        %3015 = vmatpush1.msra.mxu0 0.0
        %3016 = vmatprep.subr.mxu0 0.0
        %3017 = vmatpush1.msra.mxu0 0.0
        %3018 = vmatprep.mubr.f32.mxu0 0.0
        %3019 = vmatmul.mubr.f32.gmra.mrb[0].mxu0 %v2718
        %v3020 = vpop.f32.mrb[0].mxu0
        %v3021 = vadd.f32 %v2710, %v3020
        %v3022 = vpop.f32.mrb[0].mxu0
        %v3023 = vadd.f32 %v2710, %v3022
        %3024 = vmatprep.mubr.f32.mxu0 0.0
        %3025 = vmatmul.mubr.f32.gmra.mrb[0].mxu0 %v2721
        %v3026 = vpop.f32.mrb[0].mxu0
        %v3027 = vadd.f32 %v2715, %v3026
        %v3028 = vpop.f32.mrb[0].mxu0
        %v3029 = vadd.f32 %v2715, %v3028
        %3030 = vdwg.mxu0
        %v3031 = vmax.f32 %v2790, 0.0
        %v3032 = vmax.f32 %v2792, 0.0
        %v3033 = vmax.f32 %v2867, 0.0
        %v3034 = vmax.f32 %v2869, 0.0
        %v3035 = vmax.f32 %v2944, 0.0
        %v3036 = vmax.f32 %v2946, 0.0
        %v3037 = vmax.f32 %v3021, 0.0
        %v3038 = vmax.f32 %v3023, 0.0
        %v3039 = vmax.f32 %v2796, 0.0
        %v3040 = vmax.f32 %v2798, 0.0
        %v3041 = vmax.f32 %v2873, 0.0
        %v3042 = vmax.f32 %v2875, 0.0
        %v3043 = vmax.f32 %v2950, 0.0
        %v3044 = vmax.f32 %v2952, 0.0
        %v3045 = vmax.f32 %v3027, 0.0
        %v3046 = vmax.f32 %v3029, 0.0
        %3047 = vrot.lane.b32.xlu0 %v3031, 1
        %v3048 = vpop.permute.xlu0 %3047
        %3049 = vrot.lane.b32.xlu0 %v3039, 1
        %v3050 = vpop.permute.xlu0 %3049
        %3051 = vrot.lane.b32.xlu0 %v3032, 1
        %v3052 = vpop.permute.xlu0 %3051
        %3053 = vrot.lane.b32.xlu0 %v3040, 1
        %v3054 = vpop.permute.xlu0 %3053
        %3055 = vrot.lane.b32.xlu0 %v3033, 1
        %v3056 = vpop.permute.xlu0 %3055
        %3057 = vrot.lane.b32.xlu0 %v3041, 1
        %v3058 = vpop.permute.xlu0 %3057
        %3059 = vrot.lane.b32.xlu0 %v3034, 1
        %v3060 = vpop.permute.xlu0 %3059
        %3061 = vrot.lane.b32.xlu0 %v3042, 1
        %v3062 = vpop.permute.xlu0 %3061
        %3063 = vrot.lane.b32.xlu0 %v3035, 1
        %v3064 = vpop.permute.xlu0 %3063
        %3065 = vrot.lane.b32.xlu0 %v3043, 1
        %v3066 = vpop.permute.xlu0 %3065
        %3067 = vrot.lane.b32.xlu0 %v3036, 1
        %v3068 = vpop.permute.xlu0 %3067
        %3069 = vrot.lane.b32.xlu0 %v3044, 1
        %v3070 = vpop.permute.xlu0 %3069
        %3071 = vrot.lane.b32.xlu0 %v3037, 1
        %v3072 = vpop.permute.xlu0 %3071
        %3073 = vrot.lane.b32.xlu0 %v3045, 1
        %v3074 = vpop.permute.xlu0 %3073
        %3075 = vrot.lane.b32.xlu0 %v3038, 1
        %v3076 = vpop.permute.xlu0 %3075
        %3077 = vrot.lane.b32.xlu0 %v3046, 1
        %v3078 = vpop.permute.xlu0 %3077
        %v3079 = vsel %vm337, %v3072, %v3076
        %v3080 = vsel %vm337, %v3074, %v3078
        %v3081 = vsel %vm337, %v3068, %v3072
        %v3082 = vsel %vm337, %v3070, %v3074
        %v3083 = vsel %vm337, %v3064, %v3068
        %v3084 = vsel %vm337, %v3066, %v3070
        %v3085 = vsel %vm337, %v3060, %v3064
        %v3086 = vsel %vm337, %v3062, %v3066
        %v3087 = vsel %vm337, %v3056, %v3060
        %v3088 = vsel %vm337, %v3058, %v3062
        %v3089 = vsel %vm337, %v3052, %v3056
        %v3090 = vsel %vm337, %v3054, %v3058
        %v3091 = vsel %vm337, %v3048, %v3052
        %v3092 = vsel %vm337, %v3050, %v3054
        %v3093 = vsel %vm337, %v3076, %v3048
        %v3094 = vsel %vm337, %v3078, %v3050
        %v3095 = vsel %vm2637, %v3093, 0.0
        %v3096 = vsel %vm2638, %v3091, 0.0
        %v3097 = vsel %vm2639, %v3089, 0.0
        %v3098 = vsel %vm2640, %v3087, 0.0
        %v3099 = vsel %vm2641, %v3085, 0.0
        %v3100 = vsel %vm2642, %v3083, 0.0
        %v3101 = vsel %vm2643, %v3081, 0.0
        %v3102 = vsel %vm2644, %v3079, 0.0
        %v3103 = vsel %vm2637, %v3094, 0.0
        %v3104 = vsel %vm2638, %v3092, 0.0
        %v3105 = vsel %vm2639, %v3090, 0.0
        %v3106 = vsel %vm2640, %v3088, 0.0
        %v3107 = vsel %vm2641, %v3086, 0.0
        %v3108 = vsel %vm2642, %v3084, 0.0
        %v3109 = vsel %vm2643, %v3082, 0.0
        %v3110 = vsel %vm2644, %v3080, 0.0
        %3111 = vrot.lane.b32.xlu0 %v3031, 127
        %v3112 = vpop.permute.xlu0 %3111
        %3113 = vrot.lane.b32.xlu0 %v3039, 127
        %v3114 = vpop.permute.xlu0 %3113
        %3115 = vrot.lane.b32.xlu0 %v3032, 127
        %v3116 = vpop.permute.xlu0 %3115
        %3117 = vrot.lane.b32.xlu0 %v3040, 127
        %v3118 = vpop.permute.xlu0 %3117
        %3119 = vrot.lane.b32.xlu0 %v3033, 127
        %v3120 = vpop.permute.xlu0 %3119
        %3121 = vrot.lane.b32.xlu0 %v3041, 127
        %v3122 = vpop.permute.xlu0 %3121
        %3123 = vrot.lane.b32.xlu0 %v3034, 127
        %v3124 = vpop.permute.xlu0 %3123
        %3125 = vrot.lane.b32.xlu0 %v3042, 127
        %v3126 = vpop.permute.xlu0 %3125
        %3127 = vrot.lane.b32.xlu0 %v3035, 127
        %v3128 = vpop.permute.xlu0 %3127
        %3129 = vrot.lane.b32.xlu0 %v3043, 127
        %v3130 = vpop.permute.xlu0 %3129
        %3131 = vrot.lane.b32.xlu0 %v3036, 127
        %v3132 = vpop.permute.xlu0 %3131
        %3133 = vrot.lane.b32.xlu0 %v3044, 127
        %v3134 = vpop.permute.xlu0 %3133
        %3135 = vrot.lane.b32.xlu0 %v3037, 127
        %v3136 = vpop.permute.xlu0 %3135
        %3137 = vrot.lane.b32.xlu0 %v3045, 127
        %v3138 = vpop.permute.xlu0 %3137
        %3139 = vrot.lane.b32.xlu0 %v3038, 127
        %v3140 = vpop.permute.xlu0 %3139
        %3141 = vrot.lane.b32.xlu0 %v3046, 127
        %v3142 = vpop.permute.xlu0 %3141
        %v3143 = vsel %vm370, %v3136, %v3140
        %v3144 = vsel %vm370, %v3138, %v3142
        %v3145 = vsel %vm370, %v3132, %v3136
        %v3146 = vsel %vm370, %v3134, %v3138
        %v3147 = vsel %vm370, %v3128, %v3132
        %v3148 = vsel %vm370, %v3130, %v3134
        %v3149 = vsel %vm370, %v3124, %v3128
        %v3150 = vsel %vm370, %v3126, %v3130
        %v3151 = vsel %vm370, %v3120, %v3124
        %v3152 = vsel %vm370, %v3122, %v3126
        %v3153 = vsel %vm370, %v3116, %v3120
        %v3154 = vsel %vm370, %v3118, %v3122
        %v3155 = vsel %vm370, %v3112, %v3116
        %v3156 = vsel %vm370, %v3114, %v3118
        %v3157 = vsel %vm370, %v3140, %v3112
        %v3158 = vsel %vm370, %v3142, %v3114
        %v3159 = vsel %vm2685, %v3155, 0.0
        %v3160 = vsel %vm2686, %v3153, 0.0
        %v3161 = vsel %vm2687, %v3151, 0.0
        %v3162 = vsel %vm2688, %v3149, 0.0
        %v3163 = vsel %vm2689, %v3147, 0.0
        %v3164 = vsel %vm2690, %v3145, 0.0
        %v3165 = vsel %vm2691, %v3143, 0.0
        %v3166 = vsel %vm2692, %v3157, 0.0
        %v3167 = vsel %vm2685, %v3156, 0.0
        %v3168 = vsel %vm2686, %v3154, 0.0
        %v3169 = vsel %vm2687, %v3152, 0.0
        %v3170 = vsel %vm2688, %v3150, 0.0
        %v3171 = vsel %vm2689, %v3148, 0.0
        %v3172 = vsel %vm2690, %v3146, 0.0
        %v3173 = vsel %vm2691, %v3144, 0.0
        %v3174 = vsel %vm2692, %v3158, 0.0
        %s3175 = scalar_lea.vmem %s1, 96
        %v3176 = vld [vmem:[%s3175] sm:$0x1]
        %s3177 = scalar_lea.vmem %s2, 96
        %v3178 = vld [vmem:[%s3177] sm:$0x1]
        %3180 = vset.pattern.permute.xlu0 0
        %3181 = vperm.xlu0 %3180, %v3178
        %v3182 = vpop.permute.xlu0 %3181
        %v3185 = vsel %vm1034, %v3176, 0
        %3187 = vmatprep.subr.mxu0 %v3096
        %3188 = vmatpush1.msra.mxu0 %v3095
        %3189 = vmatprep.subr.mxu0 %v3104
        %3190 = vmatpush1.msra.mxu0 %v3103
        %3191 = vmatprep.subr.mxu0 %v3032
        %3192 = vmatpush1.msra.mxu0 %v3031
        %3193 = vmatprep.subr.mxu0 %v3040
        %3194 = vmatpush1.msra.mxu0 %v3039
        %3195 = vmatprep.subr.mxu0 %v3160
        %3196 = vmatpush1.msra.mxu0 %v3159
        %3197 = vmatprep.subr.mxu0 %v3168
        %3198 = vmatpush1.msra.mxu0 %v3167
        %3199 = vmatprep.subr.mxu0 0.0
        %3200 = vmatpush1.msra.mxu0 0.0
        %3201 = vmatprep.subr.mxu0 0.0
        %3202 = vmatpush1.msra.mxu0 0.0
        %3203 = vmatprep.subr.mxu0 0.0
        %3204 = vmatpush1.msra.mxu0 0.0
        %3205 = vmatprep.subr.mxu0 0.0
        %3206 = vmatpush1.msra.mxu0 0.0
        %3207 = vmatprep.subr.mxu0 0.0
        %3208 = vmatpush1.msra.mxu0 0.0
        %3209 = vmatprep.subr.mxu0 0.0
        %3210 = vmatpush1.msra.mxu0 0.0
        %3211 = vmatprep.subr.mxu0 0.0
        %3212 = vmatpush1.msra.mxu0 0.0
        %3213 = vmatprep.subr.mxu0 0.0
        %3214 = vmatpush1.msra.mxu0 0.0
        %3215 = vmatprep.subr.mxu0 0.0
        %3216 = vmatpush1.msra.mxu0 0.0
        %3217 = vmatprep.subr.mxu0 0.0
        %3218 = vmatpush1.msra.mxu0 0.0
        %3219 = vmatprep.subr.mxu0 0.0
        %3220 = vmatpush1.msra.mxu0 0.0
        %3221 = vmatprep.subr.mxu0 0.0
        %3222 = vmatpush1.msra.mxu0 0.0
        %3223 = vmatprep.subr.mxu0 0.0
        %3224 = vmatpush1.msra.mxu0 0.0
        %3225 = vmatprep.subr.mxu0 0.0
        %3226 = vmatpush1.msra.mxu0 0.0
        %3227 = vmatprep.subr.mxu0 0.0
        %3228 = vmatpush1.msra.mxu0 0.0
        %3229 = vmatprep.subr.mxu0 0.0
        %3230 = vmatpush1.msra.mxu0 0.0
        %3231 = vmatprep.subr.mxu0 0.0
        %3232 = vmatpush1.msra.mxu0 0.0
        %3233 = vmatprep.subr.mxu0 0.0
        %3234 = vmatpush1.msra.mxu0 0.0
        %3235 = vmatprep.subr.mxu0 0.0
        %3236 = vmatpush1.msra.mxu0 0.0
        %3237 = vmatprep.subr.mxu0 0.0
        %3238 = vmatpush1.msra.mxu0 0.0
        %3239 = vmatprep.subr.mxu0 0.0
        %3240 = vmatpush1.msra.mxu0 0.0
        %3241 = vmatprep.subr.mxu0 0.0
        %3242 = vmatpush1.msra.mxu0 0.0
        %3243 = vmatprep.subr.mxu0 0.0
        %3244 = vmatpush1.msra.mxu0 0.0
        %3245 = vmatprep.subr.mxu0 0.0
        %3246 = vmatpush1.msra.mxu0 0.0
        %3247 = vmatprep.subr.mxu0 0.0
        %3248 = vmatpush1.msra.mxu0 0.0
        %3249 = vmatprep.subr.mxu0 0.0
        %3250 = vmatpush1.msra.mxu0 0.0
        %3251 = vmatprep.mubr.f32.mxu0 0.0
        %3252 = vmatmul.mubr.f32.gmra.mrb[0].mxu0 %v3185
        %v3253 = vpop.f32.mrb[0].mxu0
        %v3254 = vadd.f32 %v3182, %v3253
        %v3255 = vpop.f32.mrb[0].mxu0
        %v3256 = vadd.f32 %v3182, %v3255
        %3257 = vdwg.mxu0
        %3258 = vmatprep.subr.mxu0 %v3098
        %3259 = vmatpush1.msra.mxu0 %v3097
        %3260 = vmatprep.subr.mxu0 %v3106
        %3261 = vmatpush1.msra.mxu0 %v3105
        %3262 = vmatprep.subr.mxu0 %v3034
        %3263 = vmatpush1.msra.mxu0 %v3033
        %3264 = vmatprep.subr.mxu0 %v3042
        %3265 = vmatpush1.msra.mxu0 %v3041
        %3266 = vmatprep.subr.mxu0 %v3162
        %3267 = vmatpush1.msra.mxu0 %v3161
        %3268 = vmatprep.subr.mxu0 %v3170
        %3269 = vmatpush1.msra.mxu0 %v3169
        %3270 = vmatprep.subr.mxu0 0.0
        %3271 = vmatpush1.msra.mxu0 0.0
        %3272 = vmatprep.subr.mxu0 0.0
        %3273 = vmatpush1.msra.mxu0 0.0
        %3274 = vmatprep.subr.mxu0 0.0
        %3275 = vmatpush1.msra.mxu0 0.0
        %3276 = vmatprep.subr.mxu0 0.0
        %3277 = vmatpush1.msra.mxu0 0.0
        %3278 = vmatprep.subr.mxu0 0.0
        %3279 = vmatpush1.msra.mxu0 0.0
        %3280 = vmatprep.subr.mxu0 0.0
        %3281 = vmatpush1.msra.mxu0 0.0
        %3282 = vmatprep.subr.mxu0 0.0
        %3283 = vmatpush1.msra.mxu0 0.0
        %3284 = vmatprep.subr.mxu0 0.0
        %3285 = vmatpush1.msra.mxu0 0.0
        %3286 = vmatprep.subr.mxu0 0.0
        %3287 = vmatpush1.msra.mxu0 0.0
        %3288 = vmatprep.subr.mxu0 0.0
        %3289 = vmatpush1.msra.mxu0 0.0
        %3290 = vmatprep.subr.mxu0 0.0
        %3291 = vmatpush1.msra.mxu0 0.0
        %3292 = vmatprep.subr.mxu0 0.0
        %3293 = vmatpush1.msra.mxu0 0.0
        %3294 = vmatprep.subr.mxu0 0.0
        %3295 = vmatpush1.msra.mxu0 0.0
        %3296 = vmatprep.subr.mxu0 0.0
        %3297 = vmatpush1.msra.mxu0 0.0
        %3298 = vmatprep.subr.mxu0 0.0
        %3299 = vmatpush1.msra.mxu0 0.0
        %3300 = vmatprep.subr.mxu0 0.0
        %3301 = vmatpush1.msra.mxu0 0.0
        %3302 = vmatprep.subr.mxu0 0.0
        %3303 = vmatpush1.msra.mxu0 0.0
        %3304 = vmatprep.subr.mxu0 0.0
        %3305 = vmatpush1.msra.mxu0 0.0
        %3306 = vmatprep.subr.mxu0 0.0
        %3307 = vmatpush1.msra.mxu0 0.0
        %3308 = vmatprep.subr.mxu0 0.0
        %3309 = vmatpush1.msra.mxu0 0.0
        %3310 = vmatprep.subr.mxu0 0.0
        %3311 = vmatpush1.msra.mxu0 0.0
        %3312 = vmatprep.subr.mxu0 0.0
        %3313 = vmatpush1.msra.mxu0 0.0
        %3314 = vmatprep.subr.mxu0 0.0
        %3315 = vmatpush1.msra.mxu0 0.0
        %3316 = vmatprep.subr.mxu0 0.0
        %3317 = vmatpush1.msra.mxu0 0.0
        %3318 = vmatprep.subr.mxu0 0.0
        %3319 = vmatpush1.msra.mxu0 0.0
        %3320 = vmatprep.subr.mxu0 0.0
        %3321 = vmatpush1.msra.mxu0 0.0
        %3322 = vmatprep.mubr.f32.mxu0 0.0
        %3323 = vmatmul.mubr.f32.gmra.mrb[0].mxu0 %v3185
        %v3324 = vpop.f32.mrb[0].mxu0
        %v3325 = vadd.f32 %v3182, %v3324
        %v3326 = vpop.f32.mrb[0].mxu0
        %v3327 = vadd.f32 %v3182, %v3326
        %3328 = vdwg.mxu0
        %3329 = vmatprep.subr.mxu0 %v3100
        %3330 = vmatpush1.msra.mxu0 %v3099
        %3331 = vmatprep.subr.mxu0 %v3108
        %3332 = vmatpush1.msra.mxu0 %v3107
        %3333 = vmatprep.subr.mxu0 %v3036
        %3334 = vmatpush1.msra.mxu0 %v3035
        %3335 = vmatprep.subr.mxu0 %v3044
        %3336 = vmatpush1.msra.mxu0 %v3043
        %3337 = vmatprep.subr.mxu0 %v3164
        %3338 = vmatpush1.msra.mxu0 %v3163
        %3339 = vmatprep.subr.mxu0 %v3172
        %3340 = vmatpush1.msra.mxu0 %v3171
        %3341 = vmatprep.subr.mxu0 0.0
        %3342 = vmatpush1.msra.mxu0 0.0
        %3343 = vmatprep.subr.mxu0 0.0
        %3344 = vmatpush1.msra.mxu0 0.0
        %3345 = vmatprep.subr.mxu0 0.0
        %3346 = vmatpush1.msra.mxu0 0.0
        %3347 = vmatprep.subr.mxu0 0.0
        %3348 = vmatpush1.msra.mxu0 0.0
        %3349 = vmatprep.subr.mxu0 0.0
        %3350 = vmatpush1.msra.mxu0 0.0
        %3351 = vmatprep.subr.mxu0 0.0
        %3352 = vmatpush1.msra.mxu0 0.0
        %3353 = vmatprep.subr.mxu0 0.0
        %3354 = vmatpush1.msra.mxu0 0.0
        %3355 = vmatprep.subr.mxu0 0.0
        %3356 = vmatpush1.msra.mxu0 0.0
        %3357 = vmatprep.subr.mxu0 0.0
        %3358 = vmatpush1.msra.mxu0 0.0
        %3359 = vmatprep.subr.mxu0 0.0
        %3360 = vmatpush1.msra.mxu0 0.0
        %3361 = vmatprep.subr.mxu0 0.0
        %3362 = vmatpush1.msra.mxu0 0.0
        %3363 = vmatprep.subr.mxu0 0.0
        %3364 = vmatpush1.msra.mxu0 0.0
        %3365 = vmatprep.subr.mxu0 0.0
        %3366 = vmatpush1.msra.mxu0 0.0
        %3367 = vmatprep.subr.mxu0 0.0
        %3368 = vmatpush1.msra.mxu0 0.0
        %3369 = vmatprep.subr.mxu0 0.0
        %3370 = vmatpush1.msra.mxu0 0.0
        %3371 = vmatprep.subr.mxu0 0.0
        %3372 = vmatpush1.msra.mxu0 0.0
        %3373 = vmatprep.subr.mxu0 0.0
        %3374 = vmatpush1.msra.mxu0 0.0
        %3375 = vmatprep.subr.mxu0 0.0
        %3376 = vmatpush1.msra.mxu0 0.0
        %3377 = vmatprep.subr.mxu0 0.0
        %3378 = vmatpush1.msra.mxu0 0.0
        %3379 = vmatprep.subr.mxu0 0.0
        %3380 = vmatpush1.msra.mxu0 0.0
        %3381 = vmatprep.subr.mxu0 0.0
        %3382 = vmatpush1.msra.mxu0 0.0
        %3383 = vmatprep.subr.mxu0 0.0
        %3384 = vmatpush1.msra.mxu0 0.0
        %3385 = vmatprep.subr.mxu0 0.0
        %3386 = vmatpush1.msra.mxu0 0.0
        %3387 = vmatprep.subr.mxu0 0.0
        %3388 = vmatpush1.msra.mxu0 0.0
        %3389 = vmatprep.subr.mxu0 0.0
        %3390 = vmatpush1.msra.mxu0 0.0
        %3391 = vmatprep.subr.mxu0 0.0
        %3392 = vmatpush1.msra.mxu0 0.0
        %3393 = vmatprep.mubr.f32.mxu0 0.0
        %3394 = vmatmul.mubr.f32.gmra.mrb[0].mxu0 %v3185
        %v3395 = vpop.f32.mrb[0].mxu0
        %v3396 = vadd.f32 %v3182, %v3395
        %v3397 = vpop.f32.mrb[0].mxu0
        %v3398 = vadd.f32 %v3182, %v3397
        %3399 = vdwg.mxu0
        %3400 = vmatprep.subr.mxu0 %v3102
        %3401 = vmatpush1.msra.mxu0 %v3101
        %3402 = vmatprep.subr.mxu0 %v3110
        %3403 = vmatpush1.msra.mxu0 %v3109
        %3404 = vmatprep.subr.mxu0 %v3038
        %3405 = vmatpush1.msra.mxu0 %v3037
        %3406 = vmatprep.subr.mxu0 %v3046
        %3407 = vmatpush1.msra.mxu0 %v3045
        %3408 = vmatprep.subr.mxu0 %v3166
        %3409 = vmatpush1.msra.mxu0 %v3165
        %3410 = vmatprep.subr.mxu0 %v3174
        %3411 = vmatpush1.msra.mxu0 %v3173
        %3412 = vmatprep.subr.mxu0 0.0
        %3413 = vmatpush1.msra.mxu0 0.0
        %3414 = vmatprep.subr.mxu0 0.0
        %3415 = vmatpush1.msra.mxu0 0.0
        %3416 = vmatprep.subr.mxu0 0.0
        %3417 = vmatpush1.msra.mxu0 0.0
        %3418 = vmatprep.subr.mxu0 0.0
        %3419 = vmatpush1.msra.mxu0 0.0
        %3420 = vmatprep.subr.mxu0 0.0
        %3421 = vmatpush1.msra.mxu0 0.0
        %3422 = vmatprep.subr.mxu0 0.0
        %3423 = vmatpush1.msra.mxu0 0.0
        %3424 = vmatprep.subr.mxu0 0.0
        %3425 = vmatpush1.msra.mxu0 0.0
        %3426 = vmatprep.subr.mxu0 0.0
        %3427 = vmatpush1.msra.mxu0 0.0
        %3428 = vmatprep.subr.mxu0 0.0
        %3429 = vmatpush1.msra.mxu0 0.0
        %3430 = vmatprep.subr.mxu0 0.0
        %3431 = vmatpush1.msra.mxu0 0.0
        %3432 = vmatprep.subr.mxu0 0.0
        %3433 = vmatpush1.msra.mxu0 0.0
        %3434 = vmatprep.subr.mxu0 0.0
        %3435 = vmatpush1.msra.mxu0 0.0
        %3436 = vmatprep.subr.mxu0 0.0
        %3437 = vmatpush1.msra.mxu0 0.0
        %3438 = vmatprep.subr.mxu0 0.0
        %3439 = vmatpush1.msra.mxu0 0.0
        %3440 = vmatprep.subr.mxu0 0.0
        %3441 = vmatpush1.msra.mxu0 0.0
        %3442 = vmatprep.subr.mxu0 0.0
        %3443 = vmatpush1.msra.mxu0 0.0
        %3444 = vmatprep.subr.mxu0 0.0
        %3445 = vmatpush1.msra.mxu0 0.0
        %3446 = vmatprep.subr.mxu0 0.0
        %3447 = vmatpush1.msra.mxu0 0.0
        %3448 = vmatprep.subr.mxu0 0.0
        %3449 = vmatpush1.msra.mxu0 0.0
        %3450 = vmatprep.subr.mxu0 0.0
        %3451 = vmatpush1.msra.mxu0 0.0
        %3452 = vmatprep.subr.mxu0 0.0
        %3453 = vmatpush1.msra.mxu0 0.0
        %3454 = vmatprep.subr.mxu0 0.0
        %3455 = vmatpush1.msra.mxu0 0.0
        %3456 = vmatprep.subr.mxu0 0.0
        %3457 = vmatpush1.msra.mxu0 0.0
        %3458 = vmatprep.subr.mxu0 0.0
        %3459 = vmatpush1.msra.mxu0 0.0
        %3460 = vmatprep.subr.mxu0 0.0
        %3461 = vmatpush1.msra.mxu0 0.0
        %3462 = vmatprep.subr.mxu0 0.0
        %3463 = vmatpush1.msra.mxu0 0.0
        %3464 = vmatprep.mubr.f32.mxu0 0.0
        %3465 = vmatmul.mubr.f32.gmra.mrb[0].mxu0 %v3185
        %v3466 = vpop.f32.mrb[0].mxu0
        %v3467 = vadd.f32 %v3182, %v3466
        %v3468 = vpop.f32.mrb[0].mxu0
        %v3469 = vadd.f32 %v3182, %v3468
        %3470 = vdwg.mxu0
        %v3471 = vmul.f32 %v3254, 0.5
        %v3472 = vmul.f32 %v3256, 0.5
        %v3473 = vmul.f32 %v3325, 0.5
        %v3474 = vmul.f32 %v3327, 0.5
        %v3475 = vmul.f32 %v3396, 0.5
        %v3476 = vmul.f32 %v3398, 0.5
        %v3477 = vmul.f32 %v3467, 0.5
        %v3478 = vmul.f32 %v3469, 0.5
        %v3479 = vtanh.pop %v3471
        %v3480 = vtanh.pop %v3472
        %v3481 = vtanh.pop %v3473
        %v3482 = vtanh.pop %v3474
        %v3483 = vtanh.pop %v3475
        %v3484 = vtanh.pop %v3476
        %v3485 = vtanh.pop %v3477
        %v3486 = vtanh.pop %v3478
        %v3487 = vmul.f32 %v3479, 0.5
        %v3488 = vmul.f32 %v3480, 0.5
        %v3489 = vmul.f32 %v3481, 0.5
        %v3490 = vmul.f32 %v3482, 0.5
        %v3491 = vmul.f32 %v3483, 0.5
        %v3492 = vmul.f32 %v3484, 0.5
        %v3493 = vmul.f32 %v3485, 0.5
        %v3494 = vmul.f32 %v3486, 0.5
        %v3495 = vadd.f32 %v3487, 0.5
        %v3496 = vadd.f32 %v3488, 0.5
        %v3497 = vadd.f32 %v3489, 0.5
        %v3498 = vadd.f32 %v3490, 0.5
        %v3499 = vadd.f32 %v3491, 0.5
        %v3500 = vadd.f32 %v3492, 0.5
        %v3501 = vadd.f32 %v3493, 0.5
        %v3502 = vadd.f32 %v3494, 0.5
        %v3511 = vcombine.low %v3495, %v3496
        %v3512 = vcombine.low %v3497, %v3498
        %v3513 = vcombine.low %v3499, %v3500
        %v3514 = vcombine.low %v3501, %v3502
        %v3516 = vunpack.c.l.s4 1966171168
        %v3517 = vunpack.c.0.s8 %v3516
        %v3518 = vlaneseq
        %v3519 = vshrl.u32 %v3518, 7
        %v3520 = vsub.s32 %v3517, %v3519
        %v3521 = vrot.slane %v3511, %v3520
        %v3523 = vunpack.c.l.s4 1966171168
        %v3524 = vunpack.c.0.s8 %v3523
        %v3525 = vlaneseq
        %v3526 = vshrl.u32 %v3525, 7
        %v3527 = vsub.s32 %v3524, %v3526
        %v3528 = vrot.slane %v3512, %v3527
        %v3530 = vunpack.c.l.s4 1966171168
        %v3531 = vunpack.c.0.s8 %v3530
        %v3532 = vlaneseq
        %v3533 = vshrl.u32 %v3532, 7
        %v3534 = vsub.s32 %v3531, %v3533
        %v3535 = vrot.slane %v3513, %v3534
        %v3537 = vunpack.c.l.s4 1966171168
        %v3538 = vunpack.c.0.s8 %v3537
        %v3539 = vlaneseq
        %v3540 = vshrl.u32 %v3539, 7
        %v3541 = vsub.s32 %v3538, %v3540
        %v3542 = vrot.slane %v3514, %v3541
        %v3543 = vcombine.low %v3521, %v3528
        %v3544 = vcombine.low %v3535, %v3542
        %v3546 = vunpack.c.l.s4 1966171168
        %v3547 = vunpack.c.0.s8 %v3546
        %v3548 = vlaneseq
        %v3549 = vshrl.u32 %v3548, 7
        %v3550 = vsub.s32 %v3547, %v3549
        %v3551 = vrot.slane %v3543, %v3550
        %v3553 = vunpack.c.l.s4 1966171168
        %v3554 = vunpack.c.0.s8 %v3553
        %v3555 = vlaneseq
        %v3556 = vshrl.u32 %v3555, 7
        %v3557 = vsub.s32 %v3554, %v3556
        %v3558 = vrot.slane %v3544, %v3557
        %v3559 = vcombine.low %v3551, %v3558
        %3561 = vst [vmem:[%s161] sm:$0xff] %v3559
        %s3562 = sand.u32 %s93, 1
        %s3563 = scalar_lea.sflag [#allocation3], %s3562
        %s3564 = sand.u32 %s93, 1
        %s3565 = smul.addr %s3564, 8
        %s3566 = scalar_lea.vmem [#allocation2], %s3565
        // Predicated region
        $region33: #{conv_autoencoder_forward.1} parent=31 // pred_check
          %p3567 = pneg %p103
        $region34: #{conv_autoencoder_forward.1} parent=31 // pred_check_branch
          %3569 = sbr.rel (%p3567) target = $region36
        $region35: #{conv_autoencoder_forward.1} parent=31 // pred_region
          %s3571 = ssub.s32 128, 128
          %3572 = vsyncadd %s3563, %s3571
          %s3573 = smul.addr %s17, 8
          %s3574 = smul.addr %s3573, 16
          %s3575 = scalar_lea.hbm %s3, %s3574
          %s3577 = sshll.u32 %s3566, 4
          %s3578 = int_to_ptr.vmem [resolvable:$true] %s3577
          %3580 = dma.vmem_to_hbm [thread:$0]  %s3578, 128, %s3575, %s3563
        $region36: #{conv_autoencoder_forward.1} parent=31 // pred_fallthru
          _
      $region32: #{conv_autoencoder_forward.1} parent=5 // pred_fallthru
        _
      %p3581 = scmp.le.s32.totalorder 2, %s12
      // Predicated region
      $region37: #{conv_autoencoder_forward.1} parent=5 // pred_check
        %p3582 = pneg %p3581
      $region38: #{conv_autoencoder_forward.1} parent=5 // pred_check_branch
        %3584 = sbr.rel (%p3582) target = $region40
      $region39: #{conv_autoencoder_forward.1} parent=5 // pred_region
        %s3585 = ssub.s32 %s12, 2
        // Predicated region
        $region41: #{conv_autoencoder_forward.1} parent=39 // pred_check
          %p3586 = pneg %p109
        $region42: #{conv_autoencoder_forward.1} parent=39 // pred_check_branch
          %3588 = sbr.rel (%p3586) target = $region44
        $region43: #{conv_autoencoder_forward.1} parent=39 // pred_region
          %s3589 = sand.u32 %s94, 1
          %s3590 = scalar_lea.sflag [#allocation3], %s3589
          %s3591 = sand.u32 %s94, 1
          %s3592 = smul.addr %s3591, 8
          %s3593 = scalar_lea.vmem [#allocation2], %s3592
          %3594 = dma.done %s3590, 128
        $region44: #{conv_autoencoder_forward.1} parent=39 // pred_fallthru
          _
      $region40: #{conv_autoencoder_forward.1} parent=5 // pred_fallthru
        _
    $region6: #{conv_autoencoder_forward.1} parent=1 // loop_footer
      %s16 = sadd.s32 1, %s12
    $region7: #{conv_autoencoder_forward.1} parent=1 // loop_footer_branch
      %11 = sbr.rel target = $region3
    $region8: #{conv_autoencoder_forward.1} parent=1 // loop_exit
      _
    %3595 = vsyncpa [#allocation3], 1
    %s3596 = scalar_lea.sflag [#allocation3], 1
    %3597 = vsyncpa %s3596, 1

</llo_original>
